<compile_context>
chip_gen: v5e
topology: v5e:2x2
jax: 0.10.0
libtpu: 0.0.40
codegen_flags: <defaults>
</compile_context>

<pallas_src>
import numpy as np
import jax
import jax.numpy as jnp
from jax.experimental import pallas as pl
from jax.experimental.pallas import tpu as pltpu

F_MAP_DEPTH = 4                      # Para.f_map_depth
NB_BLOCKS = 8                        # nb_blocks
HID_SZ = 15                          # hidden conv3d channels (from __init__)
HID_PAD = 16                         # hidden channels padded to a sublane tile
INPUT_DIMS = NB_BLOCKS * NB_BLOCKS   # nn.Linear(input_dims, 1)

_P3 = F_MAP_DEPTH * NB_BLOCKS * NB_BLOCKS     # 256 flattened (d,h,w) -> lane axis
_P2 = NB_BLOCKS * NB_BLOCKS                   # 64  flattened (h,w)   -> lane axis
K_STACK = 27 * HID_PAD                        # 432: K of the stacked per-layer dot
LANES = 512                                   # param-slab lane width
_TAPS3 = [(od, oh, ow) for od in (-1, 0, 1) for oh in (-1, 0, 1) for ow in (-1, 0, 1)]
_TAPS2 = [(oh, ow) for oh in (-1, 0, 1) for ow in (-1, 0, 1)]

# -------- packed parameter-slab row map (all rows f32, LANES lanes wide) ---- #
R_W1 = 0      # 16 rows: stacked conv1 weights (cols 16*t), bias in col 15
R_W2 = 16     # 16 rows: stacked conv2 weights (cols 16*t+ci), bias in col 15
R_W3 = 32     # 1 row  : stacked conv3 weights (cols 16*t+ci), no bias
R_VD = 40     # 1 row  : depth-1x1 weights broadcast per lane: w2d[p // 64]
R_WVAL = 41   # 1 row  : value-head weights (64 lanes)
R_BF = 42     # 1 row  : fused bias b2d + b3*sum(w2d) broadcast over 64 lanes
R_BVAL = 43   # 1 row  : value-head bias broadcast over 128 lanes
R_BH = 44     # 2 rows : mu / sigma head biases broadcast over 64 lanes
R_M3 = 48     # 27 rows: 3-D boundary masks (0/1), 256 lanes
R_WHM = 80    # 18 rows: mask-folded head weights, (mu, sigma) per 2-D tap
R_TOTAL = 104


# ------------------------------ fused kernel ------------------------------- #
def _actor_critic_kernel(x_ref, p_ref, o_ref, s_ref):
    f32 = jnp.float32
    N = NB_BLOCKS

    m3 = p_ref[R_M3:R_M3 + 27, 0:_P3]                      # (27, 256) 0/1 masks

    def conv_stage(x, w_row, cout, add_bias_row):
        """x: (16, 256) activations (row 15 == 0).  Fills the (432, 256) scratch
        with 27 masked+shifted 16-row bands (one aligned store per tap), then
        does ONE K-stacked MXU dot against the pre-stacked slab weights."""
        xp = jnp.concatenate(
            [jnp.zeros((HID_PAD, 128), f32), x, jnp.zeros((HID_PAD, 128), f32)],
            axis=1)                                        # (16, 512)
        for t, (od, oh, ow) in enumerate(_TAPS3):
            off = od * N * N + oh * N + ow
            s_ref[t * HID_PAD:(t + 1) * HID_PAD, :] = (
                xp[:, 128 + off:128 + off + _P3] * m3[t:t + 1, :])
        if add_bias_row:
            # ones row at K index 15 -> bias lives in weight column 15
            s_ref[HID_SZ:HID_SZ + 1, :] = jnp.ones((1, _P3), f32)
        w = p_ref[w_row:w_row + cout, 0:K_STACK]           # (cout, 432)
        return jnp.dot(w, s_ref[...], preferred_element_type=f32)

    x0 = x_ref[...]                                        # (16, 256), rows 1..15 = 0
    x1 = conv_stage(x0, R_W1, HID_PAD, True)               # (16, 256)
    x2 = conv_stage(x1, R_W2, HID_PAD, True)               # (16, 256)
    r3 = conv_stage(x2, R_W3, 1, False)                    # (1, 256)  conv3, no bias

    # --- conv3 + Conv2d(4,1,(1,1)) fold: per-lane depth weight + block reduce --
    r = r3 * p_ref[R_VD:R_VD + 1, 0:_P3]                   # (1, 256)
    x2d = (r[:, 0:64] + r[:, 64:128] + r[:, 128:192] + r[:, 192:256]
           + p_ref[R_BF:R_BF + 1, 0:_P2])                  # (1, 64)

    # --- fused mu / sigma heads (boundary masks folded into the weights) ------
    xhp = jnp.concatenate(
        [jnp.zeros((1, _P2), f32), x2d, jnp.zeros((1, _P2), f32)], axis=1)  # (1,192)
    acc = jnp.zeros((2, _P2), f32)
    for t, (oh, ow) in enumerate(_TAPS2):
        off = oh * N + ow
        acc = acc + (p_ref[R_WHM + 2 * t:R_WHM + 2 * t + 2, 0:_P2]
                     * xhp[:, _P2 + off:_P2 + off + _P2])
    heads = jax.nn.sigmoid(acc + p_ref[R_BH:R_BH + 2, 0:_P2])  # row0=mu, row1=sigma

    # --- value head: Linear(64,1) as VPU multiply + lane reduction ------------
    val = jnp.sum(x2d * p_ref[R_WVAL:R_WVAL + 1, 0:_P2], axis=1, keepdims=True)
    row1 = val + p_ref[R_BVAL:R_BVAL + 1, 0:128]           # (1, 128)

    # --- pack into one lane-dense (8, 128) output slab -------------------------
    row0 = jnp.concatenate([heads[0:1, :], heads[1:2, :]], axis=1)   # [mu | sigma]
    o_ref[...] = jnp.concatenate([row0, row1, jnp.zeros((6, 128), f32)], axis=0)


# ------------------------------ call wrapper -------------------------------- #
def _cost_estimate():
    flops = 2 * K_STACK * _P3 * (HID_PAD + HID_PAD + 1)        # 3 stacked MXU dots
    flops += 3 * 27 * HID_PAD * _P3                            # per-tap mask multiplies
    flops += 2 * (9 * 2 * _P2 + _P2 + _P3)                     # heads + value + fold
    bytes_accessed = 4 * (R_TOTAL * LANES + HID_PAD * _P3 + 8 * 128)
    return pl.CostEstimate(flops=flops, transcendentals=2 * _P2,
                           bytes_accessed=bytes_accessed)


def actor_critic_forward(pslab, f_map):
    """Fused forward: a single gridless pallas_call, everything VMEM-resident."""
    N = NB_BLOCKS
    x0 = jnp.pad(f_map.reshape(1, _P3).astype(jnp.float32),
                 ((0, HID_PAD - 1), (0, 0)))                # (16, 256), row 0 = data
    vmem = lambda: pl.BlockSpec(memory_space=pltpu.MemorySpace.VMEM)
    slab = pl.pallas_call(
        _actor_critic_kernel,
        out_shape=jax.ShapeDtypeStruct((8, 128), jnp.float32),
        in_specs=[vmem(), vmem()],
        out_specs=vmem(),
        scratch_shapes=[pltpu.VMEM((K_STACK, _P3), jnp.float32)],
        cost_estimate=_cost_estimate(),
    )(x0, pslab)
    mu = slab[0:1, :N * N].reshape(1, 1, N, N)
    sigma = slab[0:1, N * N:2 * N * N].reshape(1, 1, N, N)
    val = slab[1:2, 0:1]
    return (mu, sigma), val


# --------------------------- deterministic init ----------------------------- #
def init_params(key):
    """PyTorch-layout parameters (shapes match the nn.Module)."""
    D = F_MAP_DEPTH
    ks = jax.random.split(key, 14)
    s = 0.1
    return {
        "blocks": [
            (s * jax.random.normal(ks[0], (HID_SZ, 1, 3, 3, 3), jnp.float32),
             s * jax.random.normal(ks[1], (HID_SZ,), jnp.float32)),
            (s * jax.random.normal(ks[2], (HID_SZ, HID_SZ, 3, 3, 3), jnp.float32),
             s * jax.random.normal(ks[3], (HID_SZ,), jnp.float32)),
            (s * jax.random.normal(ks[4], (1, HID_SZ, 3, 3, 3), jnp.float32),
             s * jax.random.normal(ks[5], (1,), jnp.float32)),
        ],
        "w_3to2d": s * jax.random.normal(ks[6], (1, D, 1, 1), jnp.float32),
        "b_3to2d": s * jax.random.normal(ks[7], (1,), jnp.float32),
        "w_sig": s * jax.random.normal(ks[8], (1, 1, 3, 3), jnp.float32),
        "b_sig": s * jax.random.normal(ks[9], (1,), jnp.float32),
        "w_mu": s * jax.random.normal(ks[10], (1, 1, 3, 3), jnp.float32),
        "b_mu": s * jax.random.normal(ks[11], (1,), jnp.float32),
        "w_val": s * jax.random.normal(ks[12], (1, INPUT_DIMS), jnp.float32),
        "b_val": s * jax.random.normal(ks[13], (1,), jnp.float32),
    }


def prepare_params(params):
    """One-time host-side re-layout: pack every weight, bias and boundary mask
    into ONE lane-dense (R_TOTAL, 512) f32 slab (out of the jitted hot path)."""
    D, N = F_MAP_DEPTH, NB_BLOCKS
    (w1, b1), (w2, b2), (w3, b3) = params["blocks"]
    w1 = np.asarray(w1, np.float32).reshape(HID_SZ, 27)          # (cout, tap)
    w2 = np.asarray(w2, np.float32).reshape(HID_SZ, HID_SZ, 27)  # (cout, cin, tap)
    w3 = np.asarray(w3, np.float32).reshape(HID_SZ, 27)          # (cin, tap), cout=1
    b1 = np.asarray(b1, np.float32)
    b2 = np.asarray(b2, np.float32)
    b3 = float(np.asarray(b3, np.float32)[0])
    w2d = np.asarray(params["w_3to2d"], np.float32).reshape(D)
    b2d = float(np.asarray(params["b_3to2d"], np.float32)[0])
    wmu = np.asarray(params["w_mu"], np.float32).reshape(9)
    wsig = np.asarray(params["w_sig"], np.float32).reshape(9)
    bmu = float(np.asarray(params["b_mu"], np.float32)[0])
    bsig = float(np.asarray(params["b_sig"], np.float32)[0])
    wval = np.asarray(params["w_val"], np.float32).reshape(INPUT_DIMS)
    bval = float(np.asarray(params["b_val"], np.float32)[0])

    P = np.zeros((R_TOTAL, LANES), np.float32)

    # Stacked conv weights: K column 16*t + ci; bias column = 15 (ones row in band 0).
    for t in range(27):
        P[R_W1:R_W1 + HID_SZ, HID_PAD * t] = w1[:, t]
        P[R_W2:R_W2 + HID_SZ, HID_PAD * t:HID_PAD * t + HID_SZ] = w2[:, :, t]
        P[R_W3, HID_PAD * t:HID_PAD * t + HID_SZ] = w3[:, t]
    P[R_W1:R_W1 + HID_SZ, HID_SZ] = b1
    P[R_W2:R_W2 + HID_SZ, HID_SZ] = b2

    # conv3 + 1x1 depth-conv fold.
    P[R_VD, 0:_P3] = np.repeat(w2d, _P2)
    P[R_BF, 0:_P2] = b2d + b3 * float(w2d.sum())

    # Value head.
    P[R_WVAL, 0:_P2] = wval
    P[R_BVAL, 0:128] = bval

    # Head biases (pre-broadcast).
    P[R_BH, 0:_P2] = bmu
    P[R_BH + 1, 0:_P2] = bsig

    # 3-D boundary masks (pure geometry constants).
    p = np.arange(_P3)
    d3, h3, w3l = p // (N * N), (p // N) % N, p % N
    for t, (od, oh, ow) in enumerate(_TAPS3):
        P[R_M3 + t, 0:_P3] = ((d3 + od >= 0) & (d3 + od < D) &
                              (h3 + oh >= 0) & (h3 + oh < N) &
                              (w3l + ow >= 0) & (w3l + ow < N)).astype(np.float32)

    # 2-D head weights with the boundary mask folded in (pre-broadcast).
    q = np.arange(_P2)
    h2, w2l = q // N, q % N
    for t, (oh, ow) in enumerate(_TAPS2):
        valid = ((h2 + oh >= 0) & (h2 + oh < N) &
                 (w2l + ow >= 0) & (w2l + ow < N)).astype(np.float32)
        P[R_WHM + 2 * t, 0:_P2] = wmu[t] * valid
        P[R_WHM + 2 * t + 1, 0:_P2] = wsig[t] * valid

    return jnp.asarray(P)


# --------------------- pure-JAX reference (for validation) ------------------ #
def _im2col3d(x):
    Cin, D, H, W = x.shape
    xp = jnp.pad(x, ((0, 0), (1, 1), (1, 1), (1, 1)))
    cols = [xp[:, kd:kd + D, kh:kh + H, kw:kw + W].reshape(Cin, -1)
            for kd in range(3) for kh in range(3) for kw in range(3)]
    return jnp.stack(cols, axis=1).reshape(Cin * 27, D * H * W)


def _im2col2d(x):
    Cin, H, W = x.shape
    xp = jnp.pad(x, ((0, 0), (1, 1), (1, 1)))
    cols = [xp[:, kh:kh + H, kw:kw + W].reshape(Cin, -1)
            for kh in range(3) for kw in range(3)]
    return jnp.stack(cols, axis=1).reshape(Cin * 9, H * W)


def reference_forward(params, f_map):
    hi = jax.lax.Precision.HIGHEST
    D, N = F_MAP_DEPTH, NB_BLOCKS
    x = f_map.reshape(1, D, N, N)
    for (w, b) in params["blocks"]:
        cout, cin = w.shape[0], w.shape[1]
        x = (jnp.dot(w.reshape(cout, cin * 27), _im2col3d(x), precision=hi)
             + b[:, None]).reshape(cout, D, N, N)
    x2d = (jnp.dot(params["w_3to2d"].reshape(1, D), x.reshape(D, N * N), precision=hi)
           + params["b_3to2d"][:, None])                              # (1, 64)
    patches2 = _im2col2d(x2d.reshape(1, N, N))
    sigma = jax.nn.sigmoid(jnp.dot(params["w_sig"].reshape(1, 9), patches2, precision=hi)
                           + params["b_sig"][:, None]).reshape(1, 1, N, N)
    mu = jax.nn.sigmoid(jnp.dot(params["w_mu"].reshape(1, 9), patches2, precision=hi)
                        + params["b_mu"][:, None]).reshape(1, 1, N, N)
    val = jnp.dot(x2d, params["w_val"].T, precision=hi) + params["b_val"]   # (1, 1)
    return (mu, sigma), val


if __name__ == "__main__":
    key = jax.random.PRNGKey(0)
    pkey, xkey = jax.random.split(key)
    params = init_params(pkey)
    pslab = prepare_params(params)        # one-time layout step, not in the hot path
    f_map = jax.random.normal(xkey, (F_MAP_DEPTH, NB_BLOCKS, NB_BLOCKS), jnp.float32)

    fwd = jax.jit(actor_critic_forward)
    (mu, sigma), val = fwd(pslab, f_map)
    jax.block_until_ready((mu, sigma, val))

    assert mu.shape == (1, 1, NB_BLOCKS, NB_BLOCKS)
    assert sigma.shape == (1, 1, NB_BLOCKS, NB_BLOCKS)
    assert val.shape == (1, 1)
    assert bool(jnp.all((mu > 0) & (mu < 1))) and bool(jnp.all((sigma > 0) & (sigma < 1)))

    (mu_r, sigma_r), val_r = reference_forward(params, f_map)
    assert bool(jnp.allclose(mu, mu_r, atol=2e-2)), "mu mismatch vs reference"
    assert bool(jnp.allclose(sigma, sigma_r, atol=2e-2)), "sigma mismatch vs reference"
    assert bool(jnp.allclose(val, val_r, atol=2e-2)), "val mismatch vs reference"
    print("KERNEL_OK")
</pallas_src>

<mosaic_0001>
module attributes {stable_mosaic.version = 11 : i64} {
  func.func @_actor_critic_kernel(%arg0: memref<16x256xf32, #tpu.memory_space<vmem>>, %arg1: memref<104x512xf32, #tpu.memory_space<vmem>>, %arg2: memref<8x128xf32, #tpu.memory_space<vmem>>, %arg3: memref<432x256xf32, #tpu.memory_space<vmem>>) attributes {dimension_semantics = [], scalar_prefetch = 0 : i64, scratch_operands = 1 : i64, tpu.core_type = #tpu.core_type<tc>} {
    %c48 = arith.constant 48 : index
    %c0 = arith.constant 0 : index
    %0 = vector.load %arg1[%c48, %c0] : memref<104x512xf32, #tpu.memory_space<vmem>>, vector<27x256xf32>
    %c0_0 = arith.constant 0 : index
    %c0_1 = arith.constant 0 : index
    %1 = vector.load %arg0[%c0_0, %c0_1] : memref<16x256xf32, #tpu.memory_space<vmem>>, vector<16x256xf32>
    %cst = arith.constant 0.000000e+00 : f32
    %2 = vector.broadcast %cst : f32 to vector<16x128xf32>
    %cst_2 = arith.constant 0.000000e+00 : f32
    %3 = vector.broadcast %cst_2 : f32 to vector<16x128xf32>
    %4 = tpu.concatenate %2, %1, %3 in 1 : vector<16x128xf32>, vector<16x256xf32>, vector<16x128xf32> -> vector<16x512xf32>
    %5 = vector.extract_strided_slice %4 {offsets = [0, 55], sizes = [16, 256], strides = [1, 1]} : vector<16x512xf32> to vector<16x256xf32>
    %6 = vector.extract_strided_slice %0 {offsets = [0, 0], sizes = [1, 256], strides = [1, 1]} : vector<27x256xf32> to vector<1x256xf32>
    %7 = vector.broadcast %6 : vector<1x256xf32> to vector<16x256xf32>
    %8 = arith.mulf %5, %7 : vector<16x256xf32>
    %c0_3 = arith.constant 0 : index
    %c0_4 = arith.constant 0 : index
    %9 = vector.load %arg3[%c0_3, %c0_4] : memref<432x256xf32, #tpu.memory_space<vmem>>, vector<16x256xf32>
    tpu.vector_store %arg3[%c0_3, %c0_4], %8 {strides = array<i32>} : memref<432x256xf32, #tpu.memory_space<vmem>>, vector<16x256xf32>,
    %10 = vector.extract_strided_slice %4 {offsets = [0, 56], sizes = [16, 256], strides = [1, 1]} : vector<16x512xf32> to vector<16x256xf32>
    %11 = vector.extract_strided_slice %0 {offsets = [1, 0], sizes = [1, 256], strides = [1, 1]} : vector<27x256xf32> to vector<1x256xf32>
    %12 = vector.broadcast %11 : vector<1x256xf32> to vector<16x256xf32>
    %13 = arith.mulf %10, %12 : vector<16x256xf32>
    %c16 = arith.constant 16 : index
    %c0_5 = arith.constant 0 : index
    %14 = vector.load %arg3[%c16, %c0_5] : memref<432x256xf32, #tpu.memory_space<vmem>>, vector<16x256xf32>
    tpu.vector_store %arg3[%c16, %c0_5], %13 {strides = array<i32>} : memref<432x256xf32, #tpu.memory_space<vmem>>, vector<16x256xf32>,
    %15 = vector.extract_strided_slice %4 {offsets = [0, 57], sizes = [16, 256], strides = [1, 1]} : vector<16x512xf32> to vector<16x256xf32>
    %16 = vector.extract_strided_slice %0 {offsets = [2, 0], sizes = [1, 256], strides = [1, 1]} : vector<27x256xf32> to vector<1x256xf32>
    %17 = vector.broadcast %16 : vector<1x256xf32> to vector<16x256xf32>
    %18 = arith.mulf %15, %17 : vector<16x256xf32>
    %c32 = arith.constant 32 : index
    %c0_6 = arith.constant 0 : index
    %19 = vector.load %arg3[%c32, %c0_6] : memref<432x256xf32, #tpu.memory_space<vmem>>, vector<16x256xf32>
    tpu.vector_store %arg3[%c32, %c0_6], %18 {strides = array<i32>} : memref<432x256xf32, #tpu.memory_space<vmem>>, vector<16x256xf32>,
    %20 = vector.extract_strided_slice %4 {offsets = [0, 63], sizes = [16, 256], strides = [1, 1]} : vector<16x512xf32> to vector<16x256xf32>
    %21 = vector.extract_strided_slice %0 {offsets = [3, 0], sizes = [1, 256], strides = [1, 1]} : vector<27x256xf32> to vector<1x256xf32>
    %22 = vector.broadcast %21 : vector<1x256xf32> to vector<16x256xf32>
    %23 = arith.mulf %20, %22 : vector<16x256xf32>
    %c48_7 = arith.constant 48 : index
    %c0_8 = arith.constant 0 : index
    %24 = vector.load %arg3[%c48_7, %c0_8] : memref<432x256xf32, #tpu.memory_space<vmem>>, vector<16x256xf32>
    tpu.vector_store %arg3[%c48_7, %c0_8], %23 {strides = array<i32>} : memref<432x256xf32, #tpu.memory_space<vmem>>, vector<16x256xf32>,
    %25 = vector.extract_strided_slice %4 {offsets = [0, 64], sizes = [16, 256], strides = [1, 1]} : vector<16x512xf32> to vector<16x256xf32>
    %26 = vector.extract_strided_slice %0 {offsets = [4, 0], sizes = [1, 256], strides = [1, 1]} : vector<27x256xf32> to vector<1x256xf32>
    %27 = vector.broadcast %26 : vector<1x256xf32> to vector<16x256xf32>
    %28 = arith.mulf %25, %27 : vector<16x256xf32>
    %c64 = arith.constant 64 : index
    %c0_9 = arith.constant 0 : index
    %29 = vector.load %arg3[%c64, %c0_9] : memref<432x256xf32, #tpu.memory_space<vmem>>, vector<16x256xf32>
    tpu.vector_store %arg3[%c64, %c0_9], %28 {strides = array<i32>} : memref<432x256xf32, #tpu.memory_space<vmem>>, vector<16x256xf32>,
    %30 = vector.extract_strided_slice %4 {offsets = [0, 65], sizes = [16, 256], strides = [1, 1]} : vector<16x512xf32> to vector<16x256xf32>
    %31 = vector.extract_strided_slice %0 {offsets = [5, 0], sizes = [1, 256], strides = [1, 1]} : vector<27x256xf32> to vector<1x256xf32>
    %32 = vector.broadcast %31 : vector<1x256xf32> to vector<16x256xf32>
    %33 = arith.mulf %30, %32 : vector<16x256xf32>
    %c80 = arith.constant 80 : index
    %c0_10 = arith.constant 0 : index
    %34 = vector.load %arg3[%c80, %c0_10] : memref<432x256xf32, #tpu.memory_space<vmem>>, vector<16x256xf32>
    tpu.vector_store %arg3[%c80, %c0_10], %33 {strides = array<i32>} : memref<432x256xf32, #tpu.memory_space<vmem>>, vector<16x256xf32>,
    %35 = vector.extract_strided_slice %4 {offsets = [0, 71], sizes = [16, 256], strides = [1, 1]} : vector<16x512xf32> to vector<16x256xf32>
    %36 = vector.extract_strided_slice %0 {offsets = [6, 0], sizes = [1, 256], strides = [1, 1]} : vector<27x256xf32> to vector<1x256xf32>
    %37 = vector.broadcast %36 : vector<1x256xf32> to vector<16x256xf32>
    %38 = arith.mulf %35, %37 : vector<16x256xf32>
    %c96 = arith.constant 96 : index
    %c0_11 = arith.constant 0 : index
    %39 = vector.load %arg3[%c96, %c0_11] : memref<432x256xf32, #tpu.memory_space<vmem>>, vector<16x256xf32>
    tpu.vector_store %arg3[%c96, %c0_11], %38 {strides = array<i32>} : memref<432x256xf32, #tpu.memory_space<vmem>>, vector<16x256xf32>,
    %40 = vector.extract_strided_slice %4 {offsets = [0, 72], sizes = [16, 256], strides = [1, 1]} : vector<16x512xf32> to vector<16x256xf32>
    %41 = vector.extract_strided_slice %0 {offsets = [7, 0], sizes = [1, 256], strides = [1, 1]} : vector<27x256xf32> to vector<1x256xf32>
    %42 = vector.broadcast %41 : vector<1x256xf32> to vector<16x256xf32>
    %43 = arith.mulf %40, %42 : vector<16x256xf32>
    %c112 = arith.constant 112 : index
    %c0_12 = arith.constant 0 : index
    %44 = vector.load %arg3[%c112, %c0_12] : memref<432x256xf32, #tpu.memory_space<vmem>>, vector<16x256xf32>
    tpu.vector_store %arg3[%c112, %c0_12], %43 {strides = array<i32>} : memref<432x256xf32, #tpu.memory_space<vmem>>, vector<16x256xf32>,
    %45 = vector.extract_strided_slice %4 {offsets = [0, 73], sizes = [16, 256], strides = [1, 1]} : vector<16x512xf32> to vector<16x256xf32>
    %46 = vector.extract_strided_slice %0 {offsets = [8, 0], sizes = [1, 256], strides = [1, 1]} : vector<27x256xf32> to vector<1x256xf32>
    %47 = vector.broadcast %46 : vector<1x256xf32> to vector<16x256xf32>
    %48 = arith.mulf %45, %47 : vector<16x256xf32>
    %c128 = arith.constant 128 : index
    %c0_13 = arith.constant 0 : index
    %49 = vector.load %arg3[%c128, %c0_13] : memref<432x256xf32, #tpu.memory_space<vmem>>, vector<16x256xf32>
    tpu.vector_store %arg3[%c128, %c0_13], %48 {strides = array<i32>} : memref<432x256xf32, #tpu.memory_space<vmem>>, vector<16x256xf32>,
    %50 = vector.extract_strided_slice %4 {offsets = [0, 119], sizes = [16, 256], strides = [1, 1]} : vector<16x512xf32> to vector<16x256xf32>
    %51 = vector.extract_strided_slice %0 {offsets = [9, 0], sizes = [1, 256], strides = [1, 1]} : vector<27x256xf32> to vector<1x256xf32>
    %52 = vector.broadcast %51 : vector<1x256xf32> to vector<16x256xf32>
    %53 = arith.mulf %50, %52 : vector<16x256xf32>
    %c144 = arith.constant 144 : index
    %c0_14 = arith.constant 0 : index
    %54 = vector.load %arg3[%c144, %c0_14] : memref<432x256xf32, #tpu.memory_space<vmem>>, vector<16x256xf32>
    tpu.vector_store %arg3[%c144, %c0_14], %53 {strides = array<i32>} : memref<432x256xf32, #tpu.memory_space<vmem>>, vector<16x256xf32>,
    %55 = vector.extract_strided_slice %4 {offsets = [0, 120], sizes = [16, 256], strides = [1, 1]} : vector<16x512xf32> to vector<16x256xf32>
    %56 = vector.extract_strided_slice %0 {offsets = [10, 0], sizes = [1, 256], strides = [1, 1]} : vector<27x256xf32> to vector<1x256xf32>
    %57 = vector.broadcast %56 : vector<1x256xf32> to vector<16x256xf32>
    %58 = arith.mulf %55, %57 : vector<16x256xf32>
    %c160 = arith.constant 160 : index
    %c0_15 = arith.constant 0 : index
    %59 = vector.load %arg3[%c160, %c0_15] : memref<432x256xf32, #tpu.memory_space<vmem>>, vector<16x256xf32>
    tpu.vector_store %arg3[%c160, %c0_15], %58 {strides = array<i32>} : memref<432x256xf32, #tpu.memory_space<vmem>>, vector<16x256xf32>,
    %60 = vector.extract_strided_slice %4 {offsets = [0, 121], sizes = [16, 256], strides = [1, 1]} : vector<16x512xf32> to vector<16x256xf32>
    %61 = vector.extract_strided_slice %0 {offsets = [11, 0], sizes = [1, 256], strides = [1, 1]} : vector<27x256xf32> to vector<1x256xf32>
    %62 = vector.broadcast %61 : vector<1x256xf32> to vector<16x256xf32>
    %63 = arith.mulf %60, %62 : vector<16x256xf32>
    %c176 = arith.constant 176 : index
    %c0_16 = arith.constant 0 : index
    %64 = vector.load %arg3[%c176, %c0_16] : memref<432x256xf32, #tpu.memory_space<vmem>>, vector<16x256xf32>
    tpu.vector_store %arg3[%c176, %c0_16], %63 {strides = array<i32>} : memref<432x256xf32, #tpu.memory_space<vmem>>, vector<16x256xf32>,
    %65 = vector.extract_strided_slice %4 {offsets = [0, 127], sizes = [16, 256], strides = [1, 1]} : vector<16x512xf32> to vector<16x256xf32>
    %66 = vector.extract_strided_slice %0 {offsets = [12, 0], sizes = [1, 256], strides = [1, 1]} : vector<27x256xf32> to vector<1x256xf32>
    %67 = vector.broadcast %66 : vector<1x256xf32> to vector<16x256xf32>
    %68 = arith.mulf %65, %67 : vector<16x256xf32>
    %c192 = arith.constant 192 : index
    %c0_17 = arith.constant 0 : index
    %69 = vector.load %arg3[%c192, %c0_17] : memref<432x256xf32, #tpu.memory_space<vmem>>, vector<16x256xf32>
    tpu.vector_store %arg3[%c192, %c0_17], %68 {strides = array<i32>} : memref<432x256xf32, #tpu.memory_space<vmem>>, vector<16x256xf32>,
    %70 = vector.extract_strided_slice %4 {offsets = [0, 128], sizes = [16, 256], strides = [1, 1]} : vector<16x512xf32> to vector<16x256xf32>
    %71 = vector.extract_strided_slice %0 {offsets = [13, 0], sizes = [1, 256], strides = [1, 1]} : vector<27x256xf32> to vector<1x256xf32>
    %72 = vector.broadcast %71 : vector<1x256xf32> to vector<16x256xf32>
    %73 = arith.mulf %70, %72 : vector<16x256xf32>
    %c208 = arith.constant 208 : index
    %c0_18 = arith.constant 0 : index
    %74 = vector.load %arg3[%c208, %c0_18] : memref<432x256xf32, #tpu.memory_space<vmem>>, vector<16x256xf32>
    tpu.vector_store %arg3[%c208, %c0_18], %73 {strides = array<i32>} : memref<432x256xf32, #tpu.memory_space<vmem>>, vector<16x256xf32>,
    %75 = vector.extract_strided_slice %4 {offsets = [0, 129], sizes = [16, 256], strides = [1, 1]} : vector<16x512xf32> to vector<16x256xf32>
    %76 = vector.extract_strided_slice %0 {offsets = [14, 0], sizes = [1, 256], strides = [1, 1]} : vector<27x256xf32> to vector<1x256xf32>
    %77 = vector.broadcast %76 : vector<1x256xf32> to vector<16x256xf32>
    %78 = arith.mulf %75, %77 : vector<16x256xf32>
    %c224 = arith.constant 224 : index
    %c0_19 = arith.constant 0 : index
    %79 = vector.load %arg3[%c224, %c0_19] : memref<432x256xf32, #tpu.memory_space<vmem>>, vector<16x256xf32>
    tpu.vector_store %arg3[%c224, %c0_19], %78 {strides = array<i32>} : memref<432x256xf32, #tpu.memory_space<vmem>>, vector<16x256xf32>,
    %80 = vector.extract_strided_slice %4 {offsets = [0, 135], sizes = [16, 256], strides = [1, 1]} : vector<16x512xf32> to vector<16x256xf32>
    %81 = vector.extract_strided_slice %0 {offsets = [15, 0], sizes = [1, 256], strides = [1, 1]} : vector<27x256xf32> to vector<1x256xf32>
    %82 = vector.broadcast %81 : vector<1x256xf32> to vector<16x256xf32>
    %83 = arith.mulf %80, %82 : vector<16x256xf32>
    %c240 = arith.constant 240 : index
    %c0_20 = arith.constant 0 : index
    %84 = vector.load %arg3[%c240, %c0_20] : memref<432x256xf32, #tpu.memory_space<vmem>>, vector<16x256xf32>
    tpu.vector_store %arg3[%c240, %c0_20], %83 {strides = array<i32>} : memref<432x256xf32, #tpu.memory_space<vmem>>, vector<16x256xf32>,
    %85 = vector.extract_strided_slice %4 {offsets = [0, 136], sizes = [16, 256], strides = [1, 1]} : vector<16x512xf32> to vector<16x256xf32>
    %86 = vector.extract_strided_slice %0 {offsets = [16, 0], sizes = [1, 256], strides = [1, 1]} : vector<27x256xf32> to vector<1x256xf32>
    %87 = vector.broadcast %86 : vector<1x256xf32> to vector<16x256xf32>
    %88 = arith.mulf %85, %87 : vector<16x256xf32>
    %c256 = arith.constant 256 : index
    %c0_21 = arith.constant 0 : index
    %89 = vector.load %arg3[%c256, %c0_21] : memref<432x256xf32, #tpu.memory_space<vmem>>, vector<16x256xf32>
    tpu.vector_store %arg3[%c256, %c0_21], %88 {strides = array<i32>} : memref<432x256xf32, #tpu.memory_space<vmem>>, vector<16x256xf32>,
    %90 = vector.extract_strided_slice %4 {offsets = [0, 137], sizes = [16, 256], strides = [1, 1]} : vector<16x512xf32> to vector<16x256xf32>
    %91 = vector.extract_strided_slice %0 {offsets = [17, 0], sizes = [1, 256], strides = [1, 1]} : vector<27x256xf32> to vector<1x256xf32>
    %92 = vector.broadcast %91 : vector<1x256xf32> to vector<16x256xf32>
    %93 = arith.mulf %90, %92 : vector<16x256xf32>
    %c272 = arith.constant 272 : index
    %c0_22 = arith.constant 0 : index
    %94 = vector.load %arg3[%c272, %c0_22] : memref<432x256xf32, #tpu.memory_space<vmem>>, vector<16x256xf32>
    tpu.vector_store %arg3[%c272, %c0_22], %93 {strides = array<i32>} : memref<432x256xf32, #tpu.memory_space<vmem>>, vector<16x256xf32>,
    %95 = vector.extract_strided_slice %4 {offsets = [0, 183], sizes = [16, 256], strides = [1, 1]} : vector<16x512xf32> to vector<16x256xf32>
    %96 = vector.extract_strided_slice %0 {offsets = [18, 0], sizes = [1, 256], strides = [1, 1]} : vector<27x256xf32> to vector<1x256xf32>
    %97 = vector.broadcast %96 : vector<1x256xf32> to vector<16x256xf32>
    %98 = arith.mulf %95, %97 : vector<16x256xf32>
    %c288 = arith.constant 288 : index
    %c0_23 = arith.constant 0 : index
    %99 = vector.load %arg3[%c288, %c0_23] : memref<432x256xf32, #tpu.memory_space<vmem>>, vector<16x256xf32>
    tpu.vector_store %arg3[%c288, %c0_23], %98 {strides = array<i32>} : memref<432x256xf32, #tpu.memory_space<vmem>>, vector<16x256xf32>,
    %100 = vector.extract_strided_slice %4 {offsets = [0, 184], sizes = [16, 256], strides = [1, 1]} : vector<16x512xf32> to vector<16x256xf32>
    %101 = vector.extract_strided_slice %0 {offsets = [19, 0], sizes = [1, 256], strides = [1, 1]} : vector<27x256xf32> to vector<1x256xf32>
    %102 = vector.broadcast %101 : vector<1x256xf32> to vector<16x256xf32>
    %103 = arith.mulf %100, %102 : vector<16x256xf32>
    %c304 = arith.constant 304 : index
    %c0_24 = arith.constant 0 : index
    %104 = vector.load %arg3[%c304, %c0_24] : memref<432x256xf32, #tpu.memory_space<vmem>>, vector<16x256xf32>
    tpu.vector_store %arg3[%c304, %c0_24], %103 {strides = array<i32>} : memref<432x256xf32, #tpu.memory_space<vmem>>, vector<16x256xf32>,
    %105 = vector.extract_strided_slice %4 {offsets = [0, 185], sizes = [16, 256], strides = [1, 1]} : vector<16x512xf32> to vector<16x256xf32>
    %106 = vector.extract_strided_slice %0 {offsets = [20, 0], sizes = [1, 256], strides = [1, 1]} : vector<27x256xf32> to vector<1x256xf32>
    %107 = vector.broadcast %106 : vector<1x256xf32> to vector<16x256xf32>
    %108 = arith.mulf %105, %107 : vector<16x256xf32>
    %c320 = arith.constant 320 : index
    %c0_25 = arith.constant 0 : index
    %109 = vector.load %arg3[%c320, %c0_25] : memref<432x256xf32, #tpu.memory_space<vmem>>, vector<16x256xf32>
    tpu.vector_store %arg3[%c320, %c0_25], %108 {strides = array<i32>} : memref<432x256xf32, #tpu.memory_space<vmem>>, vector<16x256xf32>,
    %110 = vector.extract_strided_slice %4 {offsets = [0, 191], sizes = [16, 256], strides = [1, 1]} : vector<16x512xf32> to vector<16x256xf32>
    %111 = vector.extract_strided_slice %0 {offsets = [21, 0], sizes = [1, 256], strides = [1, 1]} : vector<27x256xf32> to vector<1x256xf32>
    %112 = vector.broadcast %111 : vector<1x256xf32> to vector<16x256xf32>
    %113 = arith.mulf %110, %112 : vector<16x256xf32>
    %c336 = arith.constant 336 : index
    %c0_26 = arith.constant 0 : index
    %114 = vector.load %arg3[%c336, %c0_26] : memref<432x256xf32, #tpu.memory_space<vmem>>, vector<16x256xf32>
    tpu.vector_store %arg3[%c336, %c0_26], %113 {strides = array<i32>} : memref<432x256xf32, #tpu.memory_space<vmem>>, vector<16x256xf32>,
    %115 = vector.extract_strided_slice %4 {offsets = [0, 192], sizes = [16, 256], strides = [1, 1]} : vector<16x512xf32> to vector<16x256xf32>
    %116 = vector.extract_strided_slice %0 {offsets = [22, 0], sizes = [1, 256], strides = [1, 1]} : vector<27x256xf32> to vector<1x256xf32>
    %117 = vector.broadcast %116 : vector<1x256xf32> to vector<16x256xf32>
    %118 = arith.mulf %115, %117 : vector<16x256xf32>
    %c352 = arith.constant 352 : index
    %c0_27 = arith.constant 0 : index
    %119 = vector.load %arg3[%c352, %c0_27] : memref<432x256xf32, #tpu.memory_space<vmem>>, vector<16x256xf32>
    tpu.vector_store %arg3[%c352, %c0_27], %118 {strides = array<i32>} : memref<432x256xf32, #tpu.memory_space<vmem>>, vector<16x256xf32>,
    %120 = vector.extract_strided_slice %4 {offsets = [0, 193], sizes = [16, 256], strides = [1, 1]} : vector<16x512xf32> to vector<16x256xf32>
    %121 = vector.extract_strided_slice %0 {offsets = [23, 0], sizes = [1, 256], strides = [1, 1]} : vector<27x256xf32> to vector<1x256xf32>
    %122 = vector.broadcast %121 : vector<1x256xf32> to vector<16x256xf32>
    %123 = arith.mulf %120, %122 : vector<16x256xf32>
    %c368 = arith.constant 368 : index
    %c0_28 = arith.constant 0 : index
    %124 = vector.load %arg3[%c368, %c0_28] : memref<432x256xf32, #tpu.memory_space<vmem>>, vector<16x256xf32>
    tpu.vector_store %arg3[%c368, %c0_28], %123 {strides = array<i32>} : memref<432x256xf32, #tpu.memory_space<vmem>>, vector<16x256xf32>,
    %125 = vector.extract_strided_slice %4 {offsets = [0, 199], sizes = [16, 256], strides = [1, 1]} : vector<16x512xf32> to vector<16x256xf32>
    %126 = vector.extract_strided_slice %0 {offsets = [24, 0], sizes = [1, 256], strides = [1, 1]} : vector<27x256xf32> to vector<1x256xf32>
    %127 = vector.broadcast %126 : vector<1x256xf32> to vector<16x256xf32>
    %128 = arith.mulf %125, %127 : vector<16x256xf32>
    %c384 = arith.constant 384 : index
    %c0_29 = arith.constant 0 : index
    %129 = vector.load %arg3[%c384, %c0_29] : memref<432x256xf32, #tpu.memory_space<vmem>>, vector<16x256xf32>
    tpu.vector_store %arg3[%c384, %c0_29], %128 {strides = array<i32>} : memref<432x256xf32, #tpu.memory_space<vmem>>, vector<16x256xf32>,
    %130 = vector.extract_strided_slice %4 {offsets = [0, 200], sizes = [16, 256], strides = [1, 1]} : vector<16x512xf32> to vector<16x256xf32>
    %131 = vector.extract_strided_slice %0 {offsets = [25, 0], sizes = [1, 256], strides = [1, 1]} : vector<27x256xf32> to vector<1x256xf32>
    %132 = vector.broadcast %131 : vector<1x256xf32> to vector<16x256xf32>
    %133 = arith.mulf %130, %132 : vector<16x256xf32>
    %c400 = arith.constant 400 : index
    %c0_30 = arith.constant 0 : index
    %134 = vector.load %arg3[%c400, %c0_30] : memref<432x256xf32, #tpu.memory_space<vmem>>, vector<16x256xf32>
    tpu.vector_store %arg3[%c400, %c0_30], %133 {strides = array<i32>} : memref<432x256xf32, #tpu.memory_space<vmem>>, vector<16x256xf32>,
    %135 = vector.extract_strided_slice %4 {offsets = [0, 201], sizes = [16, 256], strides = [1, 1]} : vector<16x512xf32> to vector<16x256xf32>
    %136 = vector.extract_strided_slice %0 {offsets = [26, 0], sizes = [1, 256], strides = [1, 1]} : vector<27x256xf32> to vector<1x256xf32>
    %137 = vector.broadcast %136 : vector<1x256xf32> to vector<16x256xf32>
    %138 = arith.mulf %135, %137 : vector<16x256xf32>
    %c416 = arith.constant 416 : index
    %c0_31 = arith.constant 0 : index
    %139 = vector.load %arg3[%c416, %c0_31] : memref<432x256xf32, #tpu.memory_space<vmem>>, vector<16x256xf32>
    tpu.vector_store %arg3[%c416, %c0_31], %138 {strides = array<i32>} : memref<432x256xf32, #tpu.memory_space<vmem>>, vector<16x256xf32>,
    %cst_32 = arith.constant 1.000000e+00 : f32
    %140 = vector.broadcast %cst_32 : f32 to vector<1x256xf32>
    %c15 = arith.constant 15 : index
    %c0_33 = arith.constant 0 : index
    %141 = vector.load %arg3[%c15, %c0_33] : memref<432x256xf32, #tpu.memory_space<vmem>>, vector<1x256xf32>
    tpu.vector_store %arg3[%c15, %c0_33], %140 {strides = array<i32>} : memref<432x256xf32, #tpu.memory_space<vmem>>, vector<1x256xf32>,
    %c0_34 = arith.constant 0 : index
    %c0_35 = arith.constant 0 : index
    %142 = vector.load %arg1[%c0_34, %c0_35] : memref<104x512xf32, #tpu.memory_space<vmem>>, vector<16x432xf32>
    %c0_36 = arith.constant 0 : index
    %c0_37 = arith.constant 0 : index
    %143 = vector.load %arg3[%c0_36, %c0_37] : memref<432x256xf32, #tpu.memory_space<vmem>>, vector<432x256xf32>
    %cst_38 = arith.constant dense<0.000000e+00> : vector<16x256xf32>
    %144 = tpu.matmul %142, %143, %cst_38 {dimension_numbers = #tpu.dot_dimension_numbers<[1], [0], [0], [1], [0, 0, 1, 1], [], []>} : vector<16x432xf32>, vector<432x256xf32>, vector<16x256xf32> -> vector<16x256xf32>
    %cst_39 = arith.constant 0.000000e+00 : f32
    %145 = vector.broadcast %cst_39 : f32 to vector<16x128xf32>
    %cst_40 = arith.constant 0.000000e+00 : f32
    %146 = vector.broadcast %cst_40 : f32 to vector<16x128xf32>
    %147 = tpu.concatenate %145, %144, %146 in 1 : vector<16x128xf32>, vector<16x256xf32>, vector<16x128xf32> -> vector<16x512xf32>
    %148 = vector.extract_strided_slice %147 {offsets = [0, 55], sizes = [16, 256], strides = [1, 1]} : vector<16x512xf32> to vector<16x256xf32>
    %149 = vector.extract_strided_slice %0 {offsets = [0, 0], sizes = [1, 256], strides = [1, 1]} : vector<27x256xf32> to vector<1x256xf32>
    %150 = vector.broadcast %149 : vector<1x256xf32> to vector<16x256xf32>
    %151 = arith.mulf %148, %150 : vector<16x256xf32>
    %c0_41 = arith.constant 0 : index
    %c0_42 = arith.constant 0 : index
    %152 = vector.load %arg3[%c0_41, %c0_42] : memref<432x256xf32, #tpu.memory_space<vmem>>, vector<16x256xf32>
    tpu.vector_store %arg3[%c0_41, %c0_42], %151 {strides = array<i32>} : memref<432x256xf32, #tpu.memory_space<vmem>>, vector<16x256xf32>,
    %153 = vector.extract_strided_slice %147 {offsets = [0, 56], sizes = [16, 256], strides = [1, 1]} : vector<16x512xf32> to vector<16x256xf32>
    %154 = vector.extract_strided_slice %0 {offsets = [1, 0], sizes = [1, 256], strides = [1, 1]} : vector<27x256xf32> to vector<1x256xf32>
    %155 = vector.broadcast %154 : vector<1x256xf32> to vector<16x256xf32>
    %156 = arith.mulf %153, %155 : vector<16x256xf32>
    %c16_43 = arith.constant 16 : index
    %c0_44 = arith.constant 0 : index
    %157 = vector.load %arg3[%c16_43, %c0_44] : memref<432x256xf32, #tpu.memory_space<vmem>>, vector<16x256xf32>
    tpu.vector_store %arg3[%c16_43, %c0_44], %156 {strides = array<i32>} : memref<432x256xf32, #tpu.memory_space<vmem>>, vector<16x256xf32>,
    %158 = vector.extract_strided_slice %147 {offsets = [0, 57], sizes = [16, 256], strides = [1, 1]} : vector<16x512xf32> to vector<16x256xf32>
    %159 = vector.extract_strided_slice %0 {offsets = [2, 0], sizes = [1, 256], strides = [1, 1]} : vector<27x256xf32> to vector<1x256xf32>
    %160 = vector.broadcast %159 : vector<1x256xf32> to vector<16x256xf32>
    %161 = arith.mulf %158, %160 : vector<16x256xf32>
    %c32_45 = arith.constant 32 : index
    %c0_46 = arith.constant 0 : index
    %162 = vector.load %arg3[%c32_45, %c0_46] : memref<432x256xf32, #tpu.memory_space<vmem>>, vector<16x256xf32>
    tpu.vector_store %arg3[%c32_45, %c0_46], %161 {strides = array<i32>} : memref<432x256xf32, #tpu.memory_space<vmem>>, vector<16x256xf32>,
    %163 = vector.extract_strided_slice %147 {offsets = [0, 63], sizes = [16, 256], strides = [1, 1]} : vector<16x512xf32> to vector<16x256xf32>
    %164 = vector.extract_strided_slice %0 {offsets = [3, 0], sizes = [1, 256], strides = [1, 1]} : vector<27x256xf32> to vector<1x256xf32>
    %165 = vector.broadcast %164 : vector<1x256xf32> to vector<16x256xf32>
    %166 = arith.mulf %163, %165 : vector<16x256xf32>
    %c48_47 = arith.constant 48 : index
    %c0_48 = arith.constant 0 : index
    %167 = vector.load %arg3[%c48_47, %c0_48] : memref<432x256xf32, #tpu.memory_space<vmem>>, vector<16x256xf32>
    tpu.vector_store %arg3[%c48_47, %c0_48], %166 {strides = array<i32>} : memref<432x256xf32, #tpu.memory_space<vmem>>, vector<16x256xf32>,
    %168 = vector.extract_strided_slice %147 {offsets = [0, 64], sizes = [16, 256], strides = [1, 1]} : vector<16x512xf32> to vector<16x256xf32>
    %169 = vector.extract_strided_slice %0 {offsets = [4, 0], sizes = [1, 256], strides = [1, 1]} : vector<27x256xf32> to vector<1x256xf32>
    %170 = vector.broadcast %169 : vector<1x256xf32> to vector<16x256xf32>
    %171 = arith.mulf %168, %170 : vector<16x256xf32>
    %c64_49 = arith.constant 64 : index
    %c0_50 = arith.constant 0 : index
    %172 = vector.load %arg3[%c64_49, %c0_50] : memref<432x256xf32, #tpu.memory_space<vmem>>, vector<16x256xf32>
    tpu.vector_store %arg3[%c64_49, %c0_50], %171 {strides = array<i32>} : memref<432x256xf32, #tpu.memory_space<vmem>>, vector<16x256xf32>,
    %173 = vector.extract_strided_slice %147 {offsets = [0, 65], sizes = [16, 256], strides = [1, 1]} : vector<16x512xf32> to vector<16x256xf32>
    %174 = vector.extract_strided_slice %0 {offsets = [5, 0], sizes = [1, 256], strides = [1, 1]} : vector<27x256xf32> to vector<1x256xf32>
    %175 = vector.broadcast %174 : vector<1x256xf32> to vector<16x256xf32>
    %176 = arith.mulf %173, %175 : vector<16x256xf32>
    %c80_51 = arith.constant 80 : index
    %c0_52 = arith.constant 0 : index
    %177 = vector.load %arg3[%c80_51, %c0_52] : memref<432x256xf32, #tpu.memory_space<vmem>>, vector<16x256xf32>
    tpu.vector_store %arg3[%c80_51, %c0_52], %176 {strides = array<i32>} : memref<432x256xf32, #tpu.memory_space<vmem>>, vector<16x256xf32>,
    %178 = vector.extract_strided_slice %147 {offsets = [0, 71], sizes = [16, 256], strides = [1, 1]} : vector<16x512xf32> to vector<16x256xf32>
    %179 = vector.extract_strided_slice %0 {offsets = [6, 0], sizes = [1, 256], strides = [1, 1]} : vector<27x256xf32> to vector<1x256xf32>
    %180 = vector.broadcast %179 : vector<1x256xf32> to vector<16x256xf32>
    %181 = arith.mulf %178, %180 : vector<16x256xf32>
    %c96_53 = arith.constant 96 : index
    %c0_54 = arith.constant 0 : index
    %182 = vector.load %arg3[%c96_53, %c0_54] : memref<432x256xf32, #tpu.memory_space<vmem>>, vector<16x256xf32>
    tpu.vector_store %arg3[%c96_53, %c0_54], %181 {strides = array<i32>} : memref<432x256xf32, #tpu.memory_space<vmem>>, vector<16x256xf32>,
    %183 = vector.extract_strided_slice %147 {offsets = [0, 72], sizes = [16, 256], strides = [1, 1]} : vector<16x512xf32> to vector<16x256xf32>
    %184 = vector.extract_strided_slice %0 {offsets = [7, 0], sizes = [1, 256], strides = [1, 1]} : vector<27x256xf32> to vector<1x256xf32>
    %185 = vector.broadcast %184 : vector<1x256xf32> to vector<16x256xf32>
    %186 = arith.mulf %183, %185 : vector<16x256xf32>
    %c112_55 = arith.constant 112 : index
    %c0_56 = arith.constant 0 : index
    %187 = vector.load %arg3[%c112_55, %c0_56] : memref<432x256xf32, #tpu.memory_space<vmem>>, vector<16x256xf32>
    tpu.vector_store %arg3[%c112_55, %c0_56], %186 {strides = array<i32>} : memref<432x256xf32, #tpu.memory_space<vmem>>, vector<16x256xf32>,
    %188 = vector.extract_strided_slice %147 {offsets = [0, 73], sizes = [16, 256], strides = [1, 1]} : vector<16x512xf32> to vector<16x256xf32>
    %189 = vector.extract_strided_slice %0 {offsets = [8, 0], sizes = [1, 256], strides = [1, 1]} : vector<27x256xf32> to vector<1x256xf32>
    %190 = vector.broadcast %189 : vector<1x256xf32> to vector<16x256xf32>
    %191 = arith.mulf %188, %190 : vector<16x256xf32>
    %c128_57 = arith.constant 128 : index
    %c0_58 = arith.constant 0 : index
    %192 = vector.load %arg3[%c128_57, %c0_58] : memref<432x256xf32, #tpu.memory_space<vmem>>, vector<16x256xf32>
    tpu.vector_store %arg3[%c128_57, %c0_58], %191 {strides = array<i32>} : memref<432x256xf32, #tpu.memory_space<vmem>>, vector<16x256xf32>,
    %193 = vector.extract_strided_slice %147 {offsets = [0, 119], sizes = [16, 256], strides = [1, 1]} : vector<16x512xf32> to vector<16x256xf32>
    %194 = vector.extract_strided_slice %0 {offsets = [9, 0], sizes = [1, 256], strides = [1, 1]} : vector<27x256xf32> to vector<1x256xf32>
    %195 = vector.broadcast %194 : vector<1x256xf32> to vector<16x256xf32>
    %196 = arith.mulf %193, %195 : vector<16x256xf32>
    %c144_59 = arith.constant 144 : index
    %c0_60 = arith.constant 0 : index
    %197 = vector.load %arg3[%c144_59, %c0_60] : memref<432x256xf32, #tpu.memory_space<vmem>>, vector<16x256xf32>
    tpu.vector_store %arg3[%c144_59, %c0_60], %196 {strides = array<i32>} : memref<432x256xf32, #tpu.memory_space<vmem>>, vector<16x256xf32>,
    %198 = vector.extract_strided_slice %147 {offsets = [0, 120], sizes = [16, 256], strides = [1, 1]} : vector<16x512xf32> to vector<16x256xf32>
    %199 = vector.extract_strided_slice %0 {offsets = [10, 0], sizes = [1, 256], strides = [1, 1]} : vector<27x256xf32> to vector<1x256xf32>
    %200 = vector.broadcast %199 : vector<1x256xf32> to vector<16x256xf32>
    %201 = arith.mulf %198, %200 : vector<16x256xf32>
    %c160_61 = arith.constant 160 : index
    %c0_62 = arith.constant 0 : index
    %202 = vector.load %arg3[%c160_61, %c0_62] : memref<432x256xf32, #tpu.memory_space<vmem>>, vector<16x256xf32>
    tpu.vector_store %arg3[%c160_61, %c0_62], %201 {strides = array<i32>} : memref<432x256xf32, #tpu.memory_space<vmem>>, vector<16x256xf32>,
    %203 = vector.extract_strided_slice %147 {offsets = [0, 121], sizes = [16, 256], strides = [1, 1]} : vector<16x512xf32> to vector<16x256xf32>
    %204 = vector.extract_strided_slice %0 {offsets = [11, 0], sizes = [1, 256], strides = [1, 1]} : vector<27x256xf32> to vector<1x256xf32>
    %205 = vector.broadcast %204 : vector<1x256xf32> to vector<16x256xf32>
    %206 = arith.mulf %203, %205 : vector<16x256xf32>
    %c176_63 = arith.constant 176 : index
    %c0_64 = arith.constant 0 : index
    %207 = vector.load %arg3[%c176_63, %c0_64] : memref<432x256xf32, #tpu.memory_space<vmem>>, vector<16x256xf32>
    tpu.vector_store %arg3[%c176_63, %c0_64], %206 {strides = array<i32>} : memref<432x256xf32, #tpu.memory_space<vmem>>, vector<16x256xf32>,
    %208 = vector.extract_strided_slice %147 {offsets = [0, 127], sizes = [16, 256], strides = [1, 1]} : vector<16x512xf32> to vector<16x256xf32>
    %209 = vector.extract_strided_slice %0 {offsets = [12, 0], sizes = [1, 256], strides = [1, 1]} : vector<27x256xf32> to vector<1x256xf32>
    %210 = vector.broadcast %209 : vector<1x256xf32> to vector<16x256xf32>
    %211 = arith.mulf %208, %210 : vector<16x256xf32>
    %c192_65 = arith.constant 192 : index
    %c0_66 = arith.constant 0 : index
    %212 = vector.load %arg3[%c192_65, %c0_66] : memref<432x256xf32, #tpu.memory_space<vmem>>, vector<16x256xf32>
    tpu.vector_store %arg3[%c192_65, %c0_66], %211 {strides = array<i32>} : memref<432x256xf32, #tpu.memory_space<vmem>>, vector<16x256xf32>,
    %213 = vector.extract_strided_slice %147 {offsets = [0, 128], sizes = [16, 256], strides = [1, 1]} : vector<16x512xf32> to vector<16x256xf32>
    %214 = vector.extract_strided_slice %0 {offsets = [13, 0], sizes = [1, 256], strides = [1, 1]} : vector<27x256xf32> to vector<1x256xf32>
    %215 = vector.broadcast %214 : vector<1x256xf32> to vector<16x256xf32>
    %216 = arith.mulf %213, %215 : vector<16x256xf32>
    %c208_67 = arith.constant 208 : index
    %c0_68 = arith.constant 0 : index
    %217 = vector.load %arg3[%c208_67, %c0_68] : memref<432x256xf32, #tpu.memory_space<vmem>>, vector<16x256xf32>
    tpu.vector_store %arg3[%c208_67, %c0_68], %216 {strides = array<i32>} : memref<432x256xf32, #tpu.memory_space<vmem>>, vector<16x256xf32>,
    %218 = vector.extract_strided_slice %147 {offsets = [0, 129], sizes = [16, 256], strides = [1, 1]} : vector<16x512xf32> to vector<16x256xf32>
    %219 = vector.extract_strided_slice %0 {offsets = [14, 0], sizes = [1, 256], strides = [1, 1]} : vector<27x256xf32> to vector<1x256xf32>
    %220 = vector.broadcast %219 : vector<1x256xf32> to vector<16x256xf32>
    %221 = arith.mulf %218, %220 : vector<16x256xf32>
    %c224_69 = arith.constant 224 : index
    %c0_70 = arith.constant 0 : index
    %222 = vector.load %arg3[%c224_69, %c0_70] : memref<432x256xf32, #tpu.memory_space<vmem>>, vector<16x256xf32>
    tpu.vector_store %arg3[%c224_69, %c0_70], %221 {strides = array<i32>} : memref<432x256xf32, #tpu.memory_space<vmem>>, vector<16x256xf32>,
    %223 = vector.extract_strided_slice %147 {offsets = [0, 135], sizes = [16, 256], strides = [1, 1]} : vector<16x512xf32> to vector<16x256xf32>
    %224 = vector.extract_strided_slice %0 {offsets = [15, 0], sizes = [1, 256], strides = [1, 1]} : vector<27x256xf32> to vector<1x256xf32>
    %225 = vector.broadcast %224 : vector<1x256xf32> to vector<16x256xf32>
    %226 = arith.mulf %223, %225 : vector<16x256xf32>
    %c240_71 = arith.constant 240 : index
    %c0_72 = arith.constant 0 : index
    %227 = vector.load %arg3[%c240_71, %c0_72] : memref<432x256xf32, #tpu.memory_space<vmem>>, vector<16x256xf32>
    tpu.vector_store %arg3[%c240_71, %c0_72], %226 {strides = array<i32>} : memref<432x256xf32, #tpu.memory_space<vmem>>, vector<16x256xf32>,
    %228 = vector.extract_strided_slice %147 {offsets = [0, 136], sizes = [16, 256], strides = [1, 1]} : vector<16x512xf32> to vector<16x256xf32>
    %229 = vector.extract_strided_slice %0 {offsets = [16, 0], sizes = [1, 256], strides = [1, 1]} : vector<27x256xf32> to vector<1x256xf32>
    %230 = vector.broadcast %229 : vector<1x256xf32> to vector<16x256xf32>
    %231 = arith.mulf %228, %230 : vector<16x256xf32>
    %c256_73 = arith.constant 256 : index
    %c0_74 = arith.constant 0 : index
    %232 = vector.load %arg3[%c256_73, %c0_74] : memref<432x256xf32, #tpu.memory_space<vmem>>, vector<16x256xf32>
    tpu.vector_store %arg3[%c256_73, %c0_74], %231 {strides = array<i32>} : memref<432x256xf32, #tpu.memory_space<vmem>>, vector<16x256xf32>,
    %233 = vector.extract_strided_slice %147 {offsets = [0, 137], sizes = [16, 256], strides = [1, 1]} : vector<16x512xf32> to vector<16x256xf32>
    %234 = vector.extract_strided_slice %0 {offsets = [17, 0], sizes = [1, 256], strides = [1, 1]} : vector<27x256xf32> to vector<1x256xf32>
    %235 = vector.broadcast %234 : vector<1x256xf32> to vector<16x256xf32>
    %236 = arith.mulf %233, %235 : vector<16x256xf32>
    %c272_75 = arith.constant 272 : index
    %c0_76 = arith.constant 0 : index
    %237 = vector.load %arg3[%c272_75, %c0_76] : memref<432x256xf32, #tpu.memory_space<vmem>>, vector<16x256xf32>
    tpu.vector_store %arg3[%c272_75, %c0_76], %236 {strides = array<i32>} : memref<432x256xf32, #tpu.memory_space<vmem>>, vector<16x256xf32>,
    %238 = vector.extract_strided_slice %147 {offsets = [0, 183], sizes = [16, 256], strides = [1, 1]} : vector<16x512xf32> to vector<16x256xf32>
    %239 = vector.extract_strided_slice %0 {offsets = [18, 0], sizes = [1, 256], strides = [1, 1]} : vector<27x256xf32> to vector<1x256xf32>
    %240 = vector.broadcast %239 : vector<1x256xf32> to vector<16x256xf32>
    %241 = arith.mulf %238, %240 : vector<16x256xf32>
    %c288_77 = arith.constant 288 : index
    %c0_78 = arith.constant 0 : index
    %242 = vector.load %arg3[%c288_77, %c0_78] : memref<432x256xf32, #tpu.memory_space<vmem>>, vector<16x256xf32>
    tpu.vector_store %arg3[%c288_77, %c0_78], %241 {strides = array<i32>} : memref<432x256xf32, #tpu.memory_space<vmem>>, vector<16x256xf32>,
    %243 = vector.extract_strided_slice %147 {offsets = [0, 184], sizes = [16, 256], strides = [1, 1]} : vector<16x512xf32> to vector<16x256xf32>
    %244 = vector.extract_strided_slice %0 {offsets = [19, 0], sizes = [1, 256], strides = [1, 1]} : vector<27x256xf32> to vector<1x256xf32>
    %245 = vector.broadcast %244 : vector<1x256xf32> to vector<16x256xf32>
    %246 = arith.mulf %243, %245 : vector<16x256xf32>
    %c304_79 = arith.constant 304 : index
    %c0_80 = arith.constant 0 : index
    %247 = vector.load %arg3[%c304_79, %c0_80] : memref<432x256xf32, #tpu.memory_space<vmem>>, vector<16x256xf32>
    tpu.vector_store %arg3[%c304_79, %c0_80], %246 {strides = array<i32>} : memref<432x256xf32, #tpu.memory_space<vmem>>, vector<16x256xf32>,
    %248 = vector.extract_strided_slice %147 {offsets = [0, 185], sizes = [16, 256], strides = [1, 1]} : vector<16x512xf32> to vector<16x256xf32>
    %249 = vector.extract_strided_slice %0 {offsets = [20, 0], sizes = [1, 256], strides = [1, 1]} : vector<27x256xf32> to vector<1x256xf32>
    %250 = vector.broadcast %249 : vector<1x256xf32> to vector<16x256xf32>
    %251 = arith.mulf %248, %250 : vector<16x256xf32>
    %c320_81 = arith.constant 320 : index
    %c0_82 = arith.constant 0 : index
    %252 = vector.load %arg3[%c320_81, %c0_82] : memref<432x256xf32, #tpu.memory_space<vmem>>, vector<16x256xf32>
    tpu.vector_store %arg3[%c320_81, %c0_82], %251 {strides = array<i32>} : memref<432x256xf32, #tpu.memory_space<vmem>>, vector<16x256xf32>,
    %253 = vector.extract_strided_slice %147 {offsets = [0, 191], sizes = [16, 256], strides = [1, 1]} : vector<16x512xf32> to vector<16x256xf32>
    %254 = vector.extract_strided_slice %0 {offsets = [21, 0], sizes = [1, 256], strides = [1, 1]} : vector<27x256xf32> to vector<1x256xf32>
    %255 = vector.broadcast %254 : vector<1x256xf32> to vector<16x256xf32>
    %256 = arith.mulf %253, %255 : vector<16x256xf32>
    %c336_83 = arith.constant 336 : index
    %c0_84 = arith.constant 0 : index
    %257 = vector.load %arg3[%c336_83, %c0_84] : memref<432x256xf32, #tpu.memory_space<vmem>>, vector<16x256xf32>
    tpu.vector_store %arg3[%c336_83, %c0_84], %256 {strides = array<i32>} : memref<432x256xf32, #tpu.memory_space<vmem>>, vector<16x256xf32>,
    %258 = vector.extract_strided_slice %147 {offsets = [0, 192], sizes = [16, 256], strides = [1, 1]} : vector<16x512xf32> to vector<16x256xf32>
    %259 = vector.extract_strided_slice %0 {offsets = [22, 0], sizes = [1, 256], strides = [1, 1]} : vector<27x256xf32> to vector<1x256xf32>
    %260 = vector.broadcast %259 : vector<1x256xf32> to vector<16x256xf32>
    %261 = arith.mulf %258, %260 : vector<16x256xf32>
    %c352_85 = arith.constant 352 : index
    %c0_86 = arith.constant 0 : index
    %262 = vector.load %arg3[%c352_85, %c0_86] : memref<432x256xf32, #tpu.memory_space<vmem>>, vector<16x256xf32>
    tpu.vector_store %arg3[%c352_85, %c0_86], %261 {strides = array<i32>} : memref<432x256xf32, #tpu.memory_space<vmem>>, vector<16x256xf32>,
    %263 = vector.extract_strided_slice %147 {offsets = [0, 193], sizes = [16, 256], strides = [1, 1]} : vector<16x512xf32> to vector<16x256xf32>
    %264 = vector.extract_strided_slice %0 {offsets = [23, 0], sizes = [1, 256], strides = [1, 1]} : vector<27x256xf32> to vector<1x256xf32>
    %265 = vector.broadcast %264 : vector<1x256xf32> to vector<16x256xf32>
    %266 = arith.mulf %263, %265 : vector<16x256xf32>
    %c368_87 = arith.constant 368 : index
    %c0_88 = arith.constant 0 : index
    %267 = vector.load %arg3[%c368_87, %c0_88] : memref<432x256xf32, #tpu.memory_space<vmem>>, vector<16x256xf32>
    tpu.vector_store %arg3[%c368_87, %c0_88], %266 {strides = array<i32>} : memref<432x256xf32, #tpu.memory_space<vmem>>, vector<16x256xf32>,
    %268 = vector.extract_strided_slice %147 {offsets = [0, 199], sizes = [16, 256], strides = [1, 1]} : vector<16x512xf32> to vector<16x256xf32>
    %269 = vector.extract_strided_slice %0 {offsets = [24, 0], sizes = [1, 256], strides = [1, 1]} : vector<27x256xf32> to vector<1x256xf32>
    %270 = vector.broadcast %269 : vector<1x256xf32> to vector<16x256xf32>
    %271 = arith.mulf %268, %270 : vector<16x256xf32>
    %c384_89 = arith.constant 384 : index
    %c0_90 = arith.constant 0 : index
    %272 = vector.load %arg3[%c384_89, %c0_90] : memref<432x256xf32, #tpu.memory_space<vmem>>, vector<16x256xf32>
    tpu.vector_store %arg3[%c384_89, %c0_90], %271 {strides = array<i32>} : memref<432x256xf32, #tpu.memory_space<vmem>>, vector<16x256xf32>,
    %273 = vector.extract_strided_slice %147 {offsets = [0, 200], sizes = [16, 256], strides = [1, 1]} : vector<16x512xf32> to vector<16x256xf32>
    %274 = vector.extract_strided_slice %0 {offsets = [25, 0], sizes = [1, 256], strides = [1, 1]} : vector<27x256xf32> to vector<1x256xf32>
    %275 = vector.broadcast %274 : vector<1x256xf32> to vector<16x256xf32>
    %276 = arith.mulf %273, %275 : vector<16x256xf32>
    %c400_91 = arith.constant 400 : index
    %c0_92 = arith.constant 0 : index
    %277 = vector.load %arg3[%c400_91, %c0_92] : memref<432x256xf32, #tpu.memory_space<vmem>>, vector<16x256xf32>
    tpu.vector_store %arg3[%c400_91, %c0_92], %276 {strides = array<i32>} : memref<432x256xf32, #tpu.memory_space<vmem>>, vector<16x256xf32>,
    %278 = vector.extract_strided_slice %147 {offsets = [0, 201], sizes = [16, 256], strides = [1, 1]} : vector<16x512xf32> to vector<16x256xf32>
    %279 = vector.extract_strided_slice %0 {offsets = [26, 0], sizes = [1, 256], strides = [1, 1]} : vector<27x256xf32> to vector<1x256xf32>
    %280 = vector.broadcast %279 : vector<1x256xf32> to vector<16x256xf32>
    %281 = arith.mulf %278, %280 : vector<16x256xf32>
    %c416_93 = arith.constant 416 : index
    %c0_94 = arith.constant 0 : index
    %282 = vector.load %arg3[%c416_93, %c0_94] : memref<432x256xf32, #tpu.memory_space<vmem>>, vector<16x256xf32>
    tpu.vector_store %arg3[%c416_93, %c0_94], %281 {strides = array<i32>} : memref<432x256xf32, #tpu.memory_space<vmem>>, vector<16x256xf32>,
    %cst_95 = arith.constant 1.000000e+00 : f32
    %283 = vector.broadcast %cst_95 : f32 to vector<1x256xf32>
    %c15_96 = arith.constant 15 : index
    %c0_97 = arith.constant 0 : index
    %284 = vector.load %arg3[%c15_96, %c0_97] : memref<432x256xf32, #tpu.memory_space<vmem>>, vector<1x256xf32>
    tpu.vector_store %arg3[%c15_96, %c0_97], %283 {strides = array<i32>} : memref<432x256xf32, #tpu.memory_space<vmem>>, vector<1x256xf32>,
    %c16_98 = arith.constant 16 : index
    %c0_99 = arith.constant 0 : index
    %285 = vector.load %arg1[%c16_98, %c0_99] : memref<104x512xf32, #tpu.memory_space<vmem>>, vector<16x432xf32>
    %c0_100 = arith.constant 0 : index
    %c0_101 = arith.constant 0 : index
    %286 = vector.load %arg3[%c0_100, %c0_101] : memref<432x256xf32, #tpu.memory_space<vmem>>, vector<432x256xf32>
    %cst_102 = arith.constant dense<0.000000e+00> : vector<16x256xf32>
    %287 = tpu.matmul %285, %286, %cst_102 {dimension_numbers = #tpu.dot_dimension_numbers<[1], [0], [0], [1], [0, 0, 1, 1], [], []>} : vector<16x432xf32>, vector<432x256xf32>, vector<16x256xf32> -> vector<16x256xf32>
    %cst_103 = arith.constant 0.000000e+00 : f32
    %288 = vector.broadcast %cst_103 : f32 to vector<16x128xf32>
    %cst_104 = arith.constant 0.000000e+00 : f32
    %289 = vector.broadcast %cst_104 : f32 to vector<16x128xf32>
    %290 = tpu.concatenate %288, %287, %289 in 1 : vector<16x128xf32>, vector<16x256xf32>, vector<16x128xf32> -> vector<16x512xf32>
    %291 = vector.extract_strided_slice %290 {offsets = [0, 55], sizes = [16, 256], strides = [1, 1]} : vector<16x512xf32> to vector<16x256xf32>
    %292 = vector.extract_strided_slice %0 {offsets = [0, 0], sizes = [1, 256], strides = [1, 1]} : vector<27x256xf32> to vector<1x256xf32>
    %293 = vector.broadcast %292 : vector<1x256xf32> to vector<16x256xf32>
    %294 = arith.mulf %291, %293 : vector<16x256xf32>
    %c0_105 = arith.constant 0 : index
    %c0_106 = arith.constant 0 : index
    %295 = vector.load %arg3[%c0_105, %c0_106] : memref<432x256xf32, #tpu.memory_space<vmem>>, vector<16x256xf32>
    tpu.vector_store %arg3[%c0_105, %c0_106], %294 {strides = array<i32>} : memref<432x256xf32, #tpu.memory_space<vmem>>, vector<16x256xf32>,
    %296 = vector.extract_strided_slice %290 {offsets = [0, 56], sizes = [16, 256], strides = [1, 1]} : vector<16x512xf32> to vector<16x256xf32>
    %297 = vector.extract_strided_slice %0 {offsets = [1, 0], sizes = [1, 256], strides = [1, 1]} : vector<27x256xf32> to vector<1x256xf32>
    %298 = vector.broadcast %297 : vector<1x256xf32> to vector<16x256xf32>
    %299 = arith.mulf %296, %298 : vector<16x256xf32>
    %c16_107 = arith.constant 16 : index
    %c0_108 = arith.constant 0 : index
    %300 = vector.load %arg3[%c16_107, %c0_108] : memref<432x256xf32, #tpu.memory_space<vmem>>, vector<16x256xf32>
    tpu.vector_store %arg3[%c16_107, %c0_108], %299 {strides = array<i32>} : memref<432x256xf32, #tpu.memory_space<vmem>>, vector<16x256xf32>,
    %301 = vector.extract_strided_slice %290 {offsets = [0, 57], sizes = [16, 256], strides = [1, 1]} : vector<16x512xf32> to vector<16x256xf32>
    %302 = vector.extract_strided_slice %0 {offsets = [2, 0], sizes = [1, 256], strides = [1, 1]} : vector<27x256xf32> to vector<1x256xf32>
    %303 = vector.broadcast %302 : vector<1x256xf32> to vector<16x256xf32>
    %304 = arith.mulf %301, %303 : vector<16x256xf32>
    %c32_109 = arith.constant 32 : index
    %c0_110 = arith.constant 0 : index
    %305 = vector.load %arg3[%c32_109, %c0_110] : memref<432x256xf32, #tpu.memory_space<vmem>>, vector<16x256xf32>
    tpu.vector_store %arg3[%c32_109, %c0_110], %304 {strides = array<i32>} : memref<432x256xf32, #tpu.memory_space<vmem>>, vector<16x256xf32>,
    %306 = vector.extract_strided_slice %290 {offsets = [0, 63], sizes = [16, 256], strides = [1, 1]} : vector<16x512xf32> to vector<16x256xf32>
    %307 = vector.extract_strided_slice %0 {offsets = [3, 0], sizes = [1, 256], strides = [1, 1]} : vector<27x256xf32> to vector<1x256xf32>
    %308 = vector.broadcast %307 : vector<1x256xf32> to vector<16x256xf32>
    %309 = arith.mulf %306, %308 : vector<16x256xf32>
    %c48_111 = arith.constant 48 : index
    %c0_112 = arith.constant 0 : index
    %310 = vector.load %arg3[%c48_111, %c0_112] : memref<432x256xf32, #tpu.memory_space<vmem>>, vector<16x256xf32>
    tpu.vector_store %arg3[%c48_111, %c0_112], %309 {strides = array<i32>} : memref<432x256xf32, #tpu.memory_space<vmem>>, vector<16x256xf32>,
    %311 = vector.extract_strided_slice %290 {offsets = [0, 64], sizes = [16, 256], strides = [1, 1]} : vector<16x512xf32> to vector<16x256xf32>
    %312 = vector.extract_strided_slice %0 {offsets = [4, 0], sizes = [1, 256], strides = [1, 1]} : vector<27x256xf32> to vector<1x256xf32>
    %313 = vector.broadcast %312 : vector<1x256xf32> to vector<16x256xf32>
    %314 = arith.mulf %311, %313 : vector<16x256xf32>
    %c64_113 = arith.constant 64 : index
    %c0_114 = arith.constant 0 : index
    %315 = vector.load %arg3[%c64_113, %c0_114] : memref<432x256xf32, #tpu.memory_space<vmem>>, vector<16x256xf32>
    tpu.vector_store %arg3[%c64_113, %c0_114], %314 {strides = array<i32>} : memref<432x256xf32, #tpu.memory_space<vmem>>, vector<16x256xf32>,
    %316 = vector.extract_strided_slice %290 {offsets = [0, 65], sizes = [16, 256], strides = [1, 1]} : vector<16x512xf32> to vector<16x256xf32>
    %317 = vector.extract_strided_slice %0 {offsets = [5, 0], sizes = [1, 256], strides = [1, 1]} : vector<27x256xf32> to vector<1x256xf32>
    %318 = vector.broadcast %317 : vector<1x256xf32> to vector<16x256xf32>
    %319 = arith.mulf %316, %318 : vector<16x256xf32>
    %c80_115 = arith.constant 80 : index
    %c0_116 = arith.constant 0 : index
    %320 = vector.load %arg3[%c80_115, %c0_116] : memref<432x256xf32, #tpu.memory_space<vmem>>, vector<16x256xf32>
    tpu.vector_store %arg3[%c80_115, %c0_116], %319 {strides = array<i32>} : memref<432x256xf32, #tpu.memory_space<vmem>>, vector<16x256xf32>,
    %321 = vector.extract_strided_slice %290 {offsets = [0, 71], sizes = [16, 256], strides = [1, 1]} : vector<16x512xf32> to vector<16x256xf32>
    %322 = vector.extract_strided_slice %0 {offsets = [6, 0], sizes = [1, 256], strides = [1, 1]} : vector<27x256xf32> to vector<1x256xf32>
    %323 = vector.broadcast %322 : vector<1x256xf32> to vector<16x256xf32>
    %324 = arith.mulf %321, %323 : vector<16x256xf32>
    %c96_117 = arith.constant 96 : index
    %c0_118 = arith.constant 0 : index
    %325 = vector.load %arg3[%c96_117, %c0_118] : memref<432x256xf32, #tpu.memory_space<vmem>>, vector<16x256xf32>
    tpu.vector_store %arg3[%c96_117, %c0_118], %324 {strides = array<i32>} : memref<432x256xf32, #tpu.memory_space<vmem>>, vector<16x256xf32>,
    %326 = vector.extract_strided_slice %290 {offsets = [0, 72], sizes = [16, 256], strides = [1, 1]} : vector<16x512xf32> to vector<16x256xf32>
    %327 = vector.extract_strided_slice %0 {offsets = [7, 0], sizes = [1, 256], strides = [1, 1]} : vector<27x256xf32> to vector<1x256xf32>
    %328 = vector.broadcast %327 : vector<1x256xf32> to vector<16x256xf32>
    %329 = arith.mulf %326, %328 : vector<16x256xf32>
    %c112_119 = arith.constant 112 : index
    %c0_120 = arith.constant 0 : index
    %330 = vector.load %arg3[%c112_119, %c0_120] : memref<432x256xf32, #tpu.memory_space<vmem>>, vector<16x256xf32>
    tpu.vector_store %arg3[%c112_119, %c0_120], %329 {strides = array<i32>} : memref<432x256xf32, #tpu.memory_space<vmem>>, vector<16x256xf32>,
    %331 = vector.extract_strided_slice %290 {offsets = [0, 73], sizes = [16, 256], strides = [1, 1]} : vector<16x512xf32> to vector<16x256xf32>
    %332 = vector.extract_strided_slice %0 {offsets = [8, 0], sizes = [1, 256], strides = [1, 1]} : vector<27x256xf32> to vector<1x256xf32>
    %333 = vector.broadcast %332 : vector<1x256xf32> to vector<16x256xf32>
    %334 = arith.mulf %331, %333 : vector<16x256xf32>
    %c128_121 = arith.constant 128 : index
    %c0_122 = arith.constant 0 : index
    %335 = vector.load %arg3[%c128_121, %c0_122] : memref<432x256xf32, #tpu.memory_space<vmem>>, vector<16x256xf32>
    tpu.vector_store %arg3[%c128_121, %c0_122], %334 {strides = array<i32>} : memref<432x256xf32, #tpu.memory_space<vmem>>, vector<16x256xf32>,
    %336 = vector.extract_strided_slice %290 {offsets = [0, 119], sizes = [16, 256], strides = [1, 1]} : vector<16x512xf32> to vector<16x256xf32>
    %337 = vector.extract_strided_slice %0 {offsets = [9, 0], sizes = [1, 256], strides = [1, 1]} : vector<27x256xf32> to vector<1x256xf32>
    %338 = vector.broadcast %337 : vector<1x256xf32> to vector<16x256xf32>
    %339 = arith.mulf %336, %338 : vector<16x256xf32>
    %c144_123 = arith.constant 144 : index
    %c0_124 = arith.constant 0 : index
    %340 = vector.load %arg3[%c144_123, %c0_124] : memref<432x256xf32, #tpu.memory_space<vmem>>, vector<16x256xf32>
    tpu.vector_store %arg3[%c144_123, %c0_124], %339 {strides = array<i32>} : memref<432x256xf32, #tpu.memory_space<vmem>>, vector<16x256xf32>,
    %341 = vector.extract_strided_slice %290 {offsets = [0, 120], sizes = [16, 256], strides = [1, 1]} : vector<16x512xf32> to vector<16x256xf32>
    %342 = vector.extract_strided_slice %0 {offsets = [10, 0], sizes = [1, 256], strides = [1, 1]} : vector<27x256xf32> to vector<1x256xf32>
    %343 = vector.broadcast %342 : vector<1x256xf32> to vector<16x256xf32>
    %344 = arith.mulf %341, %343 : vector<16x256xf32>
    %c160_125 = arith.constant 160 : index
    %c0_126 = arith.constant 0 : index
    %345 = vector.load %arg3[%c160_125, %c0_126] : memref<432x256xf32, #tpu.memory_space<vmem>>, vector<16x256xf32>
    tpu.vector_store %arg3[%c160_125, %c0_126], %344 {strides = array<i32>} : memref<432x256xf32, #tpu.memory_space<vmem>>, vector<16x256xf32>,
    %346 = vector.extract_strided_slice %290 {offsets = [0, 121], sizes = [16, 256], strides = [1, 1]} : vector<16x512xf32> to vector<16x256xf32>
    %347 = vector.extract_strided_slice %0 {offsets = [11, 0], sizes = [1, 256], strides = [1, 1]} : vector<27x256xf32> to vector<1x256xf32>
    %348 = vector.broadcast %347 : vector<1x256xf32> to vector<16x256xf32>
    %349 = arith.mulf %346, %348 : vector<16x256xf32>
    %c176_127 = arith.constant 176 : index
    %c0_128 = arith.constant 0 : index
    %350 = vector.load %arg3[%c176_127, %c0_128] : memref<432x256xf32, #tpu.memory_space<vmem>>, vector<16x256xf32>
    tpu.vector_store %arg3[%c176_127, %c0_128], %349 {strides = array<i32>} : memref<432x256xf32, #tpu.memory_space<vmem>>, vector<16x256xf32>,
    %351 = vector.extract_strided_slice %290 {offsets = [0, 127], sizes = [16, 256], strides = [1, 1]} : vector<16x512xf32> to vector<16x256xf32>
    %352 = vector.extract_strided_slice %0 {offsets = [12, 0], sizes = [1, 256], strides = [1, 1]} : vector<27x256xf32> to vector<1x256xf32>
    %353 = vector.broadcast %352 : vector<1x256xf32> to vector<16x256xf32>
    %354 = arith.mulf %351, %353 : vector<16x256xf32>
    %c192_129 = arith.constant 192 : index
    %c0_130 = arith.constant 0 : index
    %355 = vector.load %arg3[%c192_129, %c0_130] : memref<432x256xf32, #tpu.memory_space<vmem>>, vector<16x256xf32>
    tpu.vector_store %arg3[%c192_129, %c0_130], %354 {strides = array<i32>} : memref<432x256xf32, #tpu.memory_space<vmem>>, vector<16x256xf32>,
    %356 = vector.extract_strided_slice %290 {offsets = [0, 128], sizes = [16, 256], strides = [1, 1]} : vector<16x512xf32> to vector<16x256xf32>
    %357 = vector.extract_strided_slice %0 {offsets = [13, 0], sizes = [1, 256], strides = [1, 1]} : vector<27x256xf32> to vector<1x256xf32>
    %358 = vector.broadcast %357 : vector<1x256xf32> to vector<16x256xf32>
    %359 = arith.mulf %356, %358 : vector<16x256xf32>
    %c208_131 = arith.constant 208 : index
    %c0_132 = arith.constant 0 : index
    %360 = vector.load %arg3[%c208_131, %c0_132] : memref<432x256xf32, #tpu.memory_space<vmem>>, vector<16x256xf32>
    tpu.vector_store %arg3[%c208_131, %c0_132], %359 {strides = array<i32>} : memref<432x256xf32, #tpu.memory_space<vmem>>, vector<16x256xf32>,
    %361 = vector.extract_strided_slice %290 {offsets = [0, 129], sizes = [16, 256], strides = [1, 1]} : vector<16x512xf32> to vector<16x256xf32>
    %362 = vector.extract_strided_slice %0 {offsets = [14, 0], sizes = [1, 256], strides = [1, 1]} : vector<27x256xf32> to vector<1x256xf32>
    %363 = vector.broadcast %362 : vector<1x256xf32> to vector<16x256xf32>
    %364 = arith.mulf %361, %363 : vector<16x256xf32>
    %c224_133 = arith.constant 224 : index
    %c0_134 = arith.constant 0 : index
    %365 = vector.load %arg3[%c224_133, %c0_134] : memref<432x256xf32, #tpu.memory_space<vmem>>, vector<16x256xf32>
    tpu.vector_store %arg3[%c224_133, %c0_134], %364 {strides = array<i32>} : memref<432x256xf32, #tpu.memory_space<vmem>>, vector<16x256xf32>,
    %366 = vector.extract_strided_slice %290 {offsets = [0, 135], sizes = [16, 256], strides = [1, 1]} : vector<16x512xf32> to vector<16x256xf32>
    %367 = vector.extract_strided_slice %0 {offsets = [15, 0], sizes = [1, 256], strides = [1, 1]} : vector<27x256xf32> to vector<1x256xf32>
    %368 = vector.broadcast %367 : vector<1x256xf32> to vector<16x256xf32>
    %369 = arith.mulf %366, %368 : vector<16x256xf32>
    %c240_135 = arith.constant 240 : index
    %c0_136 = arith.constant 0 : index
    %370 = vector.load %arg3[%c240_135, %c0_136] : memref<432x256xf32, #tpu.memory_space<vmem>>, vector<16x256xf32>
    tpu.vector_store %arg3[%c240_135, %c0_136], %369 {strides = array<i32>} : memref<432x256xf32, #tpu.memory_space<vmem>>, vector<16x256xf32>,
    %371 = vector.extract_strided_slice %290 {offsets = [0, 136], sizes = [16, 256], strides = [1, 1]} : vector<16x512xf32> to vector<16x256xf32>
    %372 = vector.extract_strided_slice %0 {offsets = [16, 0], sizes = [1, 256], strides = [1, 1]} : vector<27x256xf32> to vector<1x256xf32>
    %373 = vector.broadcast %372 : vector<1x256xf32> to vector<16x256xf32>
    %374 = arith.mulf %371, %373 : vector<16x256xf32>
    %c256_137 = arith.constant 256 : index
    %c0_138 = arith.constant 0 : index
    %375 = vector.load %arg3[%c256_137, %c0_138] : memref<432x256xf32, #tpu.memory_space<vmem>>, vector<16x256xf32>
    tpu.vector_store %arg3[%c256_137, %c0_138], %374 {strides = array<i32>} : memref<432x256xf32, #tpu.memory_space<vmem>>, vector<16x256xf32>,
    %376 = vector.extract_strided_slice %290 {offsets = [0, 137], sizes = [16, 256], strides = [1, 1]} : vector<16x512xf32> to vector<16x256xf32>
    %377 = vector.extract_strided_slice %0 {offsets = [17, 0], sizes = [1, 256], strides = [1, 1]} : vector<27x256xf32> to vector<1x256xf32>
    %378 = vector.broadcast %377 : vector<1x256xf32> to vector<16x256xf32>
    %379 = arith.mulf %376, %378 : vector<16x256xf32>
    %c272_139 = arith.constant 272 : index
    %c0_140 = arith.constant 0 : index
    %380 = vector.load %arg3[%c272_139, %c0_140] : memref<432x256xf32, #tpu.memory_space<vmem>>, vector<16x256xf32>
    tpu.vector_store %arg3[%c272_139, %c0_140], %379 {strides = array<i32>} : memref<432x256xf32, #tpu.memory_space<vmem>>, vector<16x256xf32>,
    %381 = vector.extract_strided_slice %290 {offsets = [0, 183], sizes = [16, 256], strides = [1, 1]} : vector<16x512xf32> to vector<16x256xf32>
    %382 = vector.extract_strided_slice %0 {offsets = [18, 0], sizes = [1, 256], strides = [1, 1]} : vector<27x256xf32> to vector<1x256xf32>
    %383 = vector.broadcast %382 : vector<1x256xf32> to vector<16x256xf32>
    %384 = arith.mulf %381, %383 : vector<16x256xf32>
    %c288_141 = arith.constant 288 : index
    %c0_142 = arith.constant 0 : index
    %385 = vector.load %arg3[%c288_141, %c0_142] : memref<432x256xf32, #tpu.memory_space<vmem>>, vector<16x256xf32>
    tpu.vector_store %arg3[%c288_141, %c0_142], %384 {strides = array<i32>} : memref<432x256xf32, #tpu.memory_space<vmem>>, vector<16x256xf32>,
    %386 = vector.extract_strided_slice %290 {offsets = [0, 184], sizes = [16, 256], strides = [1, 1]} : vector<16x512xf32> to vector<16x256xf32>
    %387 = vector.extract_strided_slice %0 {offsets = [19, 0], sizes = [1, 256], strides = [1, 1]} : vector<27x256xf32> to vector<1x256xf32>
    %388 = vector.broadcast %387 : vector<1x256xf32> to vector<16x256xf32>
    %389 = arith.mulf %386, %388 : vector<16x256xf32>
    %c304_143 = arith.constant 304 : index
    %c0_144 = arith.constant 0 : index
    %390 = vector.load %arg3[%c304_143, %c0_144] : memref<432x256xf32, #tpu.memory_space<vmem>>, vector<16x256xf32>
    tpu.vector_store %arg3[%c304_143, %c0_144], %389 {strides = array<i32>} : memref<432x256xf32, #tpu.memory_space<vmem>>, vector<16x256xf32>,
    %391 = vector.extract_strided_slice %290 {offsets = [0, 185], sizes = [16, 256], strides = [1, 1]} : vector<16x512xf32> to vector<16x256xf32>
    %392 = vector.extract_strided_slice %0 {offsets = [20, 0], sizes = [1, 256], strides = [1, 1]} : vector<27x256xf32> to vector<1x256xf32>
    %393 = vector.broadcast %392 : vector<1x256xf32> to vector<16x256xf32>
    %394 = arith.mulf %391, %393 : vector<16x256xf32>
    %c320_145 = arith.constant 320 : index
    %c0_146 = arith.constant 0 : index
    %395 = vector.load %arg3[%c320_145, %c0_146] : memref<432x256xf32, #tpu.memory_space<vmem>>, vector<16x256xf32>
    tpu.vector_store %arg3[%c320_145, %c0_146], %394 {strides = array<i32>} : memref<432x256xf32, #tpu.memory_space<vmem>>, vector<16x256xf32>,
    %396 = vector.extract_strided_slice %290 {offsets = [0, 191], sizes = [16, 256], strides = [1, 1]} : vector<16x512xf32> to vector<16x256xf32>
    %397 = vector.extract_strided_slice %0 {offsets = [21, 0], sizes = [1, 256], strides = [1, 1]} : vector<27x256xf32> to vector<1x256xf32>
    %398 = vector.broadcast %397 : vector<1x256xf32> to vector<16x256xf32>
    %399 = arith.mulf %396, %398 : vector<16x256xf32>
    %c336_147 = arith.constant 336 : index
    %c0_148 = arith.constant 0 : index
    %400 = vector.load %arg3[%c336_147, %c0_148] : memref<432x256xf32, #tpu.memory_space<vmem>>, vector<16x256xf32>
    tpu.vector_store %arg3[%c336_147, %c0_148], %399 {strides = array<i32>} : memref<432x256xf32, #tpu.memory_space<vmem>>, vector<16x256xf32>,
    %401 = vector.extract_strided_slice %290 {offsets = [0, 192], sizes = [16, 256], strides = [1, 1]} : vector<16x512xf32> to vector<16x256xf32>
    %402 = vector.extract_strided_slice %0 {offsets = [22, 0], sizes = [1, 256], strides = [1, 1]} : vector<27x256xf32> to vector<1x256xf32>
    %403 = vector.broadcast %402 : vector<1x256xf32> to vector<16x256xf32>
    %404 = arith.mulf %401, %403 : vector<16x256xf32>
    %c352_149 = arith.constant 352 : index
    %c0_150 = arith.constant 0 : index
    %405 = vector.load %arg3[%c352_149, %c0_150] : memref<432x256xf32, #tpu.memory_space<vmem>>, vector<16x256xf32>
    tpu.vector_store %arg3[%c352_149, %c0_150], %404 {strides = array<i32>} : memref<432x256xf32, #tpu.memory_space<vmem>>, vector<16x256xf32>,
    %406 = vector.extract_strided_slice %290 {offsets = [0, 193], sizes = [16, 256], strides = [1, 1]} : vector<16x512xf32> to vector<16x256xf32>
    %407 = vector.extract_strided_slice %0 {offsets = [23, 0], sizes = [1, 256], strides = [1, 1]} : vector<27x256xf32> to vector<1x256xf32>
    %408 = vector.broadcast %407 : vector<1x256xf32> to vector<16x256xf32>
    %409 = arith.mulf %406, %408 : vector<16x256xf32>
    %c368_151 = arith.constant 368 : index
    %c0_152 = arith.constant 0 : index
    %410 = vector.load %arg3[%c368_151, %c0_152] : memref<432x256xf32, #tpu.memory_space<vmem>>, vector<16x256xf32>
    tpu.vector_store %arg3[%c368_151, %c0_152], %409 {strides = array<i32>} : memref<432x256xf32, #tpu.memory_space<vmem>>, vector<16x256xf32>,
    %411 = vector.extract_strided_slice %290 {offsets = [0, 199], sizes = [16, 256], strides = [1, 1]} : vector<16x512xf32> to vector<16x256xf32>
    %412 = vector.extract_strided_slice %0 {offsets = [24, 0], sizes = [1, 256], strides = [1, 1]} : vector<27x256xf32> to vector<1x256xf32>
    %413 = vector.broadcast %412 : vector<1x256xf32> to vector<16x256xf32>
    %414 = arith.mulf %411, %413 : vector<16x256xf32>
    %c384_153 = arith.constant 384 : index
    %c0_154 = arith.constant 0 : index
    %415 = vector.load %arg3[%c384_153, %c0_154] : memref<432x256xf32, #tpu.memory_space<vmem>>, vector<16x256xf32>
    tpu.vector_store %arg3[%c384_153, %c0_154], %414 {strides = array<i32>} : memref<432x256xf32, #tpu.memory_space<vmem>>, vector<16x256xf32>,
    %416 = vector.extract_strided_slice %290 {offsets = [0, 200], sizes = [16, 256], strides = [1, 1]} : vector<16x512xf32> to vector<16x256xf32>
    %417 = vector.extract_strided_slice %0 {offsets = [25, 0], sizes = [1, 256], strides = [1, 1]} : vector<27x256xf32> to vector<1x256xf32>
    %418 = vector.broadcast %417 : vector<1x256xf32> to vector<16x256xf32>
    %419 = arith.mulf %416, %418 : vector<16x256xf32>
    %c400_155 = arith.constant 400 : index
    %c0_156 = arith.constant 0 : index
    %420 = vector.load %arg3[%c400_155, %c0_156] : memref<432x256xf32, #tpu.memory_space<vmem>>, vector<16x256xf32>
    tpu.vector_store %arg3[%c400_155, %c0_156], %419 {strides = array<i32>} : memref<432x256xf32, #tpu.memory_space<vmem>>, vector<16x256xf32>,
    %421 = vector.extract_strided_slice %290 {offsets = [0, 201], sizes = [16, 256], strides = [1, 1]} : vector<16x512xf32> to vector<16x256xf32>
    %422 = vector.extract_strided_slice %0 {offsets = [26, 0], sizes = [1, 256], strides = [1, 1]} : vector<27x256xf32> to vector<1x256xf32>
    %423 = vector.broadcast %422 : vector<1x256xf32> to vector<16x256xf32>
    %424 = arith.mulf %421, %423 : vector<16x256xf32>
    %c416_157 = arith.constant 416 : index
    %c0_158 = arith.constant 0 : index
    %425 = vector.load %arg3[%c416_157, %c0_158] : memref<432x256xf32, #tpu.memory_space<vmem>>, vector<16x256xf32>
    tpu.vector_store %arg3[%c416_157, %c0_158], %424 {strides = array<i32>} : memref<432x256xf32, #tpu.memory_space<vmem>>, vector<16x256xf32>,
    %c32_159 = arith.constant 32 : index
    %c0_160 = arith.constant 0 : index
    %426 = vector.load %arg1[%c32_159, %c0_160] : memref<104x512xf32, #tpu.memory_space<vmem>>, vector<1x432xf32>
    %c0_161 = arith.constant 0 : index
    %c0_162 = arith.constant 0 : index
    %427 = vector.load %arg3[%c0_161, %c0_162] : memref<432x256xf32, #tpu.memory_space<vmem>>, vector<432x256xf32>
    %cst_163 = arith.constant dense<0.000000e+00> : vector<1x256xf32>
    %428 = tpu.matmul %426, %427, %cst_163 {dimension_numbers = #tpu.dot_dimension_numbers<[1], [0], [0], [1], [0, 0, 1, 1], [], []>} : vector<1x432xf32>, vector<432x256xf32>, vector<1x256xf32> -> vector<1x256xf32>
    %c40 = arith.constant 40 : index
    %c0_164 = arith.constant 0 : index
    %429 = vector.load %arg1[%c40, %c0_164] : memref<104x512xf32, #tpu.memory_space<vmem>>, vector<1x256xf32>
    %430 = arith.mulf %428, %429 : vector<1x256xf32>
    %431 = vector.extract_strided_slice %430 {offsets = [0, 0], sizes = [1, 64], strides = [1, 1]} : vector<1x256xf32> to vector<1x64xf32>
    %432 = vector.extract_strided_slice %430 {offsets = [0, 64], sizes = [1, 64], strides = [1, 1]} : vector<1x256xf32> to vector<1x64xf32>
    %433 = arith.addf %431, %432 : vector<1x64xf32>
    %434 = vector.extract_strided_slice %430 {offsets = [0, 128], sizes = [1, 64], strides = [1, 1]} : vector<1x256xf32> to vector<1x64xf32>
    %435 = arith.addf %433, %434 : vector<1x64xf32>
    %436 = vector.extract_strided_slice %430 {offsets = [0, 192], sizes = [1, 64], strides = [1, 1]} : vector<1x256xf32> to vector<1x64xf32>
    %437 = arith.addf %435, %436 : vector<1x64xf32>
    %c42 = arith.constant 42 : index
    %c0_165 = arith.constant 0 : index
    %438 = vector.load %arg1[%c42, %c0_165] : memref<104x512xf32, #tpu.memory_space<vmem>>, vector<1x64xf32>
    %439 = arith.addf %437, %438 : vector<1x64xf32>
    %cst_166 = arith.constant 0.000000e+00 : f32
    %440 = vector.broadcast %cst_166 : f32 to vector<1x64xf32>
    %cst_167 = arith.constant 0.000000e+00 : f32
    %441 = vector.broadcast %cst_167 : f32 to vector<1x64xf32>
    %442 = tpu.concatenate %440, %439, %441 in 1 : vector<1x64xf32>, vector<1x64xf32>, vector<1x64xf32> -> vector<1x192xf32>
    %cst_168 = arith.constant 0.000000e+00 : f32
    %443 = vector.broadcast %cst_168 : f32 to vector<2x64xf32>
    %c80_169 = arith.constant 80 : index
    %c0_170 = arith.constant 0 : index
    %444 = vector.load %arg1[%c80_169, %c0_170] : memref<104x512xf32, #tpu.memory_space<vmem>>, vector<2x64xf32>
    %445 = vector.extract_strided_slice %442 {offsets = [0, 55], sizes = [1, 64], strides = [1, 1]} : vector<1x192xf32> to vector<1x64xf32>
    %446 = vector.broadcast %445 : vector<1x64xf32> to vector<2x64xf32>
    %447 = arith.mulf %444, %446 : vector<2x64xf32>
    %448 = arith.addf %443, %447 : vector<2x64xf32>
    %c82 = arith.constant 82 : index
    %c0_171 = arith.constant 0 : index
    %449 = vector.load %arg1[%c82, %c0_171] : memref<104x512xf32, #tpu.memory_space<vmem>>, vector<2x64xf32>
    %450 = vector.extract_strided_slice %442 {offsets = [0, 56], sizes = [1, 64], strides = [1, 1]} : vector<1x192xf32> to vector<1x64xf32>
    %451 = vector.broadcast %450 : vector<1x64xf32> to vector<2x64xf32>
    %452 = arith.mulf %449, %451 : vector<2x64xf32>
    %453 = arith.addf %448, %452 : vector<2x64xf32>
    %c84 = arith.constant 84 : index
    %c0_172 = arith.constant 0 : index
    %454 = vector.load %arg1[%c84, %c0_172] : memref<104x512xf32, #tpu.memory_space<vmem>>, vector<2x64xf32>
    %455 = vector.extract_strided_slice %442 {offsets = [0, 57], sizes = [1, 64], strides = [1, 1]} : vector<1x192xf32> to vector<1x64xf32>
    %456 = vector.broadcast %455 : vector<1x64xf32> to vector<2x64xf32>
    %457 = arith.mulf %454, %456 : vector<2x64xf32>
    %458 = arith.addf %453, %457 : vector<2x64xf32>
    %c86 = arith.constant 86 : index
    %c0_173 = arith.constant 0 : index
    %459 = vector.load %arg1[%c86, %c0_173] : memref<104x512xf32, #tpu.memory_space<vmem>>, vector<2x64xf32>
    %460 = vector.extract_strided_slice %442 {offsets = [0, 63], sizes = [1, 64], strides = [1, 1]} : vector<1x192xf32> to vector<1x64xf32>
    %461 = vector.broadcast %460 : vector<1x64xf32> to vector<2x64xf32>
    %462 = arith.mulf %459, %461 : vector<2x64xf32>
    %463 = arith.addf %458, %462 : vector<2x64xf32>
    %c88 = arith.constant 88 : index
    %c0_174 = arith.constant 0 : index
    %464 = vector.load %arg1[%c88, %c0_174] : memref<104x512xf32, #tpu.memory_space<vmem>>, vector<2x64xf32>
    %465 = vector.extract_strided_slice %442 {offsets = [0, 64], sizes = [1, 64], strides = [1, 1]} : vector<1x192xf32> to vector<1x64xf32>
    %466 = vector.broadcast %465 : vector<1x64xf32> to vector<2x64xf32>
    %467 = arith.mulf %464, %466 : vector<2x64xf32>
    %468 = arith.addf %463, %467 : vector<2x64xf32>
    %c90 = arith.constant 90 : index
    %c0_175 = arith.constant 0 : index
    %469 = vector.load %arg1[%c90, %c0_175] : memref<104x512xf32, #tpu.memory_space<vmem>>, vector<2x64xf32>
    %470 = vector.extract_strided_slice %442 {offsets = [0, 65], sizes = [1, 64], strides = [1, 1]} : vector<1x192xf32> to vector<1x64xf32>
    %471 = vector.broadcast %470 : vector<1x64xf32> to vector<2x64xf32>
    %472 = arith.mulf %469, %471 : vector<2x64xf32>
    %473 = arith.addf %468, %472 : vector<2x64xf32>
    %c92 = arith.constant 92 : index
    %c0_176 = arith.constant 0 : index
    %474 = vector.load %arg1[%c92, %c0_176] : memref<104x512xf32, #tpu.memory_space<vmem>>, vector<2x64xf32>
    %475 = vector.extract_strided_slice %442 {offsets = [0, 71], sizes = [1, 64], strides = [1, 1]} : vector<1x192xf32> to vector<1x64xf32>
    %476 = vector.broadcast %475 : vector<1x64xf32> to vector<2x64xf32>
    %477 = arith.mulf %474, %476 : vector<2x64xf32>
    %478 = arith.addf %473, %477 : vector<2x64xf32>
    %c94 = arith.constant 94 : index
    %c0_177 = arith.constant 0 : index
    %479 = vector.load %arg1[%c94, %c0_177] : memref<104x512xf32, #tpu.memory_space<vmem>>, vector<2x64xf32>
    %480 = vector.extract_strided_slice %442 {offsets = [0, 72], sizes = [1, 64], strides = [1, 1]} : vector<1x192xf32> to vector<1x64xf32>
    %481 = vector.broadcast %480 : vector<1x64xf32> to vector<2x64xf32>
    %482 = arith.mulf %479, %481 : vector<2x64xf32>
    %483 = arith.addf %478, %482 : vector<2x64xf32>
    %c96_178 = arith.constant 96 : index
    %c0_179 = arith.constant 0 : index
    %484 = vector.load %arg1[%c96_178, %c0_179] : memref<104x512xf32, #tpu.memory_space<vmem>>, vector<2x64xf32>
    %485 = vector.extract_strided_slice %442 {offsets = [0, 73], sizes = [1, 64], strides = [1, 1]} : vector<1x192xf32> to vector<1x64xf32>
    %486 = vector.broadcast %485 : vector<1x64xf32> to vector<2x64xf32>
    %487 = arith.mulf %484, %486 : vector<2x64xf32>
    %488 = arith.addf %483, %487 : vector<2x64xf32>
    %c44 = arith.constant 44 : index
    %c0_180 = arith.constant 0 : index
    %489 = vector.load %arg1[%c44, %c0_180] : memref<104x512xf32, #tpu.memory_space<vmem>>, vector<2x64xf32>
    %490 = arith.addf %488, %489 : vector<2x64xf32>
    %491 = arith.negf %490 : vector<2x64xf32>
    %492 = math.exp %491 : vector<2x64xf32>
    %cst_181 = arith.constant 1.000000e+00 : f32
    %493 = vector.broadcast %cst_181 : f32 to vector<2x64xf32>
    %494 = arith.addf %493, %492 : vector<2x64xf32>
    %495 = arith.divf %493, %494 : vector<2x64xf32>
    %c41 = arith.constant 41 : index
    %c0_182 = arith.constant 0 : index
    %496 = vector.load %arg1[%c41, %c0_182] : memref<104x512xf32, #tpu.memory_space<vmem>>, vector<1x64xf32>
    %497 = arith.mulf %439, %496 : vector<1x64xf32>
    %cst_183 = arith.constant dense<0.000000e+00> : vector<1xf32>
    %498 = vector.multi_reduction <add>, %497, %cst_183 [1] : vector<1x64xf32> to vector<1xf32>
    %499 = vector.shape_cast %498 : vector<1xf32> to vector<1x1xf32>
    %c43 = arith.constant 43 : index
    %c0_184 = arith.constant 0 : index
    %500 = vector.load %arg1[%c43, %c0_184] : memref<104x512xf32, #tpu.memory_space<vmem>>, vector<1x128xf32>
    %501 = vector.broadcast %499 : vector<1x1xf32> to vector<1x128xf32>
    %502 = arith.addf %501, %500 : vector<1x128xf32>
    %503 = vector.extract_strided_slice %495 {offsets = [0, 0], sizes = [1, 64], strides = [1, 1]} : vector<2x64xf32> to vector<1x64xf32>
    %504 = vector.extract_strided_slice %495 {offsets = [1, 0], sizes = [1, 64], strides = [1, 1]} : vector<2x64xf32> to vector<1x64xf32>
    %505 = tpu.concatenate %503, %504 in 1 : vector<1x64xf32>, vector<1x64xf32> -> vector<1x128xf32>
    %cst_185 = arith.constant 0.000000e+00 : f32
    %506 = vector.broadcast %cst_185 : f32 to vector<6x128xf32>
    %507 = tpu.concatenate %505, %502, %506 in 0 : vector<1x128xf32>, vector<1x128xf32>, vector<6x128xf32> -> vector<8x128xf32>
    %c0_186 = arith.constant 0 : index
    %c0_187 = arith.constant 0 : index
    %508 = vector.load %arg2[%c0_186, %c0_187] : memref<8x128xf32, #tpu.memory_space<vmem>>, vector<8x128xf32>
    tpu.vector_store %arg2[%c0_186, %c0_187], %507 {strides = array<i32>} : memref<8x128xf32, #tpu.memory_space<vmem>>, vector<8x128xf32>,
    return
  }
}

</mosaic_0001>

<llo_original>
// kernel: actor_critic_forward.1
$region0: #{actor_critic_forward.1}
  #allocation0 [shape = 'u32[]', space=smem, size = 0x4, offset = 0x4, fixed_abs, tag = 'smem constant byte address 0x4 - core index']
  #allocation1 [shape = 'u32[72,128]{1,0:T(1,128)}', space=vmem, size = 0x9000, scoped, tag = 'internal scratch']
  #allocation2 [shape = 'f32[432,256]{1,0:T(8,128)}', space=vmem, size = 0x6c000, scoped, tag = 'scratch operand']
  %s0 = inlined_call_operand.vmem [shape: f32[16,256], index: 0, kind: input, shape index: {}]
  %s1 = inlined_call_operand.hbm [shape: f32[104,512], index: 1, kind: input, shape index: {}]
  %s2 = inlined_call_operand.vmem [shape: f32[8,128], index: 2, kind: output, shape index: {}]
  %s3 = sld [smem:[#allocation0]]
  $region22: #{actor_critic_forward.1} parent=0
    _
  %s5 = ssub.s32 1, %s3
  %s6 = scalar_select 0, %s5, %s3
  $region1: #{actor_critic_forward.1} parent=0
    #allocation3 [shape = 'u8[212992]{0}', space=vmem, size = 0x34000, scoped, tag = 'input window, operand 1, single buffered']
    #allocation4 [shape = 's32[1]{0}', space=sflag, size = 0x4, scoped, tag = 'scoped memory for actor_critic_forward.1']
    %7 = vsyncpa [#allocation4], 0
    // Predicated region
    $region2: #{actor_critic_forward.1} parent=1 // pred_check
      _
    $region3: #{actor_critic_forward.1} parent=1 // pred_check_branch
      %9 = sbr.rel (0) target = $region5
    $region4: #{actor_critic_forward.1} parent=1 // pred_region
      _
    $region5: #{actor_critic_forward.1} parent=1 // pred_fallthru
      _
    // Predicated region
    $region6: #{actor_critic_forward.1} parent=1 // pred_check
      _
    $region7: #{actor_critic_forward.1} parent=1 // pred_check_branch
      %11 = sbr.rel (0) target = $region9
    $region8: #{actor_critic_forward.1} parent=1 // pred_region
      %13 = vsyncadd [#allocation4], 0
      %s14 = sshll.u32 %s1, 4
      %s15 = int_to_ptr.hbm [resolvable:$true] %s14
      %s16 = sshll.u32 [#allocation3], 4
      %s17 = int_to_ptr.vmem [resolvable:$true] %s16
      %22 = dma.hbm_to_vmem [thread:$0]  %s15, 6656, %s17, [#allocation4], 512, 512, 32
    $region9: #{actor_critic_forward.1} parent=1 // pred_fallthru
      _
    // Predicated region
    $region10: #{actor_critic_forward.1} parent=1 // pred_check
      _
    $region11: #{actor_critic_forward.1} parent=1 // pred_check_branch
      %24 = sbr.rel (0) target = $region13
    $region12: #{actor_critic_forward.1} parent=1 // pred_region
      %26 = dma.done [#allocation4], 6656
    $region13: #{actor_critic_forward.1} parent=1 // pred_fallthru
      _
    %v27 = vld [vmem:[#allocation3 + $0xc0] sm:$0xff]
    %v28 = vld [vmem:[#allocation3 + $0xc8] sm:$0xff]
    %v29 = vld [vmem:[#allocation3 + $0xe0] sm:$0xff]
    %v30 = vld [vmem:[#allocation3 + $0xe8] sm:$0xff]
    %v31 = vld [vmem:[#allocation3 + $0x100] sm:$0xff]
    %v32 = vld [vmem:[#allocation3 + $0x108] sm:$0xff]
    %v33 = vld [vmem:[#allocation3 + $0x120] sm:$0x7]
    %v34 = vld [vmem:[#allocation3 + $0x128] sm:$0x7]
    %v35 = vld [vmem:[%s0] sm:$0xff]
    %v36 = vld [vmem:[%s0 + $0x8] sm:$0xff]
    %v37 = vld [vmem:[%s0 + $0x10] sm:$0xff]
    %v38 = vld [vmem:[%s0 + $0x18] sm:$0xff]
    %v39 = vperm.slane %v27, 0
    %v40 = vperm.slane %v28, 0
    %43 = vrot.lane.b32.xlu0 %v39, 55
    %v44 = vpop.permute.xlu0 %43
    %45 = vrot.lane.b32.xlu0 %v40, 55
    %v46 = vpop.permute.xlu0 %45
    %vm47 = vcmask 449536
    %v48 = vsel %vm47, %v44, %v46
    %v52 = vmul.f32 %v44, 0.0
    %v53 = vmul.f32 %v35, %v48
    %v54 = vmul.f32 %v36, %v46
    %v55 = vmul.f32 %v37, %v48
    %v56 = vmul.f32 %v38, %v46
    %62 = vrot.lane.b32.xlu0 %v52, 73
    %v63 = vpop.permute.xlu0 %62
    %64 = vrot.lane.b32.xlu0 %v53, 73
    %v65 = vpop.permute.xlu0 %64
    %66 = vrot.lane.b32.xlu0 %v54, 73
    %v67 = vpop.permute.xlu0 %66
    %68 = vrot.lane.b32.xlu0 %v55, 73
    %v69 = vpop.permute.xlu0 %68
    %70 = vrot.lane.b32.xlu0 %v56, 73
    %v71 = vpop.permute.xlu0 %70
    %vm72 = vcmask 596992
    %v73 = vsel %vm72, %v63, %v65
    %v74 = vsel %vm72, %v65, %v67
    %v75 = vsel %vm72, %v63, %v69
    %v76 = vsel %vm72, %v69, %v71
    %81 = vst [vmem:[#allocation2] sm:$0xff] %v73
    %82 = vst [vmem:[#allocation2 + $0x8] sm:$0xff] %v74
    %83 = vst [vmem:[#allocation2 + $0x10] sm:$0xff] %v75
    %84 = vst [vmem:[#allocation2 + $0x18] sm:$0xff] %v76
    %v85 = vperm.slane %v27, 1
    %v86 = vperm.slane %v28, 1
    %89 = vrot.lane.b32.xlu0 %v85, 56
    %v90 = vpop.permute.xlu0 %89
    %91 = vrot.lane.b32.xlu0 %v86, 56
    %v92 = vpop.permute.xlu0 %91
    %vm93 = vcmask 457728
    %v94 = vsel %vm93, %v90, %v92
    %v98 = vmul.f32 %v90, 0.0
    %v99 = vmul.f32 %v35, %v94
    %v100 = vmul.f32 %v36, %v92
    %v101 = vmul.f32 %v37, %v94
    %v102 = vmul.f32 %v38, %v92
    %108 = vrot.lane.b32.xlu0 %v98, 72
    %v109 = vpop.permute.xlu0 %108
    %110 = vrot.lane.b32.xlu0 %v99, 72
    %v111 = vpop.permute.xlu0 %110
    %112 = vrot.lane.b32.xlu0 %v100, 72
    %v113 = vpop.permute.xlu0 %112
    %114 = vrot.lane.b32.xlu0 %v101, 72
    %v115 = vpop.permute.xlu0 %114
    %116 = vrot.lane.b32.xlu0 %v102, 72
    %v117 = vpop.permute.xlu0 %116
    %vm118 = vcmask 588800
    %v119 = vsel %vm118, %v109, %v111
    %v120 = vsel %vm118, %v111, %v113
    %v121 = vsel %vm118, %v109, %v115
    %v122 = vsel %vm118, %v115, %v117
    %127 = vst [vmem:[#allocation2 + $0x20] sm:$0xff] %v119
    %128 = vst [vmem:[#allocation2 + $0x28] sm:$0xff] %v120
    %129 = vst [vmem:[#allocation2 + $0x30] sm:$0xff] %v121
    %130 = vst [vmem:[#allocation2 + $0x38] sm:$0xff] %v122
    %v131 = vperm.slane %v27, 2
    %v132 = vperm.slane %v28, 2
    %135 = vrot.lane.b32.xlu0 %v131, 57
    %v136 = vpop.permute.xlu0 %135
    %137 = vrot.lane.b32.xlu0 %v132, 57
    %v138 = vpop.permute.xlu0 %137
    %vm139 = vcmask 465920
    %v140 = vsel %vm139, %v136, %v138
    %v144 = vmul.f32 %v136, 0.0
    %v145 = vmul.f32 %v35, %v140
    %v146 = vmul.f32 %v36, %v138
    %v147 = vmul.f32 %v37, %v140
    %v148 = vmul.f32 %v38, %v138
    %154 = vrot.lane.b32.xlu0 %v144, 71
    %v155 = vpop.permute.xlu0 %154
    %156 = vrot.lane.b32.xlu0 %v145, 71
    %v157 = vpop.permute.xlu0 %156
    %158 = vrot.lane.b32.xlu0 %v146, 71
    %v159 = vpop.permute.xlu0 %158
    %160 = vrot.lane.b32.xlu0 %v147, 71
    %v161 = vpop.permute.xlu0 %160
    %162 = vrot.lane.b32.xlu0 %v148, 71
    %v163 = vpop.permute.xlu0 %162
    %vm164 = vcmask 580608
    %v165 = vsel %vm164, %v155, %v157
    %v166 = vsel %vm164, %v157, %v159
    %v167 = vsel %vm164, %v155, %v161
    %v168 = vsel %vm164, %v161, %v163
    %173 = vst [vmem:[#allocation2 + $0x40] sm:$0xff] %v165
    %174 = vst [vmem:[#allocation2 + $0x48] sm:$0xff] %v166
    %175 = vst [vmem:[#allocation2 + $0x50] sm:$0xff] %v167
    %176 = vst [vmem:[#allocation2 + $0x58] sm:$0xff] %v168
    %v177 = vperm.slane %v27, 3
    %v178 = vperm.slane %v28, 3
    %181 = vrot.lane.b32.xlu0 %v177, 63
    %v182 = vpop.permute.xlu0 %181
    %183 = vrot.lane.b32.xlu0 %v178, 63
    %v184 = vpop.permute.xlu0 %183
    %vm185 = vcmask 515072
    %v186 = vsel %vm185, %v182, %v184
    %v190 = vmul.f32 %v182, 0.0
    %v191 = vmul.f32 %v35, %v186
    %v192 = vmul.f32 %v36, %v184
    %v193 = vmul.f32 %v37, %v186
    %v194 = vmul.f32 %v38, %v184
    %200 = vrot.lane.b32.xlu0 %v190, 65
    %v201 = vpop.permute.xlu0 %200
    %202 = vrot.lane.b32.xlu0 %v191, 65
    %v203 = vpop.permute.xlu0 %202
    %204 = vrot.lane.b32.xlu0 %v192, 65
    %v205 = vpop.permute.xlu0 %204
    %206 = vrot.lane.b32.xlu0 %v193, 65
    %v207 = vpop.permute.xlu0 %206
    %208 = vrot.lane.b32.xlu0 %v194, 65
    %v209 = vpop.permute.xlu0 %208
    %vm210 = vcmask 531456
    %v211 = vsel %vm210, %v201, %v203
    %v212 = vsel %vm210, %v203, %v205
    %v213 = vsel %vm210, %v201, %v207
    %v214 = vsel %vm210, %v207, %v209
    %219 = vst [vmem:[#allocation2 + $0x60] sm:$0xff] %v211
    %220 = vst [vmem:[#allocation2 + $0x68] sm:$0xff] %v212
    %221 = vst [vmem:[#allocation2 + $0x70] sm:$0xff] %v213
    %222 = vst [vmem:[#allocation2 + $0x78] sm:$0xff] %v214
    %v223 = vperm.slane %v27, 4
    %v224 = vperm.slane %v28, 4
    %227 = vrot.lane.b32.xlu0 %v223, 64
    %v228 = vpop.permute.xlu0 %227
    %229 = vrot.lane.b32.xlu0 %v224, 64
    %v230 = vpop.permute.xlu0 %229
    %vm231 = vcmask 523264
    %v232 = vsel %vm231, %v228, %v230
    %v236 = vmul.f32 %v228, 0.0
    %v237 = vmul.f32 %v35, %v232
    %v238 = vmul.f32 %v36, %v230
    %v239 = vmul.f32 %v37, %v232
    %v240 = vmul.f32 %v38, %v230
    %246 = vrot.lane.b32.xlu0 %v236, 64
    %v247 = vpop.permute.xlu0 %246
    %248 = vrot.lane.b32.xlu0 %v237, 64
    %v249 = vpop.permute.xlu0 %248
    %250 = vrot.lane.b32.xlu0 %v238, 64
    %v251 = vpop.permute.xlu0 %250
    %252 = vrot.lane.b32.xlu0 %v239, 64
    %v253 = vpop.permute.xlu0 %252
    %254 = vrot.lane.b32.xlu0 %v240, 64
    %v255 = vpop.permute.xlu0 %254
    %v256 = vsel %vm231, %v247, %v249
    %v257 = vsel %vm231, %v249, %v251
    %v258 = vsel %vm231, %v247, %v253
    %v259 = vsel %vm231, %v253, %v255
    %264 = vst [vmem:[#allocation2 + $0x80] sm:$0xff] %v256
    %265 = vst [vmem:[#allocation2 + $0x88] sm:$0xff] %v257
    %266 = vst [vmem:[#allocation2 + $0x90] sm:$0xff] %v258
    %267 = vst [vmem:[#allocation2 + $0x98] sm:$0xff] %v259
    %v268 = vperm.slane %v27, 5
    %v269 = vperm.slane %v28, 5
    %272 = vrot.lane.b32.xlu0 %v268, 65
    %v273 = vpop.permute.xlu0 %272
    %274 = vrot.lane.b32.xlu0 %v269, 65
    %v275 = vpop.permute.xlu0 %274
    %v276 = vsel %vm210, %v273, %v275
    %v280 = vmul.f32 %v273, 0.0
    %v281 = vmul.f32 %v35, %v276
    %v282 = vmul.f32 %v36, %v275
    %v283 = vmul.f32 %v37, %v276
    %v284 = vmul.f32 %v38, %v275
    %290 = vrot.lane.b32.xlu0 %v280, 63
    %v291 = vpop.permute.xlu0 %290
    %292 = vrot.lane.b32.xlu0 %v281, 63
    %v293 = vpop.permute.xlu0 %292
    %294 = vrot.lane.b32.xlu0 %v282, 63
    %v295 = vpop.permute.xlu0 %294
    %296 = vrot.lane.b32.xlu0 %v283, 63
    %v297 = vpop.permute.xlu0 %296
    %298 = vrot.lane.b32.xlu0 %v284, 63
    %v299 = vpop.permute.xlu0 %298
    %v300 = vsel %vm185, %v291, %v293
    %v301 = vsel %vm185, %v293, %v295
    %v302 = vsel %vm185, %v291, %v297
    %v303 = vsel %vm185, %v297, %v299
    %308 = vst [vmem:[#allocation2 + $0xa0] sm:$0xff] %v300
    %309 = vst [vmem:[#allocation2 + $0xa8] sm:$0xff] %v301
    %310 = vst [vmem:[#allocation2 + $0xb0] sm:$0xff] %v302
    %311 = vst [vmem:[#allocation2 + $0xb8] sm:$0xff] %v303
    %v312 = vperm.slane %v27, 6
    %v313 = vperm.slane %v28, 6
    %316 = vrot.lane.b32.xlu0 %v312, 71
    %v317 = vpop.permute.xlu0 %316
    %318 = vrot.lane.b32.xlu0 %v313, 71
    %v319 = vpop.permute.xlu0 %318
    %v320 = vsel %vm164, %v317, %v319
    %v324 = vmul.f32 %v317, 0.0
    %v325 = vmul.f32 %v35, %v320
    %v326 = vmul.f32 %v36, %v319
    %v327 = vmul.f32 %v37, %v320
    %v328 = vmul.f32 %v38, %v319
    %334 = vrot.lane.b32.xlu0 %v324, 57
    %v335 = vpop.permute.xlu0 %334
    %336 = vrot.lane.b32.xlu0 %v325, 57
    %v337 = vpop.permute.xlu0 %336
    %338 = vrot.lane.b32.xlu0 %v326, 57
    %v339 = vpop.permute.xlu0 %338
    %340 = vrot.lane.b32.xlu0 %v327, 57
    %v341 = vpop.permute.xlu0 %340
    %342 = vrot.lane.b32.xlu0 %v328, 57
    %v343 = vpop.permute.xlu0 %342
    %v344 = vsel %vm139, %v335, %v337
    %v345 = vsel %vm139, %v337, %v339
    %v346 = vsel %vm139, %v335, %v341
    %v347 = vsel %vm139, %v341, %v343
    %352 = vst [vmem:[#allocation2 + $0xc0] sm:$0xff] %v344
    %353 = vst [vmem:[#allocation2 + $0xc8] sm:$0xff] %v345
    %354 = vst [vmem:[#allocation2 + $0xd0] sm:$0xff] %v346
    %355 = vst [vmem:[#allocation2 + $0xd8] sm:$0xff] %v347
    %v356 = vperm.slane %v27, 7
    %v357 = vperm.slane %v28, 7
    %360 = vrot.lane.b32.xlu0 %v356, 72
    %v361 = vpop.permute.xlu0 %360
    %362 = vrot.lane.b32.xlu0 %v357, 72
    %v363 = vpop.permute.xlu0 %362
    %v364 = vsel %vm118, %v361, %v363
    %v368 = vmul.f32 %v361, 0.0
    %v369 = vmul.f32 %v35, %v364
    %v370 = vmul.f32 %v36, %v363
    %v371 = vmul.f32 %v37, %v364
    %v372 = vmul.f32 %v38, %v363
    %378 = vrot.lane.b32.xlu0 %v368, 56
    %v379 = vpop.permute.xlu0 %378
    %380 = vrot.lane.b32.xlu0 %v369, 56
    %v381 = vpop.permute.xlu0 %380
    %382 = vrot.lane.b32.xlu0 %v370, 56
    %v383 = vpop.permute.xlu0 %382
    %384 = vrot.lane.b32.xlu0 %v371, 56
    %v385 = vpop.permute.xlu0 %384
    %386 = vrot.lane.b32.xlu0 %v372, 56
    %v387 = vpop.permute.xlu0 %386
    %v388 = vsel %vm93, %v379, %v381
    %v389 = vsel %vm93, %v381, %v383
    %v390 = vsel %vm93, %v379, %v385
    %v391 = vsel %vm93, %v385, %v387
    %396 = vst [vmem:[#allocation2 + $0xe0] sm:$0xff] %v388
    %397 = vst [vmem:[#allocation2 + $0xe8] sm:$0xff] %v389
    %398 = vst [vmem:[#allocation2 + $0xf0] sm:$0xff] %v390
    %399 = vst [vmem:[#allocation2 + $0xf8] sm:$0xff] %v391
    %v400 = vperm.slane %v29, 0
    %v401 = vperm.slane %v30, 0
    %404 = vrot.lane.b32.xlu0 %v400, 73
    %v405 = vpop.permute.xlu0 %404
    %406 = vrot.lane.b32.xlu0 %v401, 73
    %v407 = vpop.permute.xlu0 %406
    %v408 = vsel %vm72, %v405, %v407
    %v412 = vmul.f32 %v405, 0.0
    %v413 = vmul.f32 %v35, %v408
    %v414 = vmul.f32 %v36, %v407
    %v415 = vmul.f32 %v37, %v408
    %v416 = vmul.f32 %v38, %v407
    %422 = vrot.lane.b32.xlu0 %v412, 55
    %v423 = vpop.permute.xlu0 %422
    %424 = vrot.lane.b32.xlu0 %v413, 55
    %v425 = vpop.permute.xlu0 %424
    %426 = vrot.lane.b32.xlu0 %v414, 55
    %v427 = vpop.permute.xlu0 %426
    %428 = vrot.lane.b32.xlu0 %v415, 55
    %v429 = vpop.permute.xlu0 %428
    %430 = vrot.lane.b32.xlu0 %v416, 55
    %v431 = vpop.permute.xlu0 %430
    %v432 = vsel %vm47, %v423, %v425
    %v433 = vsel %vm47, %v425, %v427
    %v434 = vsel %vm47, %v423, %v429
    %v435 = vsel %vm47, %v429, %v431
    %440 = vst [vmem:[#allocation2 + $0x100] sm:$0xff] %v432
    %441 = vst [vmem:[#allocation2 + $0x108] sm:$0xff] %v433
    %442 = vst [vmem:[#allocation2 + $0x110] sm:$0xff] %v434
    %443 = vst [vmem:[#allocation2 + $0x118] sm:$0xff] %v435
    %v444 = vperm.slane %v29, 1
    %v445 = vperm.slane %v30, 1
    %448 = vrot.lane.b32.xlu0 %v444, 119
    %v449 = vpop.permute.xlu0 %448
    %450 = vrot.lane.b32.xlu0 %v445, 119
    %v451 = vpop.permute.xlu0 %450
    %vm452 = vcmask 973824
    %v453 = vsel %vm452, %v449, %v451
    %v457 = vmul.f32 %v449, 0.0
    %v458 = vmul.f32 %v35, %v453
    %v459 = vmul.f32 %v36, %v451
    %v460 = vmul.f32 %v37, %v453
    %v461 = vmul.f32 %v38, %v451
    %467 = vrot.lane.b32.xlu0 %v457, 9
    %v468 = vpop.permute.xlu0 %467
    %469 = vrot.lane.b32.xlu0 %v458, 9
    %v470 = vpop.permute.xlu0 %469
    %471 = vrot.lane.b32.xlu0 %v459, 9
    %v472 = vpop.permute.xlu0 %471
    %473 = vrot.lane.b32.xlu0 %v460, 9
    %v474 = vpop.permute.xlu0 %473
    %475 = vrot.lane.b32.xlu0 %v461, 9
    %v476 = vpop.permute.xlu0 %475
    %vm477 = vcmask 72704
    %v478 = vsel %vm477, %v468, %v470
    %v479 = vsel %vm477, %v470, %v472
    %v480 = vsel %vm477, %v468, %v474
    %v481 = vsel %vm477, %v474, %v476
    %486 = vst [vmem:[#allocation2 + $0x120] sm:$0xff] %v478
    %487 = vst [vmem:[#allocation2 + $0x128] sm:$0xff] %v479
    %488 = vst [vmem:[#allocation2 + $0x130] sm:$0xff] %v480
    %489 = vst [vmem:[#allocation2 + $0x138] sm:$0xff] %v481
    %v490 = vperm.slane %v29, 2
    %v491 = vperm.slane %v30, 2
    %494 = vrot.lane.b32.xlu0 %v490, 120
    %v495 = vpop.permute.xlu0 %494
    %496 = vrot.lane.b32.xlu0 %v491, 120
    %v497 = vpop.permute.xlu0 %496
    %vm498 = vcmask 982016
    %v499 = vsel %vm498, %v495, %v497
    %v503 = vmul.f32 %v495, 0.0
    %v504 = vmul.f32 %v35, %v499
    %v505 = vmul.f32 %v36, %v497
    %v506 = vmul.f32 %v37, %v499
    %v507 = vmul.f32 %v38, %v497
    %513 = vrot.lane.b32.xlu0 %v503, 8
    %v514 = vpop.permute.xlu0 %513
    %515 = vrot.lane.b32.xlu0 %v504, 8
    %v516 = vpop.permute.xlu0 %515
    %517 = vrot.lane.b32.xlu0 %v505, 8
    %v518 = vpop.permute.xlu0 %517
    %519 = vrot.lane.b32.xlu0 %v506, 8
    %v520 = vpop.permute.xlu0 %519
    %521 = vrot.lane.b32.xlu0 %v507, 8
    %v522 = vpop.permute.xlu0 %521
    %vm523 = vcmask 64512
    %v524 = vsel %vm523, %v514, %v516
    %v525 = vsel %vm523, %v516, %v518
    %v526 = vsel %vm523, %v514, %v520
    %v527 = vsel %vm523, %v520, %v522
    %532 = vst [vmem:[#allocation2 + $0x140] sm:$0xff] %v524
    %533 = vst [vmem:[#allocation2 + $0x148] sm:$0xff] %v525
    %534 = vst [vmem:[#allocation2 + $0x150] sm:$0xff] %v526
    %535 = vst [vmem:[#allocation2 + $0x158] sm:$0xff] %v527
    %v536 = vperm.slane %v29, 3
    %v537 = vperm.slane %v30, 3
    %540 = vrot.lane.b32.xlu0 %v536, 121
    %v541 = vpop.permute.xlu0 %540
    %542 = vrot.lane.b32.xlu0 %v537, 121
    %v543 = vpop.permute.xlu0 %542
    %vm544 = vcmask 990208
    %v545 = vsel %vm544, %v541, %v543
    %v549 = vmul.f32 %v541, 0.0
    %v550 = vmul.f32 %v35, %v545
    %v551 = vmul.f32 %v36, %v543
    %v552 = vmul.f32 %v37, %v545
    %v553 = vmul.f32 %v38, %v543
    %559 = vrot.lane.b32.xlu0 %v549, 7
    %v560 = vpop.permute.xlu0 %559
    %561 = vrot.lane.b32.xlu0 %v550, 7
    %v562 = vpop.permute.xlu0 %561
    %563 = vrot.lane.b32.xlu0 %v551, 7
    %v564 = vpop.permute.xlu0 %563
    %565 = vrot.lane.b32.xlu0 %v552, 7
    %v566 = vpop.permute.xlu0 %565
    %567 = vrot.lane.b32.xlu0 %v553, 7
    %v568 = vpop.permute.xlu0 %567
    %vm569 = vcmask 56320
    %v570 = vsel %vm569, %v560, %v562
    %v571 = vsel %vm569, %v562, %v564
    %v572 = vsel %vm569, %v560, %v566
    %v573 = vsel %vm569, %v566, %v568
    %578 = vst [vmem:[#allocation2 + $0x160] sm:$0xff] %v570
    %579 = vst [vmem:[#allocation2 + $0x168] sm:$0xff] %v571
    %580 = vst [vmem:[#allocation2 + $0x170] sm:$0xff] %v572
    %581 = vst [vmem:[#allocation2 + $0x178] sm:$0xff] %v573
    %v582 = vperm.slane %v29, 4
    %v583 = vperm.slane %v30, 4
    %586 = vrot.lane.b32.xlu0 %v582, 127
    %v587 = vpop.permute.xlu0 %586
    %588 = vrot.lane.b32.xlu0 %v583, 127
    %v589 = vpop.permute.xlu0 %588
    %vm590 = vcmask 1039360
    %v591 = vsel %vm590, %v587, %v589
    %v595 = vmul.f32 %v587, 0.0
    %v596 = vmul.f32 %v35, %v591
    %v597 = vmul.f32 %v36, %v589
    %v598 = vmul.f32 %v37, %v591
    %v599 = vmul.f32 %v38, %v589
    %605 = vrot.lane.b32.xlu0 %v595, 1
    %v606 = vpop.permute.xlu0 %605
    %607 = vrot.lane.b32.xlu0 %v596, 1
    %v608 = vpop.permute.xlu0 %607
    %609 = vrot.lane.b32.xlu0 %v597, 1
    %v610 = vpop.permute.xlu0 %609
    %611 = vrot.lane.b32.xlu0 %v598, 1
    %v612 = vpop.permute.xlu0 %611
    %613 = vrot.lane.b32.xlu0 %v599, 1
    %v614 = vpop.permute.xlu0 %613
    %vm615 = vcmask 7168
    %v616 = vsel %vm615, %v606, %v608
    %v617 = vsel %vm615, %v608, %v610
    %v618 = vsel %vm615, %v606, %v612
    %v619 = vsel %vm615, %v612, %v614
    %624 = vst [vmem:[#allocation2 + $0x180] sm:$0xff] %v616
    %625 = vst [vmem:[#allocation2 + $0x188] sm:$0xff] %v617
    %626 = vst [vmem:[#allocation2 + $0x190] sm:$0xff] %v618
    %627 = vst [vmem:[#allocation2 + $0x198] sm:$0xff] %v619
    %v628 = vperm.slane %v29, 5
    %v629 = vperm.slane %v30, 5
    %v630 = vmul.f32 %v35, %v628
    %v631 = vmul.f32 %v36, %v629
    %v632 = vmul.f32 %v37, %v628
    %v633 = vmul.f32 %v38, %v629
    %634 = vst [vmem:[#allocation2 + $0x1a0] sm:$0xff] %v630
    %635 = vst [vmem:[#allocation2 + $0x1a8] sm:$0xff] %v631
    %636 = vst [vmem:[#allocation2 + $0x1b0] sm:$0xff] %v632
    %637 = vst [vmem:[#allocation2 + $0x1b8] sm:$0xff] %v633
    %v638 = vperm.slane %v29, 6
    %v639 = vperm.slane %v30, 6
    %642 = vrot.lane.b32.xlu0 %v638, 1
    %v643 = vpop.permute.xlu0 %642
    %644 = vrot.lane.b32.xlu0 %v639, 1
    %v645 = vpop.permute.xlu0 %644
    %v646 = vsel %vm615, %v643, %v645
    %v650 = vmul.f32 %v35, %v643
    %v651 = vmul.f32 %v36, %v646
    %v652 = vmul.f32 %v645, 0.0
    %v653 = vmul.f32 %v37, %v643
    %v654 = vmul.f32 %v38, %v646
    %660 = vrot.lane.b32.xlu0 %v650, 127
    %v661 = vpop.permute.xlu0 %660
    %662 = vrot.lane.b32.xlu0 %v651, 127
    %v663 = vpop.permute.xlu0 %662
    %664 = vrot.lane.b32.xlu0 %v652, 127
    %v665 = vpop.permute.xlu0 %664
    %666 = vrot.lane.b32.xlu0 %v653, 127
    %v667 = vpop.permute.xlu0 %666
    %668 = vrot.lane.b32.xlu0 %v654, 127
    %v669 = vpop.permute.xlu0 %668
    %v670 = vsel %vm590, %v661, %v663
    %v671 = vsel %vm590, %v663, %v665
    %v672 = vsel %vm590, %v667, %v669
    %v673 = vsel %vm590, %v669, %v665
    %678 = vst [vmem:[#allocation2 + $0x1c0] sm:$0xff] %v670
    %679 = vst [vmem:[#allocation2 + $0x1c8] sm:$0xff] %v671
    %680 = vst [vmem:[#allocation2 + $0x1d0] sm:$0xff] %v672
    %681 = vst [vmem:[#allocation2 + $0x1d8] sm:$0xff] %v673
    %v682 = vperm.slane %v29, 7
    %v683 = vperm.slane %v30, 7
    %686 = vrot.lane.b32.xlu0 %v682, 7
    %v687 = vpop.permute.xlu0 %686
    %688 = vrot.lane.b32.xlu0 %v683, 7
    %v689 = vpop.permute.xlu0 %688
    %v690 = vsel %vm569, %v687, %v689
    %v694 = vmul.f32 %v35, %v687
    %v695 = vmul.f32 %v36, %v690
    %v696 = vmul.f32 %v689, 0.0
    %v697 = vmul.f32 %v37, %v687
    %v698 = vmul.f32 %v38, %v690
    %704 = vrot.lane.b32.xlu0 %v694, 121
    %v705 = vpop.permute.xlu0 %704
    %706 = vrot.lane.b32.xlu0 %v695, 121
    %v707 = vpop.permute.xlu0 %706
    %708 = vrot.lane.b32.xlu0 %v696, 121
    %v709 = vpop.permute.xlu0 %708
    %710 = vrot.lane.b32.xlu0 %v697, 121
    %v711 = vpop.permute.xlu0 %710
    %712 = vrot.lane.b32.xlu0 %v698, 121
    %v713 = vpop.permute.xlu0 %712
    %v714 = vsel %vm544, %v705, %v707
    %v715 = vsel %vm544, %v707, %v709
    %v716 = vsel %vm544, %v711, %v713
    %v717 = vsel %vm544, %v713, %v709
    %722 = vst [vmem:[#allocation2 + $0x1e0] sm:$0xff] %v714
    %723 = vst [vmem:[#allocation2 + $0x1e8] sm:$0xff] %v715
    %724 = vst [vmem:[#allocation2 + $0x1f0] sm:$0xff] %v716
    %725 = vst [vmem:[#allocation2 + $0x1f8] sm:$0xff] %v717
    %v726 = vperm.slane %v31, 0
    %v727 = vperm.slane %v32, 0
    %730 = vrot.lane.b32.xlu0 %v726, 8
    %v731 = vpop.permute.xlu0 %730
    %732 = vrot.lane.b32.xlu0 %v727, 8
    %v733 = vpop.permute.xlu0 %732
    %v734 = vsel %vm523, %v731, %v733
    %v738 = vmul.f32 %v35, %v731
    %v739 = vmul.f32 %v36, %v734
    %v740 = vmul.f32 %v733, 0.0
    %v741 = vmul.f32 %v37, %v731
    %v742 = vmul.f32 %v38, %v734
    %748 = vrot.lane.b32.xlu0 %v738, 120
    %v749 = vpop.permute.xlu0 %748
    %750 = vrot.lane.b32.xlu0 %v739, 120
    %v751 = vpop.permute.xlu0 %750
    %752 = vrot.lane.b32.xlu0 %v740, 120
    %v753 = vpop.permute.xlu0 %752
    %754 = vrot.lane.b32.xlu0 %v741, 120
    %v755 = vpop.permute.xlu0 %754
    %756 = vrot.lane.b32.xlu0 %v742, 120
    %v757 = vpop.permute.xlu0 %756
    %v758 = vsel %vm498, %v749, %v751
    %v759 = vsel %vm498, %v751, %v753
    %v760 = vsel %vm498, %v755, %v757
    %v761 = vsel %vm498, %v757, %v753
    %766 = vst [vmem:[#allocation2 + $0x200] sm:$0xff] %v758
    %767 = vst [vmem:[#allocation2 + $0x208] sm:$0xff] %v759
    %768 = vst [vmem:[#allocation2 + $0x210] sm:$0xff] %v760
    %769 = vst [vmem:[#allocation2 + $0x218] sm:$0xff] %v761
    %v770 = vperm.slane %v31, 1
    %v771 = vperm.slane %v32, 1
    %774 = vrot.lane.b32.xlu0 %v770, 9
    %v775 = vpop.permute.xlu0 %774
    %776 = vrot.lane.b32.xlu0 %v771, 9
    %v777 = vpop.permute.xlu0 %776
    %v778 = vsel %vm477, %v775, %v777
    %v782 = vmul.f32 %v35, %v775
    %v783 = vmul.f32 %v36, %v778
    %v784 = vmul.f32 %v777, 0.0
    %v785 = vmul.f32 %v37, %v775
    %v786 = vmul.f32 %v38, %v778
    %792 = vrot.lane.b32.xlu0 %v782, 119
    %v793 = vpop.permute.xlu0 %792
    %794 = vrot.lane.b32.xlu0 %v783, 119
    %v795 = vpop.permute.xlu0 %794
    %796 = vrot.lane.b32.xlu0 %v784, 119
    %v797 = vpop.permute.xlu0 %796
    %798 = vrot.lane.b32.xlu0 %v785, 119
    %v799 = vpop.permute.xlu0 %798
    %800 = vrot.lane.b32.xlu0 %v786, 119
    %v801 = vpop.permute.xlu0 %800
    %v802 = vsel %vm452, %v793, %v795
    %v803 = vsel %vm452, %v795, %v797
    %v804 = vsel %vm452, %v799, %v801
    %v805 = vsel %vm452, %v801, %v797
    %810 = vst [vmem:[#allocation2 + $0x220] sm:$0xff] %v802
    %811 = vst [vmem:[#allocation2 + $0x228] sm:$0xff] %v803
    %812 = vst [vmem:[#allocation2 + $0x230] sm:$0xff] %v804
    %813 = vst [vmem:[#allocation2 + $0x238] sm:$0xff] %v805
    %v814 = vperm.slane %v31, 2
    %v815 = vperm.slane %v32, 2
    %818 = vrot.lane.b32.xlu0 %v814, 55
    %v819 = vpop.permute.xlu0 %818
    %820 = vrot.lane.b32.xlu0 %v815, 55
    %v821 = vpop.permute.xlu0 %820
    %v822 = vsel %vm47, %v819, %v821
    %v826 = vmul.f32 %v35, %v819
    %v827 = vmul.f32 %v36, %v822
    %v828 = vmul.f32 %v821, 0.0
    %v829 = vmul.f32 %v37, %v819
    %v830 = vmul.f32 %v38, %v822
    %836 = vrot.lane.b32.xlu0 %v826, 73
    %v837 = vpop.permute.xlu0 %836
    %838 = vrot.lane.b32.xlu0 %v827, 73
    %v839 = vpop.permute.xlu0 %838
    %840 = vrot.lane.b32.xlu0 %v828, 73
    %v841 = vpop.permute.xlu0 %840
    %842 = vrot.lane.b32.xlu0 %v829, 73
    %v843 = vpop.permute.xlu0 %842
    %844 = vrot.lane.b32.xlu0 %v830, 73
    %v845 = vpop.permute.xlu0 %844
    %v846 = vsel %vm72, %v837, %v839
    %v847 = vsel %vm72, %v839, %v841
    %v848 = vsel %vm72, %v843, %v845
    %v849 = vsel %vm72, %v845, %v841
    %854 = vst [vmem:[#allocation2 + $0x240] sm:$0xff] %v846
    %855 = vst [vmem:[#allocation2 + $0x248] sm:$0xff] %v847
    %856 = vst [vmem:[#allocation2 + $0x250] sm:$0xff] %v848
    %857 = vst [vmem:[#allocation2 + $0x258] sm:$0xff] %v849
    %v858 = vperm.slane %v31, 3
    %v859 = vperm.slane %v32, 3
    %862 = vrot.lane.b32.xlu0 %v858, 56
    %v863 = vpop.permute.xlu0 %862
    %864 = vrot.lane.b32.xlu0 %v859, 56
    %v865 = vpop.permute.xlu0 %864
    %v866 = vsel %vm93, %v863, %v865
    %v870 = vmul.f32 %v35, %v863
    %v871 = vmul.f32 %v36, %v866
    %v872 = vmul.f32 %v865, 0.0
    %v873 = vmul.f32 %v37, %v863
    %v874 = vmul.f32 %v38, %v866
    %880 = vrot.lane.b32.xlu0 %v870, 72
    %v881 = vpop.permute.xlu0 %880
    %882 = vrot.lane.b32.xlu0 %v871, 72
    %v883 = vpop.permute.xlu0 %882
    %884 = vrot.lane.b32.xlu0 %v872, 72
    %v885 = vpop.permute.xlu0 %884
    %886 = vrot.lane.b32.xlu0 %v873, 72
    %v887 = vpop.permute.xlu0 %886
    %888 = vrot.lane.b32.xlu0 %v874, 72
    %v889 = vpop.permute.xlu0 %888
    %v890 = vsel %vm118, %v881, %v883
    %v891 = vsel %vm118, %v883, %v885
    %v892 = vsel %vm118, %v887, %v889
    %v893 = vsel %vm118, %v889, %v885
    %898 = vst [vmem:[#allocation2 + $0x260] sm:$0xff] %v890
    %899 = vst [vmem:[#allocation2 + $0x268] sm:$0xff] %v891
    %900 = vst [vmem:[#allocation2 + $0x270] sm:$0xff] %v892
    %901 = vst [vmem:[#allocation2 + $0x278] sm:$0xff] %v893
    %v902 = vperm.slane %v31, 4
    %v903 = vperm.slane %v32, 4
    %906 = vrot.lane.b32.xlu0 %v902, 57
    %v907 = vpop.permute.xlu0 %906
    %908 = vrot.lane.b32.xlu0 %v903, 57
    %v909 = vpop.permute.xlu0 %908
    %v910 = vsel %vm139, %v907, %v909
    %v914 = vmul.f32 %v35, %v907
    %v915 = vmul.f32 %v36, %v910
    %v916 = vmul.f32 %v909, 0.0
    %v917 = vmul.f32 %v37, %v907
    %v918 = vmul.f32 %v38, %v910
    %924 = vrot.lane.b32.xlu0 %v914, 71
    %v925 = vpop.permute.xlu0 %924
    %926 = vrot.lane.b32.xlu0 %v915, 71
    %v927 = vpop.permute.xlu0 %926
    %928 = vrot.lane.b32.xlu0 %v916, 71
    %v929 = vpop.permute.xlu0 %928
    %930 = vrot.lane.b32.xlu0 %v917, 71
    %v931 = vpop.permute.xlu0 %930
    %932 = vrot.lane.b32.xlu0 %v918, 71
    %v933 = vpop.permute.xlu0 %932
    %v934 = vsel %vm164, %v925, %v927
    %v935 = vsel %vm164, %v927, %v929
    %v936 = vsel %vm164, %v931, %v933
    %v937 = vsel %vm164, %v933, %v929
    %942 = vst [vmem:[#allocation2 + $0x280] sm:$0xff] %v934
    %943 = vst [vmem:[#allocation2 + $0x288] sm:$0xff] %v935
    %944 = vst [vmem:[#allocation2 + $0x290] sm:$0xff] %v936
    %945 = vst [vmem:[#allocation2 + $0x298] sm:$0xff] %v937
    %v946 = vperm.slane %v31, 5
    %v947 = vperm.slane %v32, 5
    %950 = vrot.lane.b32.xlu0 %v946, 63
    %v951 = vpop.permute.xlu0 %950
    %952 = vrot.lane.b32.xlu0 %v947, 63
    %v953 = vpop.permute.xlu0 %952
    %v954 = vsel %vm185, %v951, %v953
    %v958 = vmul.f32 %v35, %v951
    %v959 = vmul.f32 %v36, %v954
    %v960 = vmul.f32 %v953, 0.0
    %v961 = vmul.f32 %v37, %v951
    %v962 = vmul.f32 %v38, %v954
    %968 = vrot.lane.b32.xlu0 %v958, 65
    %v969 = vpop.permute.xlu0 %968
    %970 = vrot.lane.b32.xlu0 %v959, 65
    %v971 = vpop.permute.xlu0 %970
    %972 = vrot.lane.b32.xlu0 %v960, 65
    %v973 = vpop.permute.xlu0 %972
    %974 = vrot.lane.b32.xlu0 %v961, 65
    %v975 = vpop.permute.xlu0 %974
    %976 = vrot.lane.b32.xlu0 %v962, 65
    %v977 = vpop.permute.xlu0 %976
    %v978 = vsel %vm210, %v969, %v971
    %v979 = vsel %vm210, %v971, %v973
    %v980 = vsel %vm210, %v975, %v977
    %v981 = vsel %vm210, %v977, %v973
    %986 = vst [vmem:[#allocation2 + $0x2a0] sm:$0xff] %v978
    %987 = vst [vmem:[#allocation2 + $0x2a8] sm:$0xff] %v979
    %988 = vst [vmem:[#allocation2 + $0x2b0] sm:$0xff] %v980
    %989 = vst [vmem:[#allocation2 + $0x2b8] sm:$0xff] %v981
    %v990 = vperm.slane %v31, 6
    %v991 = vperm.slane %v32, 6
    %994 = vrot.lane.b32.xlu0 %v990, 64
    %v995 = vpop.permute.xlu0 %994
    %996 = vrot.lane.b32.xlu0 %v991, 64
    %v997 = vpop.permute.xlu0 %996
    %v998 = vsel %vm231, %v995, %v997
    %v1002 = vmul.f32 %v35, %v995
    %v1003 = vmul.f32 %v36, %v998
    %v1004 = vmul.f32 %v997, 0.0
    %v1005 = vmul.f32 %v37, %v995
    %v1006 = vmul.f32 %v38, %v998
    %1012 = vrot.lane.b32.xlu0 %v1002, 64
    %v1013 = vpop.permute.xlu0 %1012
    %1014 = vrot.lane.b32.xlu0 %v1003, 64
    %v1015 = vpop.permute.xlu0 %1014
    %1016 = vrot.lane.b32.xlu0 %v1004, 64
    %v1017 = vpop.permute.xlu0 %1016
    %1018 = vrot.lane.b32.xlu0 %v1005, 64
    %v1019 = vpop.permute.xlu0 %1018
    %1020 = vrot.lane.b32.xlu0 %v1006, 64
    %v1021 = vpop.permute.xlu0 %1020
    %v1022 = vsel %vm231, %v1013, %v1015
    %v1023 = vsel %vm231, %v1015, %v1017
    %v1024 = vsel %vm231, %v1019, %v1021
    %v1025 = vsel %vm231, %v1021, %v1017
    %1030 = vst [vmem:[#allocation2 + $0x2c0] sm:$0xff] %v1022
    %1031 = vst [vmem:[#allocation2 + $0x2c8] sm:$0xff] %v1023
    %1032 = vst [vmem:[#allocation2 + $0x2d0] sm:$0xff] %v1024
    %1033 = vst [vmem:[#allocation2 + $0x2d8] sm:$0xff] %v1025
    %v1034 = vperm.slane %v31, 7
    %v1035 = vperm.slane %v32, 7
    %1038 = vrot.lane.b32.xlu0 %v1034, 65
    %v1039 = vpop.permute.xlu0 %1038
    %1040 = vrot.lane.b32.xlu0 %v1035, 65
    %v1041 = vpop.permute.xlu0 %1040
    %v1042 = vsel %vm210, %v1039, %v1041
    %v1046 = vmul.f32 %v35, %v1039
    %v1047 = vmul.f32 %v36, %v1042
    %v1048 = vmul.f32 %v1041, 0.0
    %v1049 = vmul.f32 %v37, %v1039
    %v1050 = vmul.f32 %v38, %v1042
    %1056 = vrot.lane.b32.xlu0 %v1046, 63
    %v1057 = vpop.permute.xlu0 %1056
    %1058 = vrot.lane.b32.xlu0 %v1047, 63
    %v1059 = vpop.permute.xlu0 %1058
    %1060 = vrot.lane.b32.xlu0 %v1048, 63
    %v1061 = vpop.permute.xlu0 %1060
    %1062 = vrot.lane.b32.xlu0 %v1049, 63
    %v1063 = vpop.permute.xlu0 %1062
    %1064 = vrot.lane.b32.xlu0 %v1050, 63
    %v1065 = vpop.permute.xlu0 %1064
    %v1066 = vsel %vm185, %v1057, %v1059
    %v1067 = vsel %vm185, %v1059, %v1061
    %v1068 = vsel %vm185, %v1063, %v1065
    %v1069 = vsel %vm185, %v1065, %v1061
    %1074 = vst [vmem:[#allocation2 + $0x2e0] sm:$0xff] %v1066
    %1075 = vst [vmem:[#allocation2 + $0x2e8] sm:$0xff] %v1067
    %1076 = vst [vmem:[#allocation2 + $0x2f0] sm:$0xff] %v1068
    %1077 = vst [vmem:[#allocation2 + $0x2f8] sm:$0xff] %v1069
    %v1078 = vperm.slane %v33, 0
    %v1079 = vperm.slane %v34, 0
    %1082 = vrot.lane.b32.xlu0 %v1078, 71
    %v1083 = vpop.permute.xlu0 %1082
    %1084 = vrot.lane.b32.xlu0 %v1079, 71
    %v1085 = vpop.permute.xlu0 %1084
    %v1086 = vsel %vm164, %v1083, %v1085
    %v1090 = vmul.f32 %v35, %v1083
    %v1091 = vmul.f32 %v36, %v1086
    %v1092 = vmul.f32 %v1085, 0.0
    %v1093 = vmul.f32 %v37, %v1083
    %v1094 = vmul.f32 %v38, %v1086
    %1100 = vrot.lane.b32.xlu0 %v1090, 57
    %v1101 = vpop.permute.xlu0 %1100
    %1102 = vrot.lane.b32.xlu0 %v1091, 57
    %v1103 = vpop.permute.xlu0 %1102
    %1104 = vrot.lane.b32.xlu0 %v1092, 57
    %v1105 = vpop.permute.xlu0 %1104
    %1106 = vrot.lane.b32.xlu0 %v1093, 57
    %v1107 = vpop.permute.xlu0 %1106
    %1108 = vrot.lane.b32.xlu0 %v1094, 57
    %v1109 = vpop.permute.xlu0 %1108
    %v1110 = vsel %vm139, %v1101, %v1103
    %v1111 = vsel %vm139, %v1103, %v1105
    %v1112 = vsel %vm139, %v1107, %v1109
    %v1113 = vsel %vm139, %v1109, %v1105
    %1118 = vst [vmem:[#allocation2 + $0x300] sm:$0xff] %v1110
    %1119 = vst [vmem:[#allocation2 + $0x308] sm:$0xff] %v1111
    %1120 = vst [vmem:[#allocation2 + $0x310] sm:$0xff] %v1112
    %1121 = vst [vmem:[#allocation2 + $0x318] sm:$0xff] %v1113
    %v1122 = vperm.slane %v33, 1
    %v1123 = vperm.slane %v34, 1
    %1126 = vrot.lane.b32.xlu0 %v1122, 72
    %v1127 = vpop.permute.xlu0 %1126
    %1128 = vrot.lane.b32.xlu0 %v1123, 72
    %v1129 = vpop.permute.xlu0 %1128
    %v1130 = vsel %vm118, %v1127, %v1129
    %v1134 = vmul.f32 %v35, %v1127
    %v1135 = vmul.f32 %v36, %v1130
    %v1136 = vmul.f32 %v1129, 0.0
    %v1137 = vmul.f32 %v37, %v1127
    %v1138 = vmul.f32 %v38, %v1130
    %1144 = vrot.lane.b32.xlu0 %v1134, 56
    %v1145 = vpop.permute.xlu0 %1144
    %1146 = vrot.lane.b32.xlu0 %v1135, 56
    %v1147 = vpop.permute.xlu0 %1146
    %1148 = vrot.lane.b32.xlu0 %v1136, 56
    %v1149 = vpop.permute.xlu0 %1148
    %1150 = vrot.lane.b32.xlu0 %v1137, 56
    %v1151 = vpop.permute.xlu0 %1150
    %1152 = vrot.lane.b32.xlu0 %v1138, 56
    %v1153 = vpop.permute.xlu0 %1152
    %v1154 = vsel %vm93, %v1145, %v1147
    %v1155 = vsel %vm93, %v1147, %v1149
    %v1156 = vsel %vm93, %v1151, %v1153
    %v1157 = vsel %vm93, %v1153, %v1149
    %1162 = vst [vmem:[#allocation2 + $0x320] sm:$0xff] %v1154
    %1163 = vst [vmem:[#allocation2 + $0x328] sm:$0xff] %v1155
    %1164 = vst [vmem:[#allocation2 + $0x330] sm:$0xff] %v1156
    %1165 = vst [vmem:[#allocation2 + $0x338] sm:$0xff] %v1157
    %v1166 = vperm.slane %v33, 2
    %v1167 = vperm.slane %v34, 2
    %1170 = vrot.lane.b32.xlu0 %v1166, 73
    %v1171 = vpop.permute.xlu0 %1170
    %1172 = vrot.lane.b32.xlu0 %v1167, 73
    %v1173 = vpop.permute.xlu0 %1172
    %v1174 = vsel %vm72, %v1171, %v1173
    %v1178 = vmul.f32 %v35, %v1171
    %v1179 = vmul.f32 %v36, %v1174
    %v1180 = vmul.f32 %v1173, 0.0
    %v1181 = vmul.f32 %v37, %v1171
    %v1182 = vmul.f32 %v38, %v1174
    %1188 = vrot.lane.b32.xlu0 %v1178, 55
    %v1189 = vpop.permute.xlu0 %1188
    %1190 = vrot.lane.b32.xlu0 %v1179, 55
    %v1191 = vpop.permute.xlu0 %1190
    %1192 = vrot.lane.b32.xlu0 %v1180, 55
    %v1193 = vpop.permute.xlu0 %1192
    %1194 = vrot.lane.b32.xlu0 %v1181, 55
    %v1195 = vpop.permute.xlu0 %1194
    %1196 = vrot.lane.b32.xlu0 %v1182, 55
    %v1197 = vpop.permute.xlu0 %1196
    %v1198 = vsel %vm47, %v1189, %v1191
    %v1199 = vsel %vm47, %v1191, %v1193
    %v1200 = vsel %vm47, %v1195, %v1197
    %v1201 = vsel %vm47, %v1197, %v1193
    %1206 = vst [vmem:[#allocation2 + $0x340] sm:$0xff] %v1198
    %1207 = vst [vmem:[#allocation2 + $0x348] sm:$0xff] %v1199
    %1208 = vst [vmem:[#allocation2 + $0x350] sm:$0xff] %v1200
    %1209 = vst [vmem:[#allocation2 + $0x358] sm:$0xff] %v1201
    %v1210 = vlaneseq
    %vm1211 = vcmp.ge.s32.totalorder %v1210, 0
    %vm1212 = vcmp.lt.s32.totalorder %v1210, 256
    %vm1213 = vmand %vm1211, %vm1212
    %s1214 = scalar_lea.vmem [#allocation2], 23
    %1215 = vst.msk [vmem:[%s1214] ss:$8 sm:$0x3] %vm1213, 1.0
    %1216 = vst.msk [vmem:[%s1214] ss:$8 sm:$0x0] %vm1213, 1.0
    %v1217 = vld [vmem:[#allocation3] sm:$0xff]
    %v1218 = vld [vmem:[#allocation3 + $0x8] sm:$0xff]
    %v1219 = vld [vmem:[#allocation3 + $0x10] sm:$0xff]
    %v1220 = vld [vmem:[#allocation3 + $0x18] sm:$0xff]
    %v1221 = vld [vmem:[#allocation3 + $0x20] sm:$0xff]
    %v1222 = vld [vmem:[#allocation3 + $0x28] sm:$0xff]
    %v1223 = vld [vmem:[#allocation3 + $0x30] sm:$0xff]
    %v1224 = vld [vmem:[#allocation3 + $0x38] sm:$0xff]
    %v1225 = vld [vmem:[#allocation2] sm:$0xff]
    %v1226 = vld [vmem:[#allocation2 + $0x8] sm:$0xff]
    %v1227 = vld [vmem:[#allocation2 + $0x10] sm:$0xff]
    %v1228 = vld [vmem:[#allocation2 + $0x18] sm:$0xff]
    %v1229 = vld [vmem:[#allocation2 + $0x20] sm:$0xff]
    %v1230 = vld [vmem:[#allocation2 + $0x28] sm:$0xff]
    %v1231 = vld [vmem:[#allocation2 + $0x30] sm:$0xff]
    %v1232 = vld [vmem:[#allocation2 + $0x38] sm:$0xff]
    %v1233 = vld [vmem:[#allocation2 + $0x40] sm:$0xff]
    %v1234 = vld [vmem:[#allocation2 + $0x48] sm:$0xff]
    %v1235 = vld [vmem:[#allocation2 + $0x50] sm:$0xff]
    %v1236 = vld [vmem:[#allocation2 + $0x58] sm:$0xff]
    %v1237 = vld [vmem:[#allocation2 + $0x60] sm:$0xff]
    %v1238 = vld [vmem:[#allocation2 + $0x68] sm:$0xff]
    %v1239 = vld [vmem:[#allocation2 + $0x70] sm:$0xff]
    %v1240 = vld [vmem:[#allocation2 + $0x78] sm:$0xff]
    %v1241 = vld [vmem:[#allocation2 + $0x80] sm:$0xff]
    %v1242 = vld [vmem:[#allocation2 + $0x88] sm:$0xff]
    %v1243 = vld [vmem:[#allocation2 + $0x90] sm:$0xff]
    %v1244 = vld [vmem:[#allocation2 + $0x98] sm:$0xff]
    %v1245 = vld [vmem:[#allocation2 + $0xa0] sm:$0xff]
    %v1246 = vld [vmem:[#allocation2 + $0xa8] sm:$0xff]
    %v1247 = vld [vmem:[#allocation2 + $0xb0] sm:$0xff]
    %v1248 = vld [vmem:[#allocation2 + $0xb8] sm:$0xff]
    %v1249 = vld [vmem:[#allocation2 + $0xc0] sm:$0xff]
    %v1250 = vld [vmem:[#allocation2 + $0xc8] sm:$0xff]
    %v1251 = vld [vmem:[#allocation2 + $0xd0] sm:$0xff]
    %v1252 = vld [vmem:[#allocation2 + $0xd8] sm:$0xff]
    %v1253 = vld [vmem:[#allocation2 + $0xe0] sm:$0xff]
    %v1254 = vld [vmem:[#allocation2 + $0xe8] sm:$0xff]
    %v1255 = vld [vmem:[#allocation2 + $0xf0] sm:$0xff]
    %v1256 = vld [vmem:[#allocation2 + $0xf8] sm:$0xff]
    %v1257 = vld [vmem:[#allocation2 + $0x100] sm:$0xff]
    %v1258 = vld [vmem:[#allocation2 + $0x108] sm:$0xff]
    %v1259 = vld [vmem:[#allocation2 + $0x110] sm:$0xff]
    %v1260 = vld [vmem:[#allocation2 + $0x118] sm:$0xff]
    %v1261 = vld [vmem:[#allocation2 + $0x120] sm:$0xff]
    %v1262 = vld [vmem:[#allocation2 + $0x128] sm:$0xff]
    %v1263 = vld [vmem:[#allocation2 + $0x130] sm:$0xff]
    %v1264 = vld [vmem:[#allocation2 + $0x138] sm:$0xff]
    %v1265 = vld [vmem:[#allocation2 + $0x140] sm:$0xff]
    %v1266 = vld [vmem:[#allocation2 + $0x148] sm:$0xff]
    %v1267 = vld [vmem:[#allocation2 + $0x150] sm:$0xff]
    %v1268 = vld [vmem:[#allocation2 + $0x158] sm:$0xff]
    %v1269 = vld [vmem:[#allocation2 + $0x160] sm:$0xff]
    %v1270 = vld [vmem:[#allocation2 + $0x168] sm:$0xff]
    %v1271 = vld [vmem:[#allocation2 + $0x170] sm:$0xff]
    %v1272 = vld [vmem:[#allocation2 + $0x178] sm:$0xff]
    %v1273 = vld [vmem:[#allocation2 + $0x180] sm:$0xff]
    %v1274 = vld [vmem:[#allocation2 + $0x188] sm:$0xff]
    %v1275 = vld [vmem:[#allocation2 + $0x190] sm:$0xff]
    %v1276 = vld [vmem:[#allocation2 + $0x198] sm:$0xff]
    %v1277 = vld [vmem:[#allocation2 + $0x1a0] sm:$0xff]
    %v1278 = vld [vmem:[#allocation2 + $0x1a8] sm:$0xff]
    %v1279 = vld [vmem:[#allocation2 + $0x1b0] sm:$0xff]
    %v1280 = vld [vmem:[#allocation2 + $0x1b8] sm:$0xff]
    %v1281 = vld [vmem:[#allocation2 + $0x1c0] sm:$0xff]
    %v1282 = vld [vmem:[#allocation2 + $0x1c8] sm:$0xff]
    %v1283 = vld [vmem:[#allocation2 + $0x1d0] sm:$0xff]
    %v1284 = vld [vmem:[#allocation2 + $0x1d8] sm:$0xff]
    %v1285 = vld [vmem:[#allocation2 + $0x1e0] sm:$0xff]
    %v1286 = vld [vmem:[#allocation2 + $0x1e8] sm:$0xff]
    %v1287 = vld [vmem:[#allocation2 + $0x1f0] sm:$0xff]
    %v1288 = vld [vmem:[#allocation2 + $0x1f8] sm:$0xff]
    %v1289 = vld [vmem:[#allocation2 + $0x200] sm:$0xff]
    %v1290 = vld [vmem:[#allocation2 + $0x208] sm:$0xff]
    %v1291 = vld [vmem:[#allocation2 + $0x210] sm:$0xff]
    %v1292 = vld [vmem:[#allocation2 + $0x218] sm:$0xff]
    %v1293 = vld [vmem:[#allocation2 + $0x220] sm:$0xff]
    %v1294 = vld [vmem:[#allocation2 + $0x228] sm:$0xff]
    %v1295 = vld [vmem:[#allocation2 + $0x230] sm:$0xff]
    %v1296 = vld [vmem:[#allocation2 + $0x238] sm:$0xff]
    %v1297 = vld [vmem:[#allocation2 + $0x240] sm:$0xff]
    %v1298 = vld [vmem:[#allocation2 + $0x248] sm:$0xff]
    %v1299 = vld [vmem:[#allocation2 + $0x250] sm:$0xff]
    %v1300 = vld [vmem:[#allocation2 + $0x258] sm:$0xff]
    %v1301 = vld [vmem:[#allocation2 + $0x260] sm:$0xff]
    %v1302 = vld [vmem:[#allocation2 + $0x268] sm:$0xff]
    %v1303 = vld [vmem:[#allocation2 + $0x270] sm:$0xff]
    %v1304 = vld [vmem:[#allocation2 + $0x278] sm:$0xff]
    %v1305 = vld [vmem:[#allocation2 + $0x280] sm:$0xff]
    %v1306 = vld [vmem:[#allocation2 + $0x288] sm:$0xff]
    %v1307 = vld [vmem:[#allocation2 + $0x290] sm:$0xff]
    %v1308 = vld [vmem:[#allocation2 + $0x298] sm:$0xff]
    %v1309 = vld [vmem:[#allocation2 + $0x2a0] sm:$0xff]
    %v1310 = vld [vmem:[#allocation2 + $0x2a8] sm:$0xff]
    %v1311 = vld [vmem:[#allocation2 + $0x2b0] sm:$0xff]
    %v1312 = vld [vmem:[#allocation2 + $0x2b8] sm:$0xff]
    %v1313 = vld [vmem:[#allocation2 + $0x2c0] sm:$0xff]
    %v1314 = vld [vmem:[#allocation2 + $0x2c8] sm:$0xff]
    %v1315 = vld [vmem:[#allocation2 + $0x2d0] sm:$0xff]
    %v1316 = vld [vmem:[#allocation2 + $0x2d8] sm:$0xff]
    %v1317 = vld [vmem:[#allocation2 + $0x2e0] sm:$0xff]
    %v1318 = vld [vmem:[#allocation2 + $0x2e8] sm:$0xff]
    %v1319 = vld [vmem:[#allocation2 + $0x2f0] sm:$0xff]
    %v1320 = vld [vmem:[#allocation2 + $0x2f8] sm:$0xff]
    %v1321 = vld [vmem:[#allocation2 + $0x300] sm:$0xff]
    %v1322 = vld [vmem:[#allocation2 + $0x308] sm:$0xff]
    %v1323 = vld [vmem:[#allocation2 + $0x310] sm:$0xff]
    %v1324 = vld [vmem:[#allocation2 + $0x318] sm:$0xff]
    %v1325 = vld [vmem:[#allocation2 + $0x320] sm:$0xff]
    %v1326 = vld [vmem:[#allocation2 + $0x328] sm:$0xff]
    %v1327 = vld [vmem:[#allocation2 + $0x330] sm:$0xff]
    %v1328 = vld [vmem:[#allocation2 + $0x338] sm:$0xff]
    %v1329 = vld [vmem:[#allocation2 + $0x340] sm:$0xff]
    %v1330 = vld [vmem:[#allocation2 + $0x348] sm:$0xff]
    %v1331 = vld [vmem:[#allocation2 + $0x350] sm:$0xff]
    %v1332 = vld [vmem:[#allocation2 + $0x358] sm:$0xff]
    %vm1333 = vcmask 392192
    %v1335 = vsel %vm1333, %v1220, 0
    %v1338 = vsel %vm1333, %v1224, 0
    %1340 = vmatpush.msra.mxu0 %v1255
    %1341 = vmatpush.msra.mxu0 %v1253
    %1342 = vmatpush.msra.mxu0 %v1251
    %1343 = vmatpush.msra.mxu0 %v1249
    %1344 = vmatpush.msra.mxu0 %v1247
    %1345 = vmatpush.msra.mxu0 %v1245
    %1346 = vmatpush.msra.mxu0 %v1243
    %1347 = vmatpush.msra.mxu0 %v1241
    %1348 = vmatpush.msra.mxu0 %v1239
    %1349 = vmatpush.msra.mxu0 %v1237
    %1350 = vmatpush.msra.mxu0 %v1235
    %1351 = vmatpush.msra.mxu0 %v1233
    %1352 = vmatpush.msra.mxu0 %v1231
    %1353 = vmatpush.msra.mxu0 %v1229
    %1354 = vmatpush.msra.mxu0 %v1227
    %1355 = vmatpush.msra.mxu0 %v1225
    %1356 = vmatmul.f32.gmra.mxu0 %v1217
    %v1357 = vpop.f32.mrf.mxu0
    %v1358 = vadd.f32 0.0, %v1357
    %1359 = vmatmul.f32.gmra.mxu0 %v1221
    %v1360 = vpop.f32.mrf.mxu0
    %v1361 = vadd.f32 0.0, %v1360
    %1362 = vdwg.mxu0
    %1363 = vmatpush.msra.mxu0 %v1287
    %1364 = vmatpush.msra.mxu0 %v1285
    %1365 = vmatpush.msra.mxu0 %v1283
    %1366 = vmatpush.msra.mxu0 %v1281
    %1367 = vmatpush.msra.mxu0 %v1279
    %1368 = vmatpush.msra.mxu0 %v1277
    %1369 = vmatpush.msra.mxu0 %v1275
    %1370 = vmatpush.msra.mxu0 %v1273
    %1371 = vmatpush.msra.mxu0 %v1271
    %1372 = vmatpush.msra.mxu0 %v1269
    %1373 = vmatpush.msra.mxu0 %v1267
    %1374 = vmatpush.msra.mxu0 %v1265
    %1375 = vmatpush.msra.mxu0 %v1263
    %1376 = vmatpush.msra.mxu0 %v1261
    %1377 = vmatpush.msra.mxu0 %v1259
    %1378 = vmatpush.msra.mxu0 %v1257
    %1379 = vmatmul.f32.gmra.mxu0 %v1218
    %v1380 = vpop.f32.mrf.mxu0
    %v1381 = vadd.f32 %v1358, %v1380
    %1382 = vmatmul.f32.gmra.mxu0 %v1222
    %v1383 = vpop.f32.mrf.mxu0
    %v1384 = vadd.f32 %v1361, %v1383
    %1385 = vdwg.mxu0
    %1386 = vmatpush.msra.mxu0 %v1319
    %1387 = vmatpush.msra.mxu0 %v1317
    %1388 = vmatpush.msra.mxu0 %v1315
    %1389 = vmatpush.msra.mxu0 %v1313
    %1390 = vmatpush.msra.mxu0 %v1311
    %1391 = vmatpush.msra.mxu0 %v1309
    %1392 = vmatpush.msra.mxu0 %v1307
    %1393 = vmatpush.msra.mxu0 %v1305
    %1394 = vmatpush.msra.mxu0 %v1303
    %1395 = vmatpush.msra.mxu0 %v1301
    %1396 = vmatpush.msra.mxu0 %v1299
    %1397 = vmatpush.msra.mxu0 %v1297
    %1398 = vmatpush.msra.mxu0 %v1295
    %1399 = vmatpush.msra.mxu0 %v1293
    %1400 = vmatpush.msra.mxu0 %v1291
    %1401 = vmatpush.msra.mxu0 %v1289
    %1402 = vmatmul.f32.gmra.mxu0 %v1219
    %v1403 = vpop.f32.mrf.mxu0
    %v1404 = vadd.f32 %v1381, %v1403
    %1405 = vmatmul.f32.gmra.mxu0 %v1223
    %v1406 = vpop.f32.mrf.mxu0
    %v1407 = vadd.f32 %v1384, %v1406
    %1408 = vdwg.mxu0
    %1409 = vmatpush.msra.mxu0 0.0
    %1410 = vmatpush.msra.mxu0 0.0
    %1411 = vmatpush.msra.mxu0 0.0
    %1412 = vmatpush.msra.mxu0 0.0
    %1413 = vmatpush.msra.mxu0 0.0
    %1414 = vmatpush.msra.mxu0 0.0
    %1415 = vmatpush.msra.mxu0 0.0
    %1416 = vmatpush.msra.mxu0 0.0
    %1417 = vmatpush.msra.mxu0 0.0
    %1418 = vmatpush.msra.mxu0 0.0
    %1419 = vmatpush.msra.mxu0 %v1331
    %1420 = vmatpush.msra.mxu0 %v1329
    %1421 = vmatpush.msra.mxu0 %v1327
    %1422 = vmatpush.msra.mxu0 %v1325
    %1423 = vmatpush.msra.mxu0 %v1323
    %1424 = vmatpush.msra.mxu0 %v1321
    %1425 = vmatmul.f32.gmra.mxu0 %v1335
    %v1426 = vpop.f32.mrf.mxu0
    %v1427 = vadd.f32 %v1404, %v1426
    %1428 = vmatmul.f32.gmra.mxu0 %v1338
    %v1429 = vpop.f32.mrf.mxu0
    %v1430 = vadd.f32 %v1407, %v1429
    %1431 = vdwg.mxu0
    %1432 = vmatpush.msra.mxu0 %v1256
    %1433 = vmatpush.msra.mxu0 %v1254
    %1434 = vmatpush.msra.mxu0 %v1252
    %1435 = vmatpush.msra.mxu0 %v1250
    %1436 = vmatpush.msra.mxu0 %v1248
    %1437 = vmatpush.msra.mxu0 %v1246
    %1438 = vmatpush.msra.mxu0 %v1244
    %1439 = vmatpush.msra.mxu0 %v1242
    %1440 = vmatpush.msra.mxu0 %v1240
    %1441 = vmatpush.msra.mxu0 %v1238
    %1442 = vmatpush.msra.mxu0 %v1236
    %1443 = vmatpush.msra.mxu0 %v1234
    %1444 = vmatpush.msra.mxu0 %v1232
    %1445 = vmatpush.msra.mxu0 %v1230
    %1446 = vmatpush.msra.mxu0 %v1228
    %1447 = vmatpush.msra.mxu0 %v1226
    %1448 = vmatmul.f32.gmra.mxu0 %v1217
    %v1449 = vpop.f32.mrf.mxu0
    %v1450 = vadd.f32 0.0, %v1449
    %1451 = vmatmul.f32.gmra.mxu0 %v1221
    %v1452 = vpop.f32.mrf.mxu0
    %v1453 = vadd.f32 0.0, %v1452
    %1454 = vdwg.mxu0
    %1455 = vmatpush.msra.mxu0 %v1288
    %1456 = vmatpush.msra.mxu0 %v1286
    %1457 = vmatpush.msra.mxu0 %v1284
    %1458 = vmatpush.msra.mxu0 %v1282
    %1459 = vmatpush.msra.mxu0 %v1280
    %1460 = vmatpush.msra.mxu0 %v1278
    %1461 = vmatpush.msra.mxu0 %v1276
    %1462 = vmatpush.msra.mxu0 %v1274
    %1463 = vmatpush.msra.mxu0 %v1272
    %1464 = vmatpush.msra.mxu0 %v1270
    %1465 = vmatpush.msra.mxu0 %v1268
    %1466 = vmatpush.msra.mxu0 %v1266
    %1467 = vmatpush.msra.mxu0 %v1264
    %1468 = vmatpush.msra.mxu0 %v1262
    %1469 = vmatpush.msra.mxu0 %v1260
    %1470 = vmatpush.msra.mxu0 %v1258
    %1471 = vmatmul.f32.gmra.mxu0 %v1218
    %v1472 = vpop.f32.mrf.mxu0
    %v1473 = vadd.f32 %v1450, %v1472
    %1474 = vmatmul.f32.gmra.mxu0 %v1222
    %v1475 = vpop.f32.mrf.mxu0
    %v1476 = vadd.f32 %v1453, %v1475
    %1477 = vdwg.mxu0
    %1478 = vmatpush.msra.mxu0 %v1320
    %1479 = vmatpush.msra.mxu0 %v1318
    %1480 = vmatpush.msra.mxu0 %v1316
    %1481 = vmatpush.msra.mxu0 %v1314
    %1482 = vmatpush.msra.mxu0 %v1312
    %1483 = vmatpush.msra.mxu0 %v1310
    %1484 = vmatpush.msra.mxu0 %v1308
    %1485 = vmatpush.msra.mxu0 %v1306
    %1486 = vmatpush.msra.mxu0 %v1304
    %1487 = vmatpush.msra.mxu0 %v1302
    %1488 = vmatpush.msra.mxu0 %v1300
    %1489 = vmatpush.msra.mxu0 %v1298
    %1490 = vmatpush.msra.mxu0 %v1296
    %1491 = vmatpush.msra.mxu0 %v1294
    %1492 = vmatpush.msra.mxu0 %v1292
    %1493 = vmatpush.msra.mxu0 %v1290
    %1494 = vmatmul.f32.gmra.mxu0 %v1219
    %v1495 = vpop.f32.mrf.mxu0
    %v1496 = vadd.f32 %v1473, %v1495
    %1497 = vmatmul.f32.gmra.mxu0 %v1223
    %v1498 = vpop.f32.mrf.mxu0
    %v1499 = vadd.f32 %v1476, %v1498
    %1500 = vdwg.mxu0
    %1501 = vmatpush.msra.mxu0 0.0
    %1502 = vmatpush.msra.mxu0 0.0
    %1503 = vmatpush.msra.mxu0 0.0
    %1504 = vmatpush.msra.mxu0 0.0
    %1505 = vmatpush.msra.mxu0 0.0
    %1506 = vmatpush.msra.mxu0 0.0
    %1507 = vmatpush.msra.mxu0 0.0
    %1508 = vmatpush.msra.mxu0 0.0
    %1509 = vmatpush.msra.mxu0 0.0
    %1510 = vmatpush.msra.mxu0 0.0
    %1511 = vmatpush.msra.mxu0 %v1332
    %1512 = vmatpush.msra.mxu0 %v1330
    %1513 = vmatpush.msra.mxu0 %v1328
    %1514 = vmatpush.msra.mxu0 %v1326
    %1515 = vmatpush.msra.mxu0 %v1324
    %1516 = vmatpush.msra.mxu0 %v1322
    %1517 = vmatmul.f32.gmra.mxu0 %v1335
    %v1518 = vpop.f32.mrf.mxu0
    %v1519 = vadd.f32 %v1496, %v1518
    %1520 = vmatmul.f32.gmra.mxu0 %v1338
    %v1521 = vpop.f32.mrf.mxu0
    %v1522 = vadd.f32 %v1499, %v1521
    %1523 = vdwg.mxu0
    %v1524 = vmul.f32 %v1427, %v48
    %v1525 = vmul.f32 %v1519, %v46
    %v1526 = vmul.f32 %v1430, %v48
    %v1527 = vmul.f32 %v1522, %v46
    %1532 = vrot.lane.b32.xlu0 %v1524, 73
    %v1533 = vpop.permute.xlu0 %1532
    %1534 = vrot.lane.b32.xlu0 %v1525, 73
    %v1535 = vpop.permute.xlu0 %1534
    %1536 = vrot.lane.b32.xlu0 %v1526, 73
    %v1537 = vpop.permute.xlu0 %1536
    %1538 = vrot.lane.b32.xlu0 %v1527, 73
    %v1539 = vpop.permute.xlu0 %1538
    %v1540 = vsel %vm72, %v63, %v1533
    %v1541 = vsel %vm72, %v1533, %v1535
    %v1542 = vsel %vm72, %v63, %v1537
    %v1543 = vsel %vm72, %v1537, %v1539
    %1548 = vst [vmem:[#allocation2] sm:$0xff] %v1540
    %1549 = vst [vmem:[#allocation2 + $0x8] sm:$0xff] %v1541
    %1550 = vst [vmem:[#allocation2 + $0x10] sm:$0xff] %v1542
    %1551 = vst [vmem:[#allocation2 + $0x18] sm:$0xff] %v1543
    %v1552 = vmul.f32 %v1427, %v94
    %v1553 = vmul.f32 %v1519, %v92
    %v1554 = vmul.f32 %v1430, %v94
    %v1555 = vmul.f32 %v1522, %v92
    %1560 = vrot.lane.b32.xlu0 %v1552, 72
    %v1561 = vpop.permute.xlu0 %1560
    %1562 = vrot.lane.b32.xlu0 %v1553, 72
    %v1563 = vpop.permute.xlu0 %1562
    %1564 = vrot.lane.b32.xlu0 %v1554, 72
    %v1565 = vpop.permute.xlu0 %1564
    %1566 = vrot.lane.b32.xlu0 %v1555, 72
    %v1567 = vpop.permute.xlu0 %1566
    %v1568 = vsel %vm118, %v109, %v1561
    %v1569 = vsel %vm118, %v1561, %v1563
    %v1570 = vsel %vm118, %v109, %v1565
    %v1571 = vsel %vm118, %v1565, %v1567
    %1576 = vst [vmem:[#allocation2 + $0x20] sm:$0xff] %v1568
    %1577 = vst [vmem:[#allocation2 + $0x28] sm:$0xff] %v1569
    %1578 = vst [vmem:[#allocation2 + $0x30] sm:$0xff] %v1570
    %1579 = vst [vmem:[#allocation2 + $0x38] sm:$0xff] %v1571
    %v1580 = vmul.f32 %v1427, %v140
    %v1581 = vmul.f32 %v1519, %v138
    %v1582 = vmul.f32 %v1430, %v140
    %v1583 = vmul.f32 %v1522, %v138
    %1588 = vrot.lane.b32.xlu0 %v1580, 71
    %v1589 = vpop.permute.xlu0 %1588
    %1590 = vrot.lane.b32.xlu0 %v1581, 71
    %v1591 = vpop.permute.xlu0 %1590
    %1592 = vrot.lane.b32.xlu0 %v1582, 71
    %v1593 = vpop.permute.xlu0 %1592
    %1594 = vrot.lane.b32.xlu0 %v1583, 71
    %v1595 = vpop.permute.xlu0 %1594
    %v1596 = vsel %vm164, %v155, %v1589
    %v1597 = vsel %vm164, %v1589, %v1591
    %v1598 = vsel %vm164, %v155, %v1593
    %v1599 = vsel %vm164, %v1593, %v1595
    %1604 = vst [vmem:[#allocation2 + $0x40] sm:$0xff] %v1596
    %1605 = vst [vmem:[#allocation2 + $0x48] sm:$0xff] %v1597
    %1606 = vst [vmem:[#allocation2 + $0x50] sm:$0xff] %v1598
    %1607 = vst [vmem:[#allocation2 + $0x58] sm:$0xff] %v1599
    %v1608 = vmul.f32 %v1427, %v186
    %v1609 = vmul.f32 %v1519, %v184
    %v1610 = vmul.f32 %v1430, %v186
    %v1611 = vmul.f32 %v1522, %v184
    %1616 = vrot.lane.b32.xlu0 %v1608, 65
    %v1617 = vpop.permute.xlu0 %1616
    %1618 = vrot.lane.b32.xlu0 %v1609, 65
    %v1619 = vpop.permute.xlu0 %1618
    %1620 = vrot.lane.b32.xlu0 %v1610, 65
    %v1621 = vpop.permute.xlu0 %1620
    %1622 = vrot.lane.b32.xlu0 %v1611, 65
    %v1623 = vpop.permute.xlu0 %1622
    %v1624 = vsel %vm210, %v201, %v1617
    %v1625 = vsel %vm210, %v1617, %v1619
    %v1626 = vsel %vm210, %v201, %v1621
    %v1627 = vsel %vm210, %v1621, %v1623
    %1632 = vst [vmem:[#allocation2 + $0x60] sm:$0xff] %v1624
    %1633 = vst [vmem:[#allocation2 + $0x68] sm:$0xff] %v1625
    %1634 = vst [vmem:[#allocation2 + $0x70] sm:$0xff] %v1626
    %1635 = vst [vmem:[#allocation2 + $0x78] sm:$0xff] %v1627
    %v1636 = vmul.f32 %v1427, %v232
    %v1637 = vmul.f32 %v1519, %v230
    %v1638 = vmul.f32 %v1430, %v232
    %v1639 = vmul.f32 %v1522, %v230
    %1644 = vrot.lane.b32.xlu0 %v1636, 64
    %v1645 = vpop.permute.xlu0 %1644
    %1646 = vrot.lane.b32.xlu0 %v1637, 64
    %v1647 = vpop.permute.xlu0 %1646
    %1648 = vrot.lane.b32.xlu0 %v1638, 64
    %v1649 = vpop.permute.xlu0 %1648
    %1650 = vrot.lane.b32.xlu0 %v1639, 64
    %v1651 = vpop.permute.xlu0 %1650
    %v1652 = vsel %vm231, %v247, %v1645
    %v1653 = vsel %vm231, %v1645, %v1647
    %v1654 = vsel %vm231, %v247, %v1649
    %v1655 = vsel %vm231, %v1649, %v1651
    %1660 = vst [vmem:[#allocation2 + $0x80] sm:$0xff] %v1652
    %1661 = vst [vmem:[#allocation2 + $0x88] sm:$0xff] %v1653
    %1662 = vst [vmem:[#allocation2 + $0x90] sm:$0xff] %v1654
    %1663 = vst [vmem:[#allocation2 + $0x98] sm:$0xff] %v1655
    %v1664 = vmul.f32 %v1427, %v276
    %v1665 = vmul.f32 %v1519, %v275
    %v1666 = vmul.f32 %v1430, %v276
    %v1667 = vmul.f32 %v1522, %v275
    %1672 = vrot.lane.b32.xlu0 %v1664, 63
    %v1673 = vpop.permute.xlu0 %1672
    %1674 = vrot.lane.b32.xlu0 %v1665, 63
    %v1675 = vpop.permute.xlu0 %1674
    %1676 = vrot.lane.b32.xlu0 %v1666, 63
    %v1677 = vpop.permute.xlu0 %1676
    %1678 = vrot.lane.b32.xlu0 %v1667, 63
    %v1679 = vpop.permute.xlu0 %1678
    %v1680 = vsel %vm185, %v291, %v1673
    %v1681 = vsel %vm185, %v1673, %v1675
    %v1682 = vsel %vm185, %v291, %v1677
    %v1683 = vsel %vm185, %v1677, %v1679
    %1688 = vst [vmem:[#allocation2 + $0xa0] sm:$0xff] %v1680
    %1689 = vst [vmem:[#allocation2 + $0xa8] sm:$0xff] %v1681
    %1690 = vst [vmem:[#allocation2 + $0xb0] sm:$0xff] %v1682
    %1691 = vst [vmem:[#allocation2 + $0xb8] sm:$0xff] %v1683
    %v1692 = vmul.f32 %v1427, %v320
    %v1693 = vmul.f32 %v1519, %v319
    %v1694 = vmul.f32 %v1430, %v320
    %v1695 = vmul.f32 %v1522, %v319
    %1700 = vrot.lane.b32.xlu0 %v1692, 57
    %v1701 = vpop.permute.xlu0 %1700
    %1702 = vrot.lane.b32.xlu0 %v1693, 57
    %v1703 = vpop.permute.xlu0 %1702
    %1704 = vrot.lane.b32.xlu0 %v1694, 57
    %v1705 = vpop.permute.xlu0 %1704
    %1706 = vrot.lane.b32.xlu0 %v1695, 57
    %v1707 = vpop.permute.xlu0 %1706
    %v1708 = vsel %vm139, %v335, %v1701
    %v1709 = vsel %vm139, %v1701, %v1703
    %v1710 = vsel %vm139, %v335, %v1705
    %v1711 = vsel %vm139, %v1705, %v1707
    %1716 = vst [vmem:[#allocation2 + $0xc0] sm:$0xff] %v1708
    %1717 = vst [vmem:[#allocation2 + $0xc8] sm:$0xff] %v1709
    %1718 = vst [vmem:[#allocation2 + $0xd0] sm:$0xff] %v1710
    %1719 = vst [vmem:[#allocation2 + $0xd8] sm:$0xff] %v1711
    %v1720 = vmul.f32 %v1427, %v364
    %v1721 = vmul.f32 %v1519, %v363
    %v1722 = vmul.f32 %v1430, %v364
    %v1723 = vmul.f32 %v1522, %v363
    %1728 = vrot.lane.b32.xlu0 %v1720, 56
    %v1729 = vpop.permute.xlu0 %1728
    %1730 = vrot.lane.b32.xlu0 %v1721, 56
    %v1731 = vpop.permute.xlu0 %1730
    %1732 = vrot.lane.b32.xlu0 %v1722, 56
    %v1733 = vpop.permute.xlu0 %1732
    %1734 = vrot.lane.b32.xlu0 %v1723, 56
    %v1735 = vpop.permute.xlu0 %1734
    %v1736 = vsel %vm93, %v379, %v1729
    %v1737 = vsel %vm93, %v1729, %v1731
    %v1738 = vsel %vm93, %v379, %v1733
    %v1739 = vsel %vm93, %v1733, %v1735
    %1744 = vst [vmem:[#allocation2 + $0xe0] sm:$0xff] %v1736
    %1745 = vst [vmem:[#allocation2 + $0xe8] sm:$0xff] %v1737
    %1746 = vst [vmem:[#allocation2 + $0xf0] sm:$0xff] %v1738
    %1747 = vst [vmem:[#allocation2 + $0xf8] sm:$0xff] %v1739
    %v1748 = vmul.f32 %v1427, %v408
    %v1749 = vmul.f32 %v1519, %v407
    %v1750 = vmul.f32 %v1430, %v408
    %v1751 = vmul.f32 %v1522, %v407
    %1756 = vrot.lane.b32.xlu0 %v1748, 55
    %v1757 = vpop.permute.xlu0 %1756
    %1758 = vrot.lane.b32.xlu0 %v1749, 55
    %v1759 = vpop.permute.xlu0 %1758
    %1760 = vrot.lane.b32.xlu0 %v1750, 55
    %v1761 = vpop.permute.xlu0 %1760
    %1762 = vrot.lane.b32.xlu0 %v1751, 55
    %v1763 = vpop.permute.xlu0 %1762
    %v1764 = vsel %vm47, %v423, %v1757
    %v1765 = vsel %vm47, %v1757, %v1759
    %v1766 = vsel %vm47, %v423, %v1761
    %v1767 = vsel %vm47, %v1761, %v1763
    %1772 = vst [vmem:[#allocation2 + $0x100] sm:$0xff] %v1764
    %1773 = vst [vmem:[#allocation2 + $0x108] sm:$0xff] %v1765
    %1774 = vst [vmem:[#allocation2 + $0x110] sm:$0xff] %v1766
    %1775 = vst [vmem:[#allocation2 + $0x118] sm:$0xff] %v1767
    %v1776 = vmul.f32 %v1427, %v453
    %v1777 = vmul.f32 %v1519, %v451
    %v1778 = vmul.f32 %v1430, %v453
    %v1779 = vmul.f32 %v1522, %v451
    %1784 = vrot.lane.b32.xlu0 %v1776, 9
    %v1785 = vpop.permute.xlu0 %1784
    %1786 = vrot.lane.b32.xlu0 %v1777, 9
    %v1787 = vpop.permute.xlu0 %1786
    %1788 = vrot.lane.b32.xlu0 %v1778, 9
    %v1789 = vpop.permute.xlu0 %1788
    %1790 = vrot.lane.b32.xlu0 %v1779, 9
    %v1791 = vpop.permute.xlu0 %1790
    %v1792 = vsel %vm477, %v468, %v1785
    %v1793 = vsel %vm477, %v1785, %v1787
    %v1794 = vsel %vm477, %v468, %v1789
    %v1795 = vsel %vm477, %v1789, %v1791
    %1800 = vst [vmem:[#allocation2 + $0x120] sm:$0xff] %v1792
    %1801 = vst [vmem:[#allocation2 + $0x128] sm:$0xff] %v1793
    %1802 = vst [vmem:[#allocation2 + $0x130] sm:$0xff] %v1794
    %1803 = vst [vmem:[#allocation2 + $0x138] sm:$0xff] %v1795
    %v1804 = vmul.f32 %v1427, %v499
    %v1805 = vmul.f32 %v1519, %v497
    %v1806 = vmul.f32 %v1430, %v499
    %v1807 = vmul.f32 %v1522, %v497
    %1812 = vrot.lane.b32.xlu0 %v1804, 8
    %v1813 = vpop.permute.xlu0 %1812
    %1814 = vrot.lane.b32.xlu0 %v1805, 8
    %v1815 = vpop.permute.xlu0 %1814
    %1816 = vrot.lane.b32.xlu0 %v1806, 8
    %v1817 = vpop.permute.xlu0 %1816
    %1818 = vrot.lane.b32.xlu0 %v1807, 8
    %v1819 = vpop.permute.xlu0 %1818
    %v1820 = vsel %vm523, %v514, %v1813
    %v1821 = vsel %vm523, %v1813, %v1815
    %v1822 = vsel %vm523, %v514, %v1817
    %v1823 = vsel %vm523, %v1817, %v1819
    %1828 = vst [vmem:[#allocation2 + $0x140] sm:$0xff] %v1820
    %1829 = vst [vmem:[#allocation2 + $0x148] sm:$0xff] %v1821
    %1830 = vst [vmem:[#allocation2 + $0x150] sm:$0xff] %v1822
    %1831 = vst [vmem:[#allocation2 + $0x158] sm:$0xff] %v1823
    %v1832 = vmul.f32 %v1427, %v545
    %v1833 = vmul.f32 %v1519, %v543
    %v1834 = vmul.f32 %v1430, %v545
    %v1835 = vmul.f32 %v1522, %v543
    %1840 = vrot.lane.b32.xlu0 %v1832, 7
    %v1841 = vpop.permute.xlu0 %1840
    %1842 = vrot.lane.b32.xlu0 %v1833, 7
    %v1843 = vpop.permute.xlu0 %1842
    %1844 = vrot.lane.b32.xlu0 %v1834, 7
    %v1845 = vpop.permute.xlu0 %1844
    %1846 = vrot.lane.b32.xlu0 %v1835, 7
    %v1847 = vpop.permute.xlu0 %1846
    %v1848 = vsel %vm569, %v560, %v1841
    %v1849 = vsel %vm569, %v1841, %v1843
    %v1850 = vsel %vm569, %v560, %v1845
    %v1851 = vsel %vm569, %v1845, %v1847
    %1856 = vst [vmem:[#allocation2 + $0x160] sm:$0xff] %v1848
    %1857 = vst [vmem:[#allocation2 + $0x168] sm:$0xff] %v1849
    %1858 = vst [vmem:[#allocation2 + $0x170] sm:$0xff] %v1850
    %1859 = vst [vmem:[#allocation2 + $0x178] sm:$0xff] %v1851
    %v1860 = vmul.f32 %v1427, %v591
    %v1861 = vmul.f32 %v1519, %v589
    %v1862 = vmul.f32 %v1430, %v591
    %v1863 = vmul.f32 %v1522, %v589
    %1868 = vrot.lane.b32.xlu0 %v1860, 1
    %v1869 = vpop.permute.xlu0 %1868
    %1870 = vrot.lane.b32.xlu0 %v1861, 1
    %v1871 = vpop.permute.xlu0 %1870
    %1872 = vrot.lane.b32.xlu0 %v1862, 1
    %v1873 = vpop.permute.xlu0 %1872
    %1874 = vrot.lane.b32.xlu0 %v1863, 1
    %v1875 = vpop.permute.xlu0 %1874
    %v1876 = vsel %vm615, %v606, %v1869
    %v1877 = vsel %vm615, %v1869, %v1871
    %v1878 = vsel %vm615, %v606, %v1873
    %v1879 = vsel %vm615, %v1873, %v1875
    %1884 = vst [vmem:[#allocation2 + $0x180] sm:$0xff] %v1876
    %1885 = vst [vmem:[#allocation2 + $0x188] sm:$0xff] %v1877
    %1886 = vst [vmem:[#allocation2 + $0x190] sm:$0xff] %v1878
    %1887 = vst [vmem:[#allocation2 + $0x198] sm:$0xff] %v1879
    %v1888 = vmul.f32 %v1427, %v628
    %v1889 = vmul.f32 %v1519, %v629
    %v1890 = vmul.f32 %v1430, %v628
    %v1891 = vmul.f32 %v1522, %v629
    %1892 = vst [vmem:[#allocation2 + $0x1a0] sm:$0xff] %v1888
    %1893 = vst [vmem:[#allocation2 + $0x1a8] sm:$0xff] %v1889
    %1894 = vst [vmem:[#allocation2 + $0x1b0] sm:$0xff] %v1890
    %1895 = vst [vmem:[#allocation2 + $0x1b8] sm:$0xff] %v1891
    %v1896 = vmul.f32 %v1427, %v643
    %v1897 = vmul.f32 %v1519, %v646
    %v1898 = vmul.f32 %v1430, %v643
    %v1899 = vmul.f32 %v1522, %v646
    %1904 = vrot.lane.b32.xlu0 %v1896, 127
    %v1905 = vpop.permute.xlu0 %1904
    %1906 = vrot.lane.b32.xlu0 %v1897, 127
    %v1907 = vpop.permute.xlu0 %1906
    %1908 = vrot.lane.b32.xlu0 %v1898, 127
    %v1909 = vpop.permute.xlu0 %1908
    %1910 = vrot.lane.b32.xlu0 %v1899, 127
    %v1911 = vpop.permute.xlu0 %1910
    %v1912 = vsel %vm590, %v1905, %v1907
    %v1913 = vsel %vm590, %v1907, %v665
    %v1914 = vsel %vm590, %v1909, %v1911
    %v1915 = vsel %vm590, %v1911, %v665
    %1920 = vst [vmem:[#allocation2 + $0x1c0] sm:$0xff] %v1912
    %1921 = vst [vmem:[#allocation2 + $0x1c8] sm:$0xff] %v1913
    %1922 = vst [vmem:[#allocation2 + $0x1d0] sm:$0xff] %v1914
    %1923 = vst [vmem:[#allocation2 + $0x1d8] sm:$0xff] %v1915
    %v1924 = vmul.f32 %v1427, %v687
    %v1925 = vmul.f32 %v1519, %v690
    %v1926 = vmul.f32 %v1430, %v687
    %v1927 = vmul.f32 %v1522, %v690
    %1932 = vrot.lane.b32.xlu0 %v1924, 121
    %v1933 = vpop.permute.xlu0 %1932
    %1934 = vrot.lane.b32.xlu0 %v1925, 121
    %v1935 = vpop.permute.xlu0 %1934
    %1936 = vrot.lane.b32.xlu0 %v1926, 121
    %v1937 = vpop.permute.xlu0 %1936
    %1938 = vrot.lane.b32.xlu0 %v1927, 121
    %v1939 = vpop.permute.xlu0 %1938
    %v1940 = vsel %vm544, %v1933, %v1935
    %v1941 = vsel %vm544, %v1935, %v709
    %v1942 = vsel %vm544, %v1937, %v1939
    %v1943 = vsel %vm544, %v1939, %v709
    %1948 = vst [vmem:[#allocation2 + $0x1e0] sm:$0xff] %v1940
    %1949 = vst [vmem:[#allocation2 + $0x1e8] sm:$0xff] %v1941
    %1950 = vst [vmem:[#allocation2 + $0x1f0] sm:$0xff] %v1942
    %1951 = vst [vmem:[#allocation2 + $0x1f8] sm:$0xff] %v1943
    %v1952 = vmul.f32 %v1427, %v731
    %v1953 = vmul.f32 %v1519, %v734
    %v1954 = vmul.f32 %v1430, %v731
    %v1955 = vmul.f32 %v1522, %v734
    %1960 = vrot.lane.b32.xlu0 %v1952, 120
    %v1961 = vpop.permute.xlu0 %1960
    %1962 = vrot.lane.b32.xlu0 %v1953, 120
    %v1963 = vpop.permute.xlu0 %1962
    %1964 = vrot.lane.b32.xlu0 %v1954, 120
    %v1965 = vpop.permute.xlu0 %1964
    %1966 = vrot.lane.b32.xlu0 %v1955, 120
    %v1967 = vpop.permute.xlu0 %1966
    %v1968 = vsel %vm498, %v1961, %v1963
    %v1969 = vsel %vm498, %v1963, %v753
    %v1970 = vsel %vm498, %v1965, %v1967
    %v1971 = vsel %vm498, %v1967, %v753
    %1976 = vst [vmem:[#allocation2 + $0x200] sm:$0xff] %v1968
    %1977 = vst [vmem:[#allocation2 + $0x208] sm:$0xff] %v1969
    %1978 = vst [vmem:[#allocation2 + $0x210] sm:$0xff] %v1970
    %1979 = vst [vmem:[#allocation2 + $0x218] sm:$0xff] %v1971
    %v1980 = vmul.f32 %v1427, %v775
    %v1981 = vmul.f32 %v1519, %v778
    %v1982 = vmul.f32 %v1430, %v775
    %v1983 = vmul.f32 %v1522, %v778
    %1988 = vrot.lane.b32.xlu0 %v1980, 119
    %v1989 = vpop.permute.xlu0 %1988
    %1990 = vrot.lane.b32.xlu0 %v1981, 119
    %v1991 = vpop.permute.xlu0 %1990
    %1992 = vrot.lane.b32.xlu0 %v1982, 119
    %v1993 = vpop.permute.xlu0 %1992
    %1994 = vrot.lane.b32.xlu0 %v1983, 119
    %v1995 = vpop.permute.xlu0 %1994
    %v1996 = vsel %vm452, %v1989, %v1991
    %v1997 = vsel %vm452, %v1991, %v797
    %v1998 = vsel %vm452, %v1993, %v1995
    %v1999 = vsel %vm452, %v1995, %v797
    %2004 = vst [vmem:[#allocation2 + $0x220] sm:$0xff] %v1996
    %2005 = vst [vmem:[#allocation2 + $0x228] sm:$0xff] %v1997
    %2006 = vst [vmem:[#allocation2 + $0x230] sm:$0xff] %v1998
    %2007 = vst [vmem:[#allocation2 + $0x238] sm:$0xff] %v1999
    %v2008 = vmul.f32 %v1427, %v819
    %v2009 = vmul.f32 %v1519, %v822
    %v2010 = vmul.f32 %v1430, %v819
    %v2011 = vmul.f32 %v1522, %v822
    %2016 = vrot.lane.b32.xlu0 %v2008, 73
    %v2017 = vpop.permute.xlu0 %2016
    %2018 = vrot.lane.b32.xlu0 %v2009, 73
    %v2019 = vpop.permute.xlu0 %2018
    %2020 = vrot.lane.b32.xlu0 %v2010, 73
    %v2021 = vpop.permute.xlu0 %2020
    %2022 = vrot.lane.b32.xlu0 %v2011, 73
    %v2023 = vpop.permute.xlu0 %2022
    %v2024 = vsel %vm72, %v2017, %v2019
    %v2025 = vsel %vm72, %v2019, %v841
    %v2026 = vsel %vm72, %v2021, %v2023
    %v2027 = vsel %vm72, %v2023, %v841
    %2032 = vst [vmem:[#allocation2 + $0x240] sm:$0xff] %v2024
    %2033 = vst [vmem:[#allocation2 + $0x248] sm:$0xff] %v2025
    %2034 = vst [vmem:[#allocation2 + $0x250] sm:$0xff] %v2026
    %2035 = vst [vmem:[#allocation2 + $0x258] sm:$0xff] %v2027
    %v2036 = vmul.f32 %v1427, %v863
    %v2037 = vmul.f32 %v1519, %v866
    %v2038 = vmul.f32 %v1430, %v863
    %v2039 = vmul.f32 %v1522, %v866
    %2044 = vrot.lane.b32.xlu0 %v2036, 72
    %v2045 = vpop.permute.xlu0 %2044
    %2046 = vrot.lane.b32.xlu0 %v2037, 72
    %v2047 = vpop.permute.xlu0 %2046
    %2048 = vrot.lane.b32.xlu0 %v2038, 72
    %v2049 = vpop.permute.xlu0 %2048
    %2050 = vrot.lane.b32.xlu0 %v2039, 72
    %v2051 = vpop.permute.xlu0 %2050
    %v2052 = vsel %vm118, %v2045, %v2047
    %v2053 = vsel %vm118, %v2047, %v885
    %v2054 = vsel %vm118, %v2049, %v2051
    %v2055 = vsel %vm118, %v2051, %v885
    %2060 = vst [vmem:[#allocation2 + $0x260] sm:$0xff] %v2052
    %2061 = vst [vmem:[#allocation2 + $0x268] sm:$0xff] %v2053
    %2062 = vst [vmem:[#allocation2 + $0x270] sm:$0xff] %v2054
    %2063 = vst [vmem:[#allocation2 + $0x278] sm:$0xff] %v2055
    %v2064 = vmul.f32 %v1427, %v907
    %v2065 = vmul.f32 %v1519, %v910
    %v2066 = vmul.f32 %v1430, %v907
    %v2067 = vmul.f32 %v1522, %v910
    %2072 = vrot.lane.b32.xlu0 %v2064, 71
    %v2073 = vpop.permute.xlu0 %2072
    %2074 = vrot.lane.b32.xlu0 %v2065, 71
    %v2075 = vpop.permute.xlu0 %2074
    %2076 = vrot.lane.b32.xlu0 %v2066, 71
    %v2077 = vpop.permute.xlu0 %2076
    %2078 = vrot.lane.b32.xlu0 %v2067, 71
    %v2079 = vpop.permute.xlu0 %2078
    %v2080 = vsel %vm164, %v2073, %v2075
    %v2081 = vsel %vm164, %v2075, %v929
    %v2082 = vsel %vm164, %v2077, %v2079
    %v2083 = vsel %vm164, %v2079, %v929
    %2088 = vst [vmem:[#allocation2 + $0x280] sm:$0xff] %v2080
    %2089 = vst [vmem:[#allocation2 + $0x288] sm:$0xff] %v2081
    %2090 = vst [vmem:[#allocation2 + $0x290] sm:$0xff] %v2082
    %2091 = vst [vmem:[#allocation2 + $0x298] sm:$0xff] %v2083
    %v2092 = vmul.f32 %v1427, %v951
    %v2093 = vmul.f32 %v1519, %v954
    %v2094 = vmul.f32 %v1430, %v951
    %v2095 = vmul.f32 %v1522, %v954
    %2100 = vrot.lane.b32.xlu0 %v2092, 65
    %v2101 = vpop.permute.xlu0 %2100
    %2102 = vrot.lane.b32.xlu0 %v2093, 65
    %v2103 = vpop.permute.xlu0 %2102
    %2104 = vrot.lane.b32.xlu0 %v2094, 65
    %v2105 = vpop.permute.xlu0 %2104
    %2106 = vrot.lane.b32.xlu0 %v2095, 65
    %v2107 = vpop.permute.xlu0 %2106
    %v2108 = vsel %vm210, %v2101, %v2103
    %v2109 = vsel %vm210, %v2103, %v973
    %v2110 = vsel %vm210, %v2105, %v2107
    %v2111 = vsel %vm210, %v2107, %v973
    %2116 = vst [vmem:[#allocation2 + $0x2a0] sm:$0xff] %v2108
    %2117 = vst [vmem:[#allocation2 + $0x2a8] sm:$0xff] %v2109
    %2118 = vst [vmem:[#allocation2 + $0x2b0] sm:$0xff] %v2110
    %2119 = vst [vmem:[#allocation2 + $0x2b8] sm:$0xff] %v2111
    %v2120 = vmul.f32 %v1427, %v995
    %v2121 = vmul.f32 %v1519, %v998
    %v2122 = vmul.f32 %v1430, %v995
    %v2123 = vmul.f32 %v1522, %v998
    %2128 = vrot.lane.b32.xlu0 %v2120, 64
    %v2129 = vpop.permute.xlu0 %2128
    %2130 = vrot.lane.b32.xlu0 %v2121, 64
    %v2131 = vpop.permute.xlu0 %2130
    %2132 = vrot.lane.b32.xlu0 %v2122, 64
    %v2133 = vpop.permute.xlu0 %2132
    %2134 = vrot.lane.b32.xlu0 %v2123, 64
    %v2135 = vpop.permute.xlu0 %2134
    %v2136 = vsel %vm231, %v2129, %v2131
    %v2137 = vsel %vm231, %v2131, %v1017
    %v2138 = vsel %vm231, %v2133, %v2135
    %v2139 = vsel %vm231, %v2135, %v1017
    %2144 = vst [vmem:[#allocation2 + $0x2c0] sm:$0xff] %v2136
    %2145 = vst [vmem:[#allocation2 + $0x2c8] sm:$0xff] %v2137
    %2146 = vst [vmem:[#allocation2 + $0x2d0] sm:$0xff] %v2138
    %2147 = vst [vmem:[#allocation2 + $0x2d8] sm:$0xff] %v2139
    %v2148 = vmul.f32 %v1427, %v1039
    %v2149 = vmul.f32 %v1519, %v1042
    %v2150 = vmul.f32 %v1430, %v1039
    %v2151 = vmul.f32 %v1522, %v1042
    %2156 = vrot.lane.b32.xlu0 %v2148, 63
    %v2157 = vpop.permute.xlu0 %2156
    %2158 = vrot.lane.b32.xlu0 %v2149, 63
    %v2159 = vpop.permute.xlu0 %2158
    %2160 = vrot.lane.b32.xlu0 %v2150, 63
    %v2161 = vpop.permute.xlu0 %2160
    %2162 = vrot.lane.b32.xlu0 %v2151, 63
    %v2163 = vpop.permute.xlu0 %2162
    %v2164 = vsel %vm185, %v2157, %v2159
    %v2165 = vsel %vm185, %v2159, %v1061
    %v2166 = vsel %vm185, %v2161, %v2163
    %v2167 = vsel %vm185, %v2163, %v1061
    %2172 = vst [vmem:[#allocation2 + $0x2e0] sm:$0xff] %v2164
    %2173 = vst [vmem:[#allocation2 + $0x2e8] sm:$0xff] %v2165
    %2174 = vst [vmem:[#allocation2 + $0x2f0] sm:$0xff] %v2166
    %2175 = vst [vmem:[#allocation2 + $0x2f8] sm:$0xff] %v2167
    %v2176 = vmul.f32 %v1427, %v1083
    %v2177 = vmul.f32 %v1519, %v1086
    %v2178 = vmul.f32 %v1430, %v1083
    %v2179 = vmul.f32 %v1522, %v1086
    %2184 = vrot.lane.b32.xlu0 %v2176, 57
    %v2185 = vpop.permute.xlu0 %2184
    %2186 = vrot.lane.b32.xlu0 %v2177, 57
    %v2187 = vpop.permute.xlu0 %2186
    %2188 = vrot.lane.b32.xlu0 %v2178, 57
    %v2189 = vpop.permute.xlu0 %2188
    %2190 = vrot.lane.b32.xlu0 %v2179, 57
    %v2191 = vpop.permute.xlu0 %2190
    %v2192 = vsel %vm139, %v2185, %v2187
    %v2193 = vsel %vm139, %v2187, %v1105
    %v2194 = vsel %vm139, %v2189, %v2191
    %v2195 = vsel %vm139, %v2191, %v1105
    %2200 = vst [vmem:[#allocation2 + $0x300] sm:$0xff] %v2192
    %2201 = vst [vmem:[#allocation2 + $0x308] sm:$0xff] %v2193
    %2202 = vst [vmem:[#allocation2 + $0x310] sm:$0xff] %v2194
    %2203 = vst [vmem:[#allocation2 + $0x318] sm:$0xff] %v2195
    %v2204 = vmul.f32 %v1427, %v1127
    %v2205 = vmul.f32 %v1519, %v1130
    %v2206 = vmul.f32 %v1430, %v1127
    %v2207 = vmul.f32 %v1522, %v1130
    %2212 = vrot.lane.b32.xlu0 %v2204, 56
    %v2213 = vpop.permute.xlu0 %2212
    %2214 = vrot.lane.b32.xlu0 %v2205, 56
    %v2215 = vpop.permute.xlu0 %2214
    %2216 = vrot.lane.b32.xlu0 %v2206, 56
    %v2217 = vpop.permute.xlu0 %2216
    %2218 = vrot.lane.b32.xlu0 %v2207, 56
    %v2219 = vpop.permute.xlu0 %2218
    %v2220 = vsel %vm93, %v2213, %v2215
    %v2221 = vsel %vm93, %v2215, %v1149
    %v2222 = vsel %vm93, %v2217, %v2219
    %v2223 = vsel %vm93, %v2219, %v1149
    %2228 = vst [vmem:[#allocation2 + $0x320] sm:$0xff] %v2220
    %2229 = vst [vmem:[#allocation2 + $0x328] sm:$0xff] %v2221
    %2230 = vst [vmem:[#allocation2 + $0x330] sm:$0xff] %v2222
    %2231 = vst [vmem:[#allocation2 + $0x338] sm:$0xff] %v2223
    %v2232 = vmul.f32 %v1427, %v1171
    %v2233 = vmul.f32 %v1519, %v1174
    %v2234 = vmul.f32 %v1430, %v1171
    %v2235 = vmul.f32 %v1522, %v1174
    %2240 = vrot.lane.b32.xlu0 %v2232, 55
    %v2241 = vpop.permute.xlu0 %2240
    %2242 = vrot.lane.b32.xlu0 %v2233, 55
    %v2243 = vpop.permute.xlu0 %2242
    %2244 = vrot.lane.b32.xlu0 %v2234, 55
    %v2245 = vpop.permute.xlu0 %2244
    %2246 = vrot.lane.b32.xlu0 %v2235, 55
    %v2247 = vpop.permute.xlu0 %2246
    %v2248 = vsel %vm47, %v2241, %v2243
    %v2249 = vsel %vm47, %v2243, %v1193
    %v2250 = vsel %vm47, %v2245, %v2247
    %v2251 = vsel %vm47, %v2247, %v1193
    %2256 = vst [vmem:[#allocation2 + $0x340] sm:$0xff] %v2248
    %2257 = vst [vmem:[#allocation2 + $0x348] sm:$0xff] %v2249
    %2258 = vst [vmem:[#allocation2 + $0x350] sm:$0xff] %v2250
    %2259 = vst [vmem:[#allocation2 + $0x358] sm:$0xff] %v2251
    %2260 = vst.msk [vmem:[%s1214] ss:$8 sm:$0x3] %vm1213, 1.0
    %2261 = vst.msk [vmem:[%s1214] ss:$8 sm:$0x0] %vm1213, 1.0
    %v2262 = vld [vmem:[#allocation3 + $0x40] sm:$0xff]
    %v2263 = vld [vmem:[#allocation3 + $0x48] sm:$0xff]
    %v2264 = vld [vmem:[#allocation3 + $0x50] sm:$0xff]
    %v2265 = vld [vmem:[#allocation3 + $0x58] sm:$0xff]
    %v2266 = vld [vmem:[#allocation3 + $0x60] sm:$0xff]
    %v2267 = vld [vmem:[#allocation3 + $0x68] sm:$0xff]
    %v2268 = vld [vmem:[#allocation3 + $0x70] sm:$0xff]
    %v2269 = vld [vmem:[#allocation3 + $0x78] sm:$0xff]
    %v2270 = vld [vmem:[#allocation2] sm:$0xff]
    %v2271 = vld [vmem:[#allocation2 + $0x8] sm:$0xff]
    %v2272 = vld [vmem:[#allocation2 + $0x10] sm:$0xff]
    %v2273 = vld [vmem:[#allocation2 + $0x18] sm:$0xff]
    %v2274 = vld [vmem:[#allocation2 + $0x20] sm:$0xff]
    %v2275 = vld [vmem:[#allocation2 + $0x28] sm:$0xff]
    %v2276 = vld [vmem:[#allocation2 + $0x30] sm:$0xff]
    %v2277 = vld [vmem:[#allocation2 + $0x38] sm:$0xff]
    %v2278 = vld [vmem:[#allocation2 + $0x40] sm:$0xff]
    %v2279 = vld [vmem:[#allocation2 + $0x48] sm:$0xff]
    %v2280 = vld [vmem:[#allocation2 + $0x50] sm:$0xff]
    %v2281 = vld [vmem:[#allocation2 + $0x58] sm:$0xff]
    %v2282 = vld [vmem:[#allocation2 + $0x60] sm:$0xff]
    %v2283 = vld [vmem:[#allocation2 + $0x68] sm:$0xff]
    %v2284 = vld [vmem:[#allocation2 + $0x70] sm:$0xff]
    %v2285 = vld [vmem:[#allocation2 + $0x78] sm:$0xff]
    %v2286 = vld [vmem:[#allocation2 + $0x80] sm:$0xff]
    %v2287 = vld [vmem:[#allocation2 + $0x88] sm:$0xff]
    %v2288 = vld [vmem:[#allocation2 + $0x90] sm:$0xff]
    %v2289 = vld [vmem:[#allocation2 + $0x98] sm:$0xff]
    %v2290 = vld [vmem:[#allocation2 + $0xa0] sm:$0xff]
    %v2291 = vld [vmem:[#allocation2 + $0xa8] sm:$0xff]
    %v2292 = vld [vmem:[#allocation2 + $0xb0] sm:$0xff]
    %v2293 = vld [vmem:[#allocation2 + $0xb8] sm:$0xff]
    %v2294 = vld [vmem:[#allocation2 + $0xc0] sm:$0xff]
    %v2295 = vld [vmem:[#allocation2 + $0xc8] sm:$0xff]
    %v2296 = vld [vmem:[#allocation2 + $0xd0] sm:$0xff]
    %v2297 = vld [vmem:[#allocation2 + $0xd8] sm:$0xff]
    %v2298 = vld [vmem:[#allocation2 + $0xe0] sm:$0xff]
    %v2299 = vld [vmem:[#allocation2 + $0xe8] sm:$0xff]
    %v2300 = vld [vmem:[#allocation2 + $0xf0] sm:$0xff]
    %v2301 = vld [vmem:[#allocation2 + $0xf8] sm:$0xff]
    %v2302 = vld [vmem:[#allocation2 + $0x100] sm:$0xff]
    %v2303 = vld [vmem:[#allocation2 + $0x108] sm:$0xff]
    %v2304 = vld [vmem:[#allocation2 + $0x110] sm:$0xff]
    %v2305 = vld [vmem:[#allocation2 + $0x118] sm:$0xff]
    %v2306 = vld [vmem:[#allocation2 + $0x120] sm:$0xff]
    %v2307 = vld [vmem:[#allocation2 + $0x128] sm:$0xff]
    %v2308 = vld [vmem:[#allocation2 + $0x130] sm:$0xff]
    %v2309 = vld [vmem:[#allocation2 + $0x138] sm:$0xff]
    %v2310 = vld [vmem:[#allocation2 + $0x140] sm:$0xff]
    %v2311 = vld [vmem:[#allocation2 + $0x148] sm:$0xff]
    %v2312 = vld [vmem:[#allocation2 + $0x150] sm:$0xff]
    %v2313 = vld [vmem:[#allocation2 + $0x158] sm:$0xff]
    %v2314 = vld [vmem:[#allocation2 + $0x160] sm:$0xff]
    %v2315 = vld [vmem:[#allocation2 + $0x168] sm:$0xff]
    %v2316 = vld [vmem:[#allocation2 + $0x170] sm:$0xff]
    %v2317 = vld [vmem:[#allocation2 + $0x178] sm:$0xff]
    %v2318 = vld [vmem:[#allocation2 + $0x180] sm:$0xff]
    %v2319 = vld [vmem:[#allocation2 + $0x188] sm:$0xff]
    %v2320 = vld [vmem:[#allocation2 + $0x190] sm:$0xff]
    %v2321 = vld [vmem:[#allocation2 + $0x198] sm:$0xff]
    %v2322 = vld [vmem:[#allocation2 + $0x1a0] sm:$0xff]
    %v2323 = vld [vmem:[#allocation2 + $0x1a8] sm:$0xff]
    %v2324 = vld [vmem:[#allocation2 + $0x1b0] sm:$0xff]
    %v2325 = vld [vmem:[#allocation2 + $0x1b8] sm:$0xff]
    %v2326 = vld [vmem:[#allocation2 + $0x1c0] sm:$0xff]
    %v2327 = vld [vmem:[#allocation2 + $0x1c8] sm:$0xff]
    %v2328 = vld [vmem:[#allocation2 + $0x1d0] sm:$0xff]
    %v2329 = vld [vmem:[#allocation2 + $0x1d8] sm:$0xff]
    %v2330 = vld [vmem:[#allocation2 + $0x1e0] sm:$0xff]
    %v2331 = vld [vmem:[#allocation2 + $0x1e8] sm:$0xff]
    %v2332 = vld [vmem:[#allocation2 + $0x1f0] sm:$0xff]
    %v2333 = vld [vmem:[#allocation2 + $0x1f8] sm:$0xff]
    %v2334 = vld [vmem:[#allocation2 + $0x200] sm:$0xff]
    %v2335 = vld [vmem:[#allocation2 + $0x208] sm:$0xff]
    %v2336 = vld [vmem:[#allocation2 + $0x210] sm:$0xff]
    %v2337 = vld [vmem:[#allocation2 + $0x218] sm:$0xff]
    %v2338 = vld [vmem:[#allocation2 + $0x220] sm:$0xff]
    %v2339 = vld [vmem:[#allocation2 + $0x228] sm:$0xff]
    %v2340 = vld [vmem:[#allocation2 + $0x230] sm:$0xff]
    %v2341 = vld [vmem:[#allocation2 + $0x238] sm:$0xff]
    %v2342 = vld [vmem:[#allocation2 + $0x240] sm:$0xff]
    %v2343 = vld [vmem:[#allocation2 + $0x248] sm:$0xff]
    %v2344 = vld [vmem:[#allocation2 + $0x250] sm:$0xff]
    %v2345 = vld [vmem:[#allocation2 + $0x258] sm:$0xff]
    %v2346 = vld [vmem:[#allocation2 + $0x260] sm:$0xff]
    %v2347 = vld [vmem:[#allocation2 + $0x268] sm:$0xff]
    %v2348 = vld [vmem:[#allocation2 + $0x270] sm:$0xff]
    %v2349 = vld [vmem:[#allocation2 + $0x278] sm:$0xff]
    %v2350 = vld [vmem:[#allocation2 + $0x280] sm:$0xff]
    %v2351 = vld [vmem:[#allocation2 + $0x288] sm:$0xff]
    %v2352 = vld [vmem:[#allocation2 + $0x290] sm:$0xff]
    %v2353 = vld [vmem:[#allocation2 + $0x298] sm:$0xff]
    %v2354 = vld [vmem:[#allocation2 + $0x2a0] sm:$0xff]
    %v2355 = vld [vmem:[#allocation2 + $0x2a8] sm:$0xff]
    %v2356 = vld [vmem:[#allocation2 + $0x2b0] sm:$0xff]
    %v2357 = vld [vmem:[#allocation2 + $0x2b8] sm:$0xff]
    %v2358 = vld [vmem:[#allocation2 + $0x2c0] sm:$0xff]
    %v2359 = vld [vmem:[#allocation2 + $0x2c8] sm:$0xff]
    %v2360 = vld [vmem:[#allocation2 + $0x2d0] sm:$0xff]
    %v2361 = vld [vmem:[#allocation2 + $0x2d8] sm:$0xff]
    %v2362 = vld [vmem:[#allocation2 + $0x2e0] sm:$0xff]
    %v2363 = vld [vmem:[#allocation2 + $0x2e8] sm:$0xff]
    %v2364 = vld [vmem:[#allocation2 + $0x2f0] sm:$0xff]
    %v2365 = vld [vmem:[#allocation2 + $0x2f8] sm:$0xff]
    %v2366 = vld [vmem:[#allocation2 + $0x300] sm:$0xff]
    %v2367 = vld [vmem:[#allocation2 + $0x308] sm:$0xff]
    %v2368 = vld [vmem:[#allocation2 + $0x310] sm:$0xff]
    %v2369 = vld [vmem:[#allocation2 + $0x318] sm:$0xff]
    %v2370 = vld [vmem:[#allocation2 + $0x320] sm:$0xff]
    %v2371 = vld [vmem:[#allocation2 + $0x328] sm:$0xff]
    %v2372 = vld [vmem:[#allocation2 + $0x330] sm:$0xff]
    %v2373 = vld [vmem:[#allocation2 + $0x338] sm:$0xff]
    %v2374 = vld [vmem:[#allocation2 + $0x340] sm:$0xff]
    %v2375 = vld [vmem:[#allocation2 + $0x348] sm:$0xff]
    %v2376 = vld [vmem:[#allocation2 + $0x350] sm:$0xff]
    %v2377 = vld [vmem:[#allocation2 + $0x358] sm:$0xff]
    %v2379 = vsel %vm1333, %v2265, 0
    %v2382 = vsel %vm1333, %v2269, 0
    %2384 = vmatpush.msra.mxu0 %v2300
    %2385 = vmatpush.msra.mxu0 %v2298
    %2386 = vmatpush.msra.mxu0 %v2296
    %2387 = vmatpush.msra.mxu0 %v2294
    %2388 = vmatpush.msra.mxu0 %v2292
    %2389 = vmatpush.msra.mxu0 %v2290
    %2390 = vmatpush.msra.mxu0 %v2288
    %2391 = vmatpush.msra.mxu0 %v2286
    %2392 = vmatpush.msra.mxu0 %v2284
    %2393 = vmatpush.msra.mxu0 %v2282
    %2394 = vmatpush.msra.mxu0 %v2280
    %2395 = vmatpush.msra.mxu0 %v2278
    %2396 = vmatpush.msra.mxu0 %v2276
    %2397 = vmatpush.msra.mxu0 %v2274
    %2398 = vmatpush.msra.mxu0 %v2272
    %2399 = vmatpush.msra.mxu0 %v2270
    %2400 = vmatmul.f32.gmra.mxu0 %v2262
    %v2401 = vpop.f32.mrf.mxu0
    %v2402 = vadd.f32 0.0, %v2401
    %2403 = vmatmul.f32.gmra.mxu0 %v2266
    %v2404 = vpop.f32.mrf.mxu0
    %v2405 = vadd.f32 0.0, %v2404
    %2406 = vdwg.mxu0
    %2407 = vmatpush.msra.mxu0 %v2332
    %2408 = vmatpush.msra.mxu0 %v2330
    %2409 = vmatpush.msra.mxu0 %v2328
    %2410 = vmatpush.msra.mxu0 %v2326
    %2411 = vmatpush.msra.mxu0 %v2324
    %2412 = vmatpush.msra.mxu0 %v2322
    %2413 = vmatpush.msra.mxu0 %v2320
    %2414 = vmatpush.msra.mxu0 %v2318
    %2415 = vmatpush.msra.mxu0 %v2316
    %2416 = vmatpush.msra.mxu0 %v2314
    %2417 = vmatpush.msra.mxu0 %v2312
    %2418 = vmatpush.msra.mxu0 %v2310
    %2419 = vmatpush.msra.mxu0 %v2308
    %2420 = vmatpush.msra.mxu0 %v2306
    %2421 = vmatpush.msra.mxu0 %v2304
    %2422 = vmatpush.msra.mxu0 %v2302
    %2423 = vmatmul.f32.gmra.mxu0 %v2263
    %v2424 = vpop.f32.mrf.mxu0
    %v2425 = vadd.f32 %v2402, %v2424
    %2426 = vmatmul.f32.gmra.mxu0 %v2267
    %v2427 = vpop.f32.mrf.mxu0
    %v2428 = vadd.f32 %v2405, %v2427
    %2429 = vdwg.mxu0
    %2430 = vmatpush.msra.mxu0 %v2364
    %2431 = vmatpush.msra.mxu0 %v2362
    %2432 = vmatpush.msra.mxu0 %v2360
    %2433 = vmatpush.msra.mxu0 %v2358
    %2434 = vmatpush.msra.mxu0 %v2356
    %2435 = vmatpush.msra.mxu0 %v2354
    %2436 = vmatpush.msra.mxu0 %v2352
    %2437 = vmatpush.msra.mxu0 %v2350
    %2438 = vmatpush.msra.mxu0 %v2348
    %2439 = vmatpush.msra.mxu0 %v2346
    %2440 = vmatpush.msra.mxu0 %v2344
    %2441 = vmatpush.msra.mxu0 %v2342
    %2442 = vmatpush.msra.mxu0 %v2340
    %2443 = vmatpush.msra.mxu0 %v2338
    %2444 = vmatpush.msra.mxu0 %v2336
    %2445 = vmatpush.msra.mxu0 %v2334
    %2446 = vmatmul.f32.gmra.mxu0 %v2264
    %v2447 = vpop.f32.mrf.mxu0
    %v2448 = vadd.f32 %v2425, %v2447
    %2449 = vmatmul.f32.gmra.mxu0 %v2268
    %v2450 = vpop.f32.mrf.mxu0
    %v2451 = vadd.f32 %v2428, %v2450
    %2452 = vdwg.mxu0
    %2453 = vmatpush.msra.mxu0 0.0
    %2454 = vmatpush.msra.mxu0 0.0
    %2455 = vmatpush.msra.mxu0 0.0
    %2456 = vmatpush.msra.mxu0 0.0
    %2457 = vmatpush.msra.mxu0 0.0
    %2458 = vmatpush.msra.mxu0 0.0
    %2459 = vmatpush.msra.mxu0 0.0
    %2460 = vmatpush.msra.mxu0 0.0
    %2461 = vmatpush.msra.mxu0 0.0
    %2462 = vmatpush.msra.mxu0 0.0
    %2463 = vmatpush.msra.mxu0 %v2376
    %2464 = vmatpush.msra.mxu0 %v2374
    %2465 = vmatpush.msra.mxu0 %v2372
    %2466 = vmatpush.msra.mxu0 %v2370
    %2467 = vmatpush.msra.mxu0 %v2368
    %2468 = vmatpush.msra.mxu0 %v2366
    %2469 = vmatmul.f32.gmra.mxu0 %v2379
    %v2470 = vpop.f32.mrf.mxu0
    %v2471 = vadd.f32 %v2448, %v2470
    %2472 = vmatmul.f32.gmra.mxu0 %v2382
    %v2473 = vpop.f32.mrf.mxu0
    %v2474 = vadd.f32 %v2451, %v2473
    %2475 = vdwg.mxu0
    %2476 = vmatpush.msra.mxu0 %v2301
    %2477 = vmatpush.msra.mxu0 %v2299
    %2478 = vmatpush.msra.mxu0 %v2297
    %2479 = vmatpush.msra.mxu0 %v2295
    %2480 = vmatpush.msra.mxu0 %v2293
    %2481 = vmatpush.msra.mxu0 %v2291
    %2482 = vmatpush.msra.mxu0 %v2289
    %2483 = vmatpush.msra.mxu0 %v2287
    %2484 = vmatpush.msra.mxu0 %v2285
    %2485 = vmatpush.msra.mxu0 %v2283
    %2486 = vmatpush.msra.mxu0 %v2281
    %2487 = vmatpush.msra.mxu0 %v2279
    %2488 = vmatpush.msra.mxu0 %v2277
    %2489 = vmatpush.msra.mxu0 %v2275
    %2490 = vmatpush.msra.mxu0 %v2273
    %2491 = vmatpush.msra.mxu0 %v2271
    %2492 = vmatmul.f32.gmra.mxu0 %v2262
    %v2493 = vpop.f32.mrf.mxu0
    %v2494 = vadd.f32 0.0, %v2493
    %2495 = vmatmul.f32.gmra.mxu0 %v2266
    %v2496 = vpop.f32.mrf.mxu0
    %v2497 = vadd.f32 0.0, %v2496
    %2498 = vdwg.mxu0
    %2499 = vmatpush.msra.mxu0 %v2333
    %2500 = vmatpush.msra.mxu0 %v2331
    %2501 = vmatpush.msra.mxu0 %v2329
    %2502 = vmatpush.msra.mxu0 %v2327
    %2503 = vmatpush.msra.mxu0 %v2325
    %2504 = vmatpush.msra.mxu0 %v2323
    %2505 = vmatpush.msra.mxu0 %v2321
    %2506 = vmatpush.msra.mxu0 %v2319
    %2507 = vmatpush.msra.mxu0 %v2317
    %2508 = vmatpush.msra.mxu0 %v2315
    %2509 = vmatpush.msra.mxu0 %v2313
    %2510 = vmatpush.msra.mxu0 %v2311
    %2511 = vmatpush.msra.mxu0 %v2309
    %2512 = vmatpush.msra.mxu0 %v2307
    %2513 = vmatpush.msra.mxu0 %v2305
    %2514 = vmatpush.msra.mxu0 %v2303
    %2515 = vmatmul.f32.gmra.mxu0 %v2263
    %v2516 = vpop.f32.mrf.mxu0
    %v2517 = vadd.f32 %v2494, %v2516
    %2518 = vmatmul.f32.gmra.mxu0 %v2267
    %v2519 = vpop.f32.mrf.mxu0
    %v2520 = vadd.f32 %v2497, %v2519
    %2521 = vdwg.mxu0
    %2522 = vmatpush.msra.mxu0 %v2365
    %2523 = vmatpush.msra.mxu0 %v2363
    %2524 = vmatpush.msra.mxu0 %v2361
    %2525 = vmatpush.msra.mxu0 %v2359
    %2526 = vmatpush.msra.mxu0 %v2357
    %2527 = vmatpush.msra.mxu0 %v2355
    %2528 = vmatpush.msra.mxu0 %v2353
    %2529 = vmatpush.msra.mxu0 %v2351
    %2530 = vmatpush.msra.mxu0 %v2349
    %2531 = vmatpush.msra.mxu0 %v2347
    %2532 = vmatpush.msra.mxu0 %v2345
    %2533 = vmatpush.msra.mxu0 %v2343
    %2534 = vmatpush.msra.mxu0 %v2341
    %2535 = vmatpush.msra.mxu0 %v2339
    %2536 = vmatpush.msra.mxu0 %v2337
    %2537 = vmatpush.msra.mxu0 %v2335
    %2538 = vmatmul.f32.gmra.mxu0 %v2264
    %v2539 = vpop.f32.mrf.mxu0
    %v2540 = vadd.f32 %v2517, %v2539
    %2541 = vmatmul.f32.gmra.mxu0 %v2268
    %v2542 = vpop.f32.mrf.mxu0
    %v2543 = vadd.f32 %v2520, %v2542
    %2544 = vdwg.mxu0
    %2545 = vmatpush.msra.mxu0 0.0
    %2546 = vmatpush.msra.mxu0 0.0
    %2547 = vmatpush.msra.mxu0 0.0
    %2548 = vmatpush.msra.mxu0 0.0
    %2549 = vmatpush.msra.mxu0 0.0
    %2550 = vmatpush.msra.mxu0 0.0
    %2551 = vmatpush.msra.mxu0 0.0
    %2552 = vmatpush.msra.mxu0 0.0
    %2553 = vmatpush.msra.mxu0 0.0
    %2554 = vmatpush.msra.mxu0 0.0
    %2555 = vmatpush.msra.mxu0 %v2377
    %2556 = vmatpush.msra.mxu0 %v2375
    %2557 = vmatpush.msra.mxu0 %v2373
    %2558 = vmatpush.msra.mxu0 %v2371
    %2559 = vmatpush.msra.mxu0 %v2369
    %2560 = vmatpush.msra.mxu0 %v2367
    %2561 = vmatmul.f32.gmra.mxu0 %v2379
    %v2562 = vpop.f32.mrf.mxu0
    %v2563 = vadd.f32 %v2540, %v2562
    %2564 = vmatmul.f32.gmra.mxu0 %v2382
    %v2565 = vpop.f32.mrf.mxu0
    %v2566 = vadd.f32 %v2543, %v2565
    %2567 = vdwg.mxu0
    %v2568 = vmul.f32 %v2471, %v48
    %v2569 = vmul.f32 %v2563, %v46
    %v2570 = vmul.f32 %v2474, %v48
    %v2571 = vmul.f32 %v2566, %v46
    %2576 = vrot.lane.b32.xlu0 %v2568, 73
    %v2577 = vpop.permute.xlu0 %2576
    %2578 = vrot.lane.b32.xlu0 %v2569, 73
    %v2579 = vpop.permute.xlu0 %2578
    %2580 = vrot.lane.b32.xlu0 %v2570, 73
    %v2581 = vpop.permute.xlu0 %2580
    %2582 = vrot.lane.b32.xlu0 %v2571, 73
    %v2583 = vpop.permute.xlu0 %2582
    %v2584 = vsel %vm72, %v63, %v2577
    %v2585 = vsel %vm72, %v2577, %v2579
    %v2586 = vsel %vm72, %v63, %v2581
    %v2587 = vsel %vm72, %v2581, %v2583
    %2592 = vst [vmem:[#allocation2] sm:$0xff] %v2584
    %2593 = vst [vmem:[#allocation2 + $0x8] sm:$0xff] %v2585
    %2594 = vst [vmem:[#allocation2 + $0x10] sm:$0xff] %v2586
    %2595 = vst [vmem:[#allocation2 + $0x18] sm:$0xff] %v2587
    %v2596 = vmul.f32 %v2471, %v94
    %v2597 = vmul.f32 %v2563, %v92
    %v2598 = vmul.f32 %v2474, %v94
    %v2599 = vmul.f32 %v2566, %v92
    %2604 = vrot.lane.b32.xlu0 %v2596, 72
    %v2605 = vpop.permute.xlu0 %2604
    %2606 = vrot.lane.b32.xlu0 %v2597, 72
    %v2607 = vpop.permute.xlu0 %2606
    %2608 = vrot.lane.b32.xlu0 %v2598, 72
    %v2609 = vpop.permute.xlu0 %2608
    %2610 = vrot.lane.b32.xlu0 %v2599, 72
    %v2611 = vpop.permute.xlu0 %2610
    %v2612 = vsel %vm118, %v109, %v2605
    %v2613 = vsel %vm118, %v2605, %v2607
    %v2614 = vsel %vm118, %v109, %v2609
    %v2615 = vsel %vm118, %v2609, %v2611
    %2620 = vst [vmem:[#allocation2 + $0x20] sm:$0xff] %v2612
    %2621 = vst [vmem:[#allocation2 + $0x28] sm:$0xff] %v2613
    %2622 = vst [vmem:[#allocation2 + $0x30] sm:$0xff] %v2614
    %2623 = vst [vmem:[#allocation2 + $0x38] sm:$0xff] %v2615
    %v2624 = vmul.f32 %v2471, %v140
    %v2625 = vmul.f32 %v2563, %v138
    %v2626 = vmul.f32 %v2474, %v140
    %v2627 = vmul.f32 %v2566, %v138
    %2632 = vrot.lane.b32.xlu0 %v2624, 71
    %v2633 = vpop.permute.xlu0 %2632
    %2634 = vrot.lane.b32.xlu0 %v2625, 71
    %v2635 = vpop.permute.xlu0 %2634
    %2636 = vrot.lane.b32.xlu0 %v2626, 71
    %v2637 = vpop.permute.xlu0 %2636
    %2638 = vrot.lane.b32.xlu0 %v2627, 71
    %v2639 = vpop.permute.xlu0 %2638
    %v2640 = vsel %vm164, %v155, %v2633
    %v2641 = vsel %vm164, %v2633, %v2635
    %v2642 = vsel %vm164, %v155, %v2637
    %v2643 = vsel %vm164, %v2637, %v2639
    %2648 = vst [vmem:[#allocation2 + $0x40] sm:$0xff] %v2640
    %2649 = vst [vmem:[#allocation2 + $0x48] sm:$0xff] %v2641
    %2650 = vst [vmem:[#allocation2 + $0x50] sm:$0xff] %v2642
    %2651 = vst [vmem:[#allocation2 + $0x58] sm:$0xff] %v2643
    %v2652 = vmul.f32 %v2471, %v186
    %v2653 = vmul.f32 %v2563, %v184
    %v2654 = vmul.f32 %v2474, %v186
    %v2655 = vmul.f32 %v2566, %v184
    %2660 = vrot.lane.b32.xlu0 %v2652, 65
    %v2661 = vpop.permute.xlu0 %2660
    %2662 = vrot.lane.b32.xlu0 %v2653, 65
    %v2663 = vpop.permute.xlu0 %2662
    %2664 = vrot.lane.b32.xlu0 %v2654, 65
    %v2665 = vpop.permute.xlu0 %2664
    %2666 = vrot.lane.b32.xlu0 %v2655, 65
    %v2667 = vpop.permute.xlu0 %2666
    %v2668 = vsel %vm210, %v201, %v2661
    %v2669 = vsel %vm210, %v2661, %v2663
    %v2670 = vsel %vm210, %v201, %v2665
    %v2671 = vsel %vm210, %v2665, %v2667
    %2676 = vst [vmem:[#allocation2 + $0x60] sm:$0xff] %v2668
    %2677 = vst [vmem:[#allocation2 + $0x68] sm:$0xff] %v2669
    %2678 = vst [vmem:[#allocation2 + $0x70] sm:$0xff] %v2670
    %2679 = vst [vmem:[#allocation2 + $0x78] sm:$0xff] %v2671
    %v2680 = vmul.f32 %v2471, %v232
    %v2681 = vmul.f32 %v2563, %v230
    %v2682 = vmul.f32 %v2474, %v232
    %v2683 = vmul.f32 %v2566, %v230
    %2688 = vrot.lane.b32.xlu0 %v2680, 64
    %v2689 = vpop.permute.xlu0 %2688
    %2690 = vrot.lane.b32.xlu0 %v2681, 64
    %v2691 = vpop.permute.xlu0 %2690
    %2692 = vrot.lane.b32.xlu0 %v2682, 64
    %v2693 = vpop.permute.xlu0 %2692
    %2694 = vrot.lane.b32.xlu0 %v2683, 64
    %v2695 = vpop.permute.xlu0 %2694
    %v2696 = vsel %vm231, %v247, %v2689
    %v2697 = vsel %vm231, %v2689, %v2691
    %v2698 = vsel %vm231, %v247, %v2693
    %v2699 = vsel %vm231, %v2693, %v2695
    %2704 = vst [vmem:[#allocation2 + $0x80] sm:$0xff] %v2696
    %2705 = vst [vmem:[#allocation2 + $0x88] sm:$0xff] %v2697
    %2706 = vst [vmem:[#allocation2 + $0x90] sm:$0xff] %v2698
    %2707 = vst [vmem:[#allocation2 + $0x98] sm:$0xff] %v2699
    %v2708 = vmul.f32 %v2471, %v276
    %v2709 = vmul.f32 %v2563, %v275
    %v2710 = vmul.f32 %v2474, %v276
    %v2711 = vmul.f32 %v2566, %v275
    %2716 = vrot.lane.b32.xlu0 %v2708, 63
    %v2717 = vpop.permute.xlu0 %2716
    %2718 = vrot.lane.b32.xlu0 %v2709, 63
    %v2719 = vpop.permute.xlu0 %2718
    %2720 = vrot.lane.b32.xlu0 %v2710, 63
    %v2721 = vpop.permute.xlu0 %2720
    %2722 = vrot.lane.b32.xlu0 %v2711, 63
    %v2723 = vpop.permute.xlu0 %2722
    %v2724 = vsel %vm185, %v291, %v2717
    %v2725 = vsel %vm185, %v2717, %v2719
    %v2726 = vsel %vm185, %v291, %v2721
    %v2727 = vsel %vm185, %v2721, %v2723
    %2732 = vst [vmem:[#allocation2 + $0xa0] sm:$0xff] %v2724
    %2733 = vst [vmem:[#allocation2 + $0xa8] sm:$0xff] %v2725
    %2734 = vst [vmem:[#allocation2 + $0xb0] sm:$0xff] %v2726
    %2735 = vst [vmem:[#allocation2 + $0xb8] sm:$0xff] %v2727
    %v2736 = vmul.f32 %v2471, %v320
    %v2737 = vmul.f32 %v2563, %v319
    %v2738 = vmul.f32 %v2474, %v320
    %v2739 = vmul.f32 %v2566, %v319
    %2744 = vrot.lane.b32.xlu0 %v2736, 57
    %v2745 = vpop.permute.xlu0 %2744
    %2746 = vrot.lane.b32.xlu0 %v2737, 57
    %v2747 = vpop.permute.xlu0 %2746
    %2748 = vrot.lane.b32.xlu0 %v2738, 57
    %v2749 = vpop.permute.xlu0 %2748
    %2750 = vrot.lane.b32.xlu0 %v2739, 57
    %v2751 = vpop.permute.xlu0 %2750
    %v2752 = vsel %vm139, %v335, %v2745
    %v2753 = vsel %vm139, %v2745, %v2747
    %v2754 = vsel %vm139, %v335, %v2749
    %v2755 = vsel %vm139, %v2749, %v2751
    %2760 = vst [vmem:[#allocation2 + $0xc0] sm:$0xff] %v2752
    %2761 = vst [vmem:[#allocation2 + $0xc8] sm:$0xff] %v2753
    %2762 = vst [vmem:[#allocation2 + $0xd0] sm:$0xff] %v2754
    %2763 = vst [vmem:[#allocation2 + $0xd8] sm:$0xff] %v2755
    %v2764 = vmul.f32 %v2471, %v364
    %v2765 = vmul.f32 %v2563, %v363
    %v2766 = vmul.f32 %v2474, %v364
    %v2767 = vmul.f32 %v2566, %v363
    %2772 = vrot.lane.b32.xlu0 %v2764, 56
    %v2773 = vpop.permute.xlu0 %2772
    %2774 = vrot.lane.b32.xlu0 %v2765, 56
    %v2775 = vpop.permute.xlu0 %2774
    %2776 = vrot.lane.b32.xlu0 %v2766, 56
    %v2777 = vpop.permute.xlu0 %2776
    %2778 = vrot.lane.b32.xlu0 %v2767, 56
    %v2779 = vpop.permute.xlu0 %2778
    %v2780 = vsel %vm93, %v379, %v2773
    %v2781 = vsel %vm93, %v2773, %v2775
    %v2782 = vsel %vm93, %v379, %v2777
    %v2783 = vsel %vm93, %v2777, %v2779
    %2788 = vst [vmem:[#allocation2 + $0xe0] sm:$0xff] %v2780
    %2789 = vst [vmem:[#allocation2 + $0xe8] sm:$0xff] %v2781
    %2790 = vst [vmem:[#allocation2 + $0xf0] sm:$0xff] %v2782
    %2791 = vst [vmem:[#allocation2 + $0xf8] sm:$0xff] %v2783
    %v2792 = vmul.f32 %v2471, %v408
    %v2793 = vmul.f32 %v2563, %v407
    %v2794 = vmul.f32 %v2474, %v408
    %v2795 = vmul.f32 %v2566, %v407
    %2800 = vrot.lane.b32.xlu0 %v2792, 55
    %v2801 = vpop.permute.xlu0 %2800
    %2802 = vrot.lane.b32.xlu0 %v2793, 55
    %v2803 = vpop.permute.xlu0 %2802
    %2804 = vrot.lane.b32.xlu0 %v2794, 55
    %v2805 = vpop.permute.xlu0 %2804
    %2806 = vrot.lane.b32.xlu0 %v2795, 55
    %v2807 = vpop.permute.xlu0 %2806
    %v2808 = vsel %vm47, %v423, %v2801
    %v2809 = vsel %vm47, %v2801, %v2803
    %v2810 = vsel %vm47, %v423, %v2805
    %v2811 = vsel %vm47, %v2805, %v2807
    %2816 = vst [vmem:[#allocation2 + $0x100] sm:$0xff] %v2808
    %2817 = vst [vmem:[#allocation2 + $0x108] sm:$0xff] %v2809
    %2818 = vst [vmem:[#allocation2 + $0x110] sm:$0xff] %v2810
    %2819 = vst [vmem:[#allocation2 + $0x118] sm:$0xff] %v2811
    %v2820 = vmul.f32 %v2471, %v453
    %v2821 = vmul.f32 %v2563, %v451
    %v2822 = vmul.f32 %v2474, %v453
    %v2823 = vmul.f32 %v2566, %v451
    %2828 = vrot.lane.b32.xlu0 %v2820, 9
    %v2829 = vpop.permute.xlu0 %2828
    %2830 = vrot.lane.b32.xlu0 %v2821, 9
    %v2831 = vpop.permute.xlu0 %2830
    %2832 = vrot.lane.b32.xlu0 %v2822, 9
    %v2833 = vpop.permute.xlu0 %2832
    %2834 = vrot.lane.b32.xlu0 %v2823, 9
    %v2835 = vpop.permute.xlu0 %2834
    %v2836 = vsel %vm477, %v468, %v2829
    %v2837 = vsel %vm477, %v2829, %v2831
    %v2838 = vsel %vm477, %v468, %v2833
    %v2839 = vsel %vm477, %v2833, %v2835
    %2844 = vst [vmem:[#allocation2 + $0x120] sm:$0xff] %v2836
    %2845 = vst [vmem:[#allocation2 + $0x128] sm:$0xff] %v2837
    %2846 = vst [vmem:[#allocation2 + $0x130] sm:$0xff] %v2838
    %2847 = vst [vmem:[#allocation2 + $0x138] sm:$0xff] %v2839
    %v2848 = vmul.f32 %v2471, %v499
    %v2849 = vmul.f32 %v2563, %v497
    %v2850 = vmul.f32 %v2474, %v499
    %v2851 = vmul.f32 %v2566, %v497
    %2856 = vrot.lane.b32.xlu0 %v2848, 8
    %v2857 = vpop.permute.xlu0 %2856
    %2858 = vrot.lane.b32.xlu0 %v2849, 8
    %v2859 = vpop.permute.xlu0 %2858
    %2860 = vrot.lane.b32.xlu0 %v2850, 8
    %v2861 = vpop.permute.xlu0 %2860
    %2862 = vrot.lane.b32.xlu0 %v2851, 8
    %v2863 = vpop.permute.xlu0 %2862
    %v2864 = vsel %vm523, %v514, %v2857
    %v2865 = vsel %vm523, %v2857, %v2859
    %v2866 = vsel %vm523, %v514, %v2861
    %v2867 = vsel %vm523, %v2861, %v2863
    %2872 = vst [vmem:[#allocation2 + $0x140] sm:$0xff] %v2864
    %2873 = vst [vmem:[#allocation2 + $0x148] sm:$0xff] %v2865
    %2874 = vst [vmem:[#allocation2 + $0x150] sm:$0xff] %v2866
    %2875 = vst [vmem:[#allocation2 + $0x158] sm:$0xff] %v2867
    %v2876 = vmul.f32 %v2471, %v545
    %v2877 = vmul.f32 %v2563, %v543
    %v2878 = vmul.f32 %v2474, %v545
    %v2879 = vmul.f32 %v2566, %v543
    %2884 = vrot.lane.b32.xlu0 %v2876, 7
    %v2885 = vpop.permute.xlu0 %2884
    %2886 = vrot.lane.b32.xlu0 %v2877, 7
    %v2887 = vpop.permute.xlu0 %2886
    %2888 = vrot.lane.b32.xlu0 %v2878, 7
    %v2889 = vpop.permute.xlu0 %2888
    %2890 = vrot.lane.b32.xlu0 %v2879, 7
    %v2891 = vpop.permute.xlu0 %2890
    %v2892 = vsel %vm569, %v560, %v2885
    %v2893 = vsel %vm569, %v2885, %v2887
    %v2894 = vsel %vm569, %v560, %v2889
    %v2895 = vsel %vm569, %v2889, %v2891
    %2900 = vst [vmem:[#allocation2 + $0x160] sm:$0xff] %v2892
    %2901 = vst [vmem:[#allocation2 + $0x168] sm:$0xff] %v2893
    %2902 = vst [vmem:[#allocation2 + $0x170] sm:$0xff] %v2894
    %2903 = vst [vmem:[#allocation2 + $0x178] sm:$0xff] %v2895
    %v2904 = vmul.f32 %v2471, %v591
    %v2905 = vmul.f32 %v2563, %v589
    %v2906 = vmul.f32 %v2474, %v591
    %v2907 = vmul.f32 %v2566, %v589
    %2912 = vrot.lane.b32.xlu0 %v2904, 1
    %v2913 = vpop.permute.xlu0 %2912
    %2914 = vrot.lane.b32.xlu0 %v2905, 1
    %v2915 = vpop.permute.xlu0 %2914
    %2916 = vrot.lane.b32.xlu0 %v2906, 1
    %v2917 = vpop.permute.xlu0 %2916
    %2918 = vrot.lane.b32.xlu0 %v2907, 1
    %v2919 = vpop.permute.xlu0 %2918
    %v2920 = vsel %vm615, %v606, %v2913
    %v2921 = vsel %vm615, %v2913, %v2915
    %v2922 = vsel %vm615, %v606, %v2917
    %v2923 = vsel %vm615, %v2917, %v2919
    %2928 = vst [vmem:[#allocation2 + $0x180] sm:$0xff] %v2920
    %2929 = vst [vmem:[#allocation2 + $0x188] sm:$0xff] %v2921
    %2930 = vst [vmem:[#allocation2 + $0x190] sm:$0xff] %v2922
    %2931 = vst [vmem:[#allocation2 + $0x198] sm:$0xff] %v2923
    %v2932 = vmul.f32 %v2471, %v628
    %v2933 = vmul.f32 %v2563, %v629
    %v2934 = vmul.f32 %v2474, %v628
    %v2935 = vmul.f32 %v2566, %v629
    %2936 = vst [vmem:[#allocation2 + $0x1a0] sm:$0xff] %v2932
    %2937 = vst [vmem:[#allocation2 + $0x1a8] sm:$0xff] %v2933
    %2938 = vst [vmem:[#allocation2 + $0x1b0] sm:$0xff] %v2934
    %2939 = vst [vmem:[#allocation2 + $0x1b8] sm:$0xff] %v2935
    %v2940 = vmul.f32 %v2471, %v643
    %v2941 = vmul.f32 %v2563, %v646
    %v2942 = vmul.f32 %v2474, %v643
    %v2943 = vmul.f32 %v2566, %v646
    %2948 = vrot.lane.b32.xlu0 %v2940, 127
    %v2949 = vpop.permute.xlu0 %2948
    %2950 = vrot.lane.b32.xlu0 %v2941, 127
    %v2951 = vpop.permute.xlu0 %2950
    %2952 = vrot.lane.b32.xlu0 %v2942, 127
    %v2953 = vpop.permute.xlu0 %2952
    %2954 = vrot.lane.b32.xlu0 %v2943, 127
    %v2955 = vpop.permute.xlu0 %2954
    %v2956 = vsel %vm590, %v2949, %v2951
    %v2957 = vsel %vm590, %v2951, %v665
    %v2958 = vsel %vm590, %v2953, %v2955
    %v2959 = vsel %vm590, %v2955, %v665
    %2964 = vst [vmem:[#allocation2 + $0x1c0] sm:$0xff] %v2956
    %2965 = vst [vmem:[#allocation2 + $0x1c8] sm:$0xff] %v2957
    %2966 = vst [vmem:[#allocation2 + $0x1d0] sm:$0xff] %v2958
    %2967 = vst [vmem:[#allocation2 + $0x1d8] sm:$0xff] %v2959
    %v2968 = vmul.f32 %v2471, %v687
    %v2969 = vmul.f32 %v2563, %v690
    %v2970 = vmul.f32 %v2474, %v687
    %v2971 = vmul.f32 %v2566, %v690
    %2976 = vrot.lane.b32.xlu0 %v2968, 121
    %v2977 = vpop.permute.xlu0 %2976
    %2978 = vrot.lane.b32.xlu0 %v2969, 121
    %v2979 = vpop.permute.xlu0 %2978
    %2980 = vrot.lane.b32.xlu0 %v2970, 121
    %v2981 = vpop.permute.xlu0 %2980
    %2982 = vrot.lane.b32.xlu0 %v2971, 121
    %v2983 = vpop.permute.xlu0 %2982
    %v2984 = vsel %vm544, %v2977, %v2979
    %v2985 = vsel %vm544, %v2979, %v709
    %v2986 = vsel %vm544, %v2981, %v2983
    %v2987 = vsel %vm544, %v2983, %v709
    %2992 = vst [vmem:[#allocation2 + $0x1e0] sm:$0xff] %v2984
    %2993 = vst [vmem:[#allocation2 + $0x1e8] sm:$0xff] %v2985
    %2994 = vst [vmem:[#allocation2 + $0x1f0] sm:$0xff] %v2986
    %2995 = vst [vmem:[#allocation2 + $0x1f8] sm:$0xff] %v2987
    %v2996 = vmul.f32 %v2471, %v731
    %v2997 = vmul.f32 %v2563, %v734
    %v2998 = vmul.f32 %v2474, %v731
    %v2999 = vmul.f32 %v2566, %v734
    %3004 = vrot.lane.b32.xlu0 %v2996, 120
    %v3005 = vpop.permute.xlu0 %3004
    %3006 = vrot.lane.b32.xlu0 %v2997, 120
    %v3007 = vpop.permute.xlu0 %3006
    %3008 = vrot.lane.b32.xlu0 %v2998, 120
    %v3009 = vpop.permute.xlu0 %3008
    %3010 = vrot.lane.b32.xlu0 %v2999, 120
    %v3011 = vpop.permute.xlu0 %3010
    %v3012 = vsel %vm498, %v3005, %v3007
    %v3013 = vsel %vm498, %v3007, %v753
    %v3014 = vsel %vm498, %v3009, %v3011
    %v3015 = vsel %vm498, %v3011, %v753
    %3020 = vst [vmem:[#allocation2 + $0x200] sm:$0xff] %v3012
    %3021 = vst [vmem:[#allocation2 + $0x208] sm:$0xff] %v3013
    %3022 = vst [vmem:[#allocation2 + $0x210] sm:$0xff] %v3014
    %3023 = vst [vmem:[#allocation2 + $0x218] sm:$0xff] %v3015
    %v3024 = vmul.f32 %v2471, %v775
    %v3025 = vmul.f32 %v2563, %v778
    %v3026 = vmul.f32 %v2474, %v775
    %v3027 = vmul.f32 %v2566, %v778
    %3032 = vrot.lane.b32.xlu0 %v3024, 119
    %v3033 = vpop.permute.xlu0 %3032
    %3034 = vrot.lane.b32.xlu0 %v3025, 119
    %v3035 = vpop.permute.xlu0 %3034
    %3036 = vrot.lane.b32.xlu0 %v3026, 119
    %v3037 = vpop.permute.xlu0 %3036
    %3038 = vrot.lane.b32.xlu0 %v3027, 119
    %v3039 = vpop.permute.xlu0 %3038
    %v3040 = vsel %vm452, %v3033, %v3035
    %v3041 = vsel %vm452, %v3035, %v797
    %v3042 = vsel %vm452, %v3037, %v3039
    %v3043 = vsel %vm452, %v3039, %v797
    %3048 = vst [vmem:[#allocation2 + $0x220] sm:$0xff] %v3040
    %3049 = vst [vmem:[#allocation2 + $0x228] sm:$0xff] %v3041
    %3050 = vst [vmem:[#allocation2 + $0x230] sm:$0xff] %v3042
    %3051 = vst [vmem:[#allocation2 + $0x238] sm:$0xff] %v3043
    %v3052 = vmul.f32 %v2471, %v819
    %v3053 = vmul.f32 %v2563, %v822
    %v3054 = vmul.f32 %v2474, %v819
    %v3055 = vmul.f32 %v2566, %v822
    %3060 = vrot.lane.b32.xlu0 %v3052, 73
    %v3061 = vpop.permute.xlu0 %3060
    %3062 = vrot.lane.b32.xlu0 %v3053, 73
    %v3063 = vpop.permute.xlu0 %3062
    %3064 = vrot.lane.b32.xlu0 %v3054, 73
    %v3065 = vpop.permute.xlu0 %3064
    %3066 = vrot.lane.b32.xlu0 %v3055, 73
    %v3067 = vpop.permute.xlu0 %3066
    %v3068 = vsel %vm72, %v3061, %v3063
    %v3069 = vsel %vm72, %v3063, %v841
    %v3070 = vsel %vm72, %v3065, %v3067
    %v3071 = vsel %vm72, %v3067, %v841
    %3076 = vst [vmem:[#allocation2 + $0x240] sm:$0xff] %v3068
    %3077 = vst [vmem:[#allocation2 + $0x248] sm:$0xff] %v3069
    %3078 = vst [vmem:[#allocation2 + $0x250] sm:$0xff] %v3070
    %3079 = vst [vmem:[#allocation2 + $0x258] sm:$0xff] %v3071
    %v3080 = vmul.f32 %v2471, %v863
    %v3081 = vmul.f32 %v2563, %v866
    %v3082 = vmul.f32 %v2474, %v863
    %v3083 = vmul.f32 %v2566, %v866
    %3088 = vrot.lane.b32.xlu0 %v3080, 72
    %v3089 = vpop.permute.xlu0 %3088
    %3090 = vrot.lane.b32.xlu0 %v3081, 72
    %v3091 = vpop.permute.xlu0 %3090
    %3092 = vrot.lane.b32.xlu0 %v3082, 72
    %v3093 = vpop.permute.xlu0 %3092
    %3094 = vrot.lane.b32.xlu0 %v3083, 72
    %v3095 = vpop.permute.xlu0 %3094
    %v3096 = vsel %vm118, %v3089, %v3091
    %v3097 = vsel %vm118, %v3091, %v885
    %v3098 = vsel %vm118, %v3093, %v3095
    %v3099 = vsel %vm118, %v3095, %v885
    %3104 = vst [vmem:[#allocation2 + $0x260] sm:$0xff] %v3096
    %3105 = vst [vmem:[#allocation2 + $0x268] sm:$0xff] %v3097
    %3106 = vst [vmem:[#allocation2 + $0x270] sm:$0xff] %v3098
    %3107 = vst [vmem:[#allocation2 + $0x278] sm:$0xff] %v3099
    %v3108 = vmul.f32 %v2471, %v907
    %v3109 = vmul.f32 %v2563, %v910
    %v3110 = vmul.f32 %v2474, %v907
    %v3111 = vmul.f32 %v2566, %v910
    %3116 = vrot.lane.b32.xlu0 %v3108, 71
    %v3117 = vpop.permute.xlu0 %3116
    %3118 = vrot.lane.b32.xlu0 %v3109, 71
    %v3119 = vpop.permute.xlu0 %3118
    %3120 = vrot.lane.b32.xlu0 %v3110, 71
    %v3121 = vpop.permute.xlu0 %3120
    %3122 = vrot.lane.b32.xlu0 %v3111, 71
    %v3123 = vpop.permute.xlu0 %3122
    %v3124 = vsel %vm164, %v3117, %v3119
    %v3125 = vsel %vm164, %v3119, %v929
    %v3126 = vsel %vm164, %v3121, %v3123
    %v3127 = vsel %vm164, %v3123, %v929
    %3132 = vst [vmem:[#allocation2 + $0x280] sm:$0xff] %v3124
    %3133 = vst [vmem:[#allocation2 + $0x288] sm:$0xff] %v3125
    %3134 = vst [vmem:[#allocation2 + $0x290] sm:$0xff] %v3126
    %3135 = vst [vmem:[#allocation2 + $0x298] sm:$0xff] %v3127
    %v3136 = vmul.f32 %v2471, %v951
    %v3137 = vmul.f32 %v2563, %v954
    %v3138 = vmul.f32 %v2474, %v951
    %v3139 = vmul.f32 %v2566, %v954
    %3144 = vrot.lane.b32.xlu0 %v3136, 65
    %v3145 = vpop.permute.xlu0 %3144
    %3146 = vrot.lane.b32.xlu0 %v3137, 65
    %v3147 = vpop.permute.xlu0 %3146
    %3148 = vrot.lane.b32.xlu0 %v3138, 65
    %v3149 = vpop.permute.xlu0 %3148
    %3150 = vrot.lane.b32.xlu0 %v3139, 65
    %v3151 = vpop.permute.xlu0 %3150
    %v3152 = vsel %vm210, %v3145, %v3147
    %v3153 = vsel %vm210, %v3147, %v973
    %v3154 = vsel %vm210, %v3149, %v3151
    %v3155 = vsel %vm210, %v3151, %v973
    %3160 = vst [vmem:[#allocation2 + $0x2a0] sm:$0xff] %v3152
    %3161 = vst [vmem:[#allocation2 + $0x2a8] sm:$0xff] %v3153
    %3162 = vst [vmem:[#allocation2 + $0x2b0] sm:$0xff] %v3154
    %3163 = vst [vmem:[#allocation2 + $0x2b8] sm:$0xff] %v3155
    %v3164 = vmul.f32 %v2471, %v995
    %v3165 = vmul.f32 %v2563, %v998
    %v3166 = vmul.f32 %v2474, %v995
    %v3167 = vmul.f32 %v2566, %v998
    %3172 = vrot.lane.b32.xlu0 %v3164, 64
    %v3173 = vpop.permute.xlu0 %3172
    %3174 = vrot.lane.b32.xlu0 %v3165, 64
    %v3175 = vpop.permute.xlu0 %3174
    %3176 = vrot.lane.b32.xlu0 %v3166, 64
    %v3177 = vpop.permute.xlu0 %3176
    %3178 = vrot.lane.b32.xlu0 %v3167, 64
    %v3179 = vpop.permute.xlu0 %3178
    %v3180 = vsel %vm231, %v3173, %v3175
    %v3181 = vsel %vm231, %v3175, %v1017
    %v3182 = vsel %vm231, %v3177, %v3179
    %v3183 = vsel %vm231, %v3179, %v1017
    %3188 = vst [vmem:[#allocation2 + $0x2c0] sm:$0xff] %v3180
    %3189 = vst [vmem:[#allocation2 + $0x2c8] sm:$0xff] %v3181
    %3190 = vst [vmem:[#allocation2 + $0x2d0] sm:$0xff] %v3182
    %3191 = vst [vmem:[#allocation2 + $0x2d8] sm:$0xff] %v3183
    %v3192 = vmul.f32 %v2471, %v1039
    %v3193 = vmul.f32 %v2563, %v1042
    %v3194 = vmul.f32 %v2474, %v1039
    %v3195 = vmul.f32 %v2566, %v1042
    %3200 = vrot.lane.b32.xlu0 %v3192, 63
    %v3201 = vpop.permute.xlu0 %3200
    %3202 = vrot.lane.b32.xlu0 %v3193, 63
    %v3203 = vpop.permute.xlu0 %3202
    %3204 = vrot.lane.b32.xlu0 %v3194, 63
    %v3205 = vpop.permute.xlu0 %3204
    %3206 = vrot.lane.b32.xlu0 %v3195, 63
    %v3207 = vpop.permute.xlu0 %3206
    %v3208 = vsel %vm185, %v3201, %v3203
    %v3209 = vsel %vm185, %v3203, %v1061
    %v3210 = vsel %vm185, %v3205, %v3207
    %v3211 = vsel %vm185, %v3207, %v1061
    %3216 = vst [vmem:[#allocation2 + $0x2e0] sm:$0xff] %v3208
    %3217 = vst [vmem:[#allocation2 + $0x2e8] sm:$0xff] %v3209
    %3218 = vst [vmem:[#allocation2 + $0x2f0] sm:$0xff] %v3210
    %3219 = vst [vmem:[#allocation2 + $0x2f8] sm:$0xff] %v3211
    %v3220 = vmul.f32 %v2471, %v1083
    %v3221 = vmul.f32 %v2563, %v1086
    %v3222 = vmul.f32 %v2474, %v1083
    %v3223 = vmul.f32 %v2566, %v1086
    %3228 = vrot.lane.b32.xlu0 %v3220, 57
    %v3229 = vpop.permute.xlu0 %3228
    %3230 = vrot.lane.b32.xlu0 %v3221, 57
    %v3231 = vpop.permute.xlu0 %3230
    %3232 = vrot.lane.b32.xlu0 %v3222, 57
    %v3233 = vpop.permute.xlu0 %3232
    %3234 = vrot.lane.b32.xlu0 %v3223, 57
    %v3235 = vpop.permute.xlu0 %3234
    %v3236 = vsel %vm139, %v3229, %v3231
    %v3237 = vsel %vm139, %v3231, %v1105
    %v3238 = vsel %vm139, %v3233, %v3235
    %v3239 = vsel %vm139, %v3235, %v1105
    %3244 = vst [vmem:[#allocation2 + $0x300] sm:$0xff] %v3236
    %3245 = vst [vmem:[#allocation2 + $0x308] sm:$0xff] %v3237
    %3246 = vst [vmem:[#allocation2 + $0x310] sm:$0xff] %v3238
    %3247 = vst [vmem:[#allocation2 + $0x318] sm:$0xff] %v3239
    %v3248 = vmul.f32 %v2471, %v1127
    %v3249 = vmul.f32 %v2563, %v1130
    %v3250 = vmul.f32 %v2474, %v1127
    %v3251 = vmul.f32 %v2566, %v1130
    %3256 = vrot.lane.b32.xlu0 %v3248, 56
    %v3257 = vpop.permute.xlu0 %3256
    %3258 = vrot.lane.b32.xlu0 %v3249, 56
    %v3259 = vpop.permute.xlu0 %3258
    %3260 = vrot.lane.b32.xlu0 %v3250, 56
    %v3261 = vpop.permute.xlu0 %3260
    %3262 = vrot.lane.b32.xlu0 %v3251, 56
    %v3263 = vpop.permute.xlu0 %3262
    %v3264 = vsel %vm93, %v3257, %v3259
    %v3265 = vsel %vm93, %v3259, %v1149
    %v3266 = vsel %vm93, %v3261, %v3263
    %v3267 = vsel %vm93, %v3263, %v1149
    %3272 = vst [vmem:[#allocation2 + $0x320] sm:$0xff] %v3264
    %3273 = vst [vmem:[#allocation2 + $0x328] sm:$0xff] %v3265
    %3274 = vst [vmem:[#allocation2 + $0x330] sm:$0xff] %v3266
    %3275 = vst [vmem:[#allocation2 + $0x338] sm:$0xff] %v3267
    %v3276 = vmul.f32 %v2471, %v1171
    %v3277 = vmul.f32 %v2563, %v1174
    %v3278 = vmul.f32 %v2474, %v1171
    %v3279 = vmul.f32 %v2566, %v1174
    %3284 = vrot.lane.b32.xlu0 %v3276, 55
    %v3285 = vpop.permute.xlu0 %3284
    %3286 = vrot.lane.b32.xlu0 %v3277, 55
    %v3287 = vpop.permute.xlu0 %3286
    %3288 = vrot.lane.b32.xlu0 %v3278, 55
    %v3289 = vpop.permute.xlu0 %3288
    %3290 = vrot.lane.b32.xlu0 %v3279, 55
    %v3291 = vpop.permute.xlu0 %3290
    %v3292 = vsel %vm47, %v3285, %v3287
    %v3293 = vsel %vm47, %v3287, %v1193
    %v3294 = vsel %vm47, %v3289, %v3291
    %v3295 = vsel %vm47, %v3291, %v1193
    %3300 = vst [vmem:[#allocation2 + $0x340] sm:$0xff] %v3292
    %3301 = vst [vmem:[#allocation2 + $0x348] sm:$0xff] %v3293
    %3302 = vst [vmem:[#allocation2 + $0x350] sm:$0xff] %v3294
    %3303 = vst [vmem:[#allocation2 + $0x358] sm:$0xff] %v3295
    %s3304 = scalar_lea.vmem [#allocation3], 128
    %v3305 = vld [vmem:[%s3304] ss:$8 sm:$0xf]
    %v3306 = vld [vmem:[#allocation2] sm:$0xff]
    %v3307 = vld [vmem:[#allocation2 + $0x8] sm:$0xff]
    %v3308 = vld [vmem:[#allocation2 + $0x10] sm:$0xff]
    %v3309 = vld [vmem:[#allocation2 + $0x18] sm:$0xff]
    %v3310 = vld [vmem:[#allocation2 + $0x20] sm:$0xff]
    %v3311 = vld [vmem:[#allocation2 + $0x28] sm:$0xff]
    %v3312 = vld [vmem:[#allocation2 + $0x30] sm:$0xff]
    %v3313 = vld [vmem:[#allocation2 + $0x38] sm:$0xff]
    %v3314 = vld [vmem:[#allocation2 + $0x40] sm:$0xff]
    %v3315 = vld [vmem:[#allocation2 + $0x48] sm:$0xff]
    %v3316 = vld [vmem:[#allocation2 + $0x50] sm:$0xff]
    %v3317 = vld [vmem:[#allocation2 + $0x58] sm:$0xff]
    %v3318 = vld [vmem:[#allocation2 + $0x60] sm:$0xff]
    %v3319 = vld [vmem:[#allocation2 + $0x68] sm:$0xff]
    %v3320 = vld [vmem:[#allocation2 + $0x70] sm:$0xff]
    %v3321 = vld [vmem:[#allocation2 + $0x78] sm:$0xff]
    %v3322 = vld [vmem:[#allocation2 + $0x80] sm:$0xff]
    %v3323 = vld [vmem:[#allocation2 + $0x88] sm:$0xff]
    %v3324 = vld [vmem:[#allocation2 + $0x90] sm:$0xff]
    %v3325 = vld [vmem:[#allocation2 + $0x98] sm:$0xff]
    %v3326 = vld [vmem:[#allocation2 + $0xa0] sm:$0xff]
    %v3327 = vld [vmem:[#allocation2 + $0xa8] sm:$0xff]
    %v3328 = vld [vmem:[#allocation2 + $0xb0] sm:$0xff]
    %v3329 = vld [vmem:[#allocation2 + $0xb8] sm:$0xff]
    %v3330 = vld [vmem:[#allocation2 + $0xc0] sm:$0xff]
    %v3331 = vld [vmem:[#allocation2 + $0xc8] sm:$0xff]
    %v3332 = vld [vmem:[#allocation2 + $0xd0] sm:$0xff]
    %v3333 = vld [vmem:[#allocation2 + $0xd8] sm:$0xff]
    %v3334 = vld [vmem:[#allocation2 + $0xe0] sm:$0xff]
    %v3335 = vld [vmem:[#allocation2 + $0xe8] sm:$0xff]
    %v3336 = vld [vmem:[#allocation2 + $0xf0] sm:$0xff]
    %v3337 = vld [vmem:[#allocation2 + $0xf8] sm:$0xff]
    %v3338 = vld [vmem:[#allocation2 + $0x100] sm:$0xff]
    %v3339 = vld [vmem:[#allocation2 + $0x108] sm:$0xff]
    %v3340 = vld [vmem:[#allocation2 + $0x110] sm:$0xff]
    %v3341 = vld [vmem:[#allocation2 + $0x118] sm:$0xff]
    %v3342 = vld [vmem:[#allocation2 + $0x120] sm:$0xff]
    %v3343 = vld [vmem:[#allocation2 + $0x128] sm:$0xff]
    %v3344 = vld [vmem:[#allocation2 + $0x130] sm:$0xff]
    %v3345 = vld [vmem:[#allocation2 + $0x138] sm:$0xff]
    %v3346 = vld [vmem:[#allocation2 + $0x140] sm:$0xff]
    %v3347 = vld [vmem:[#allocation2 + $0x148] sm:$0xff]
    %v3348 = vld [vmem:[#allocation2 + $0x150] sm:$0xff]
    %v3349 = vld [vmem:[#allocation2 + $0x158] sm:$0xff]
    %v3350 = vld [vmem:[#allocation2 + $0x160] sm:$0xff]
    %v3351 = vld [vmem:[#allocation2 + $0x168] sm:$0xff]
    %v3352 = vld [vmem:[#allocation2 + $0x170] sm:$0xff]
    %v3353 = vld [vmem:[#allocation2 + $0x178] sm:$0xff]
    %v3354 = vld [vmem:[#allocation2 + $0x180] sm:$0xff]
    %v3355 = vld [vmem:[#allocation2 + $0x188] sm:$0xff]
    %v3356 = vld [vmem:[#allocation2 + $0x190] sm:$0xff]
    %v3357 = vld [vmem:[#allocation2 + $0x198] sm:$0xff]
    %v3358 = vld [vmem:[#allocation2 + $0x1a0] sm:$0xff]
    %v3359 = vld [vmem:[#allocation2 + $0x1a8] sm:$0xff]
    %v3360 = vld [vmem:[#allocation2 + $0x1b0] sm:$0xff]
    %v3361 = vld [vmem:[#allocation2 + $0x1b8] sm:$0xff]
    %v3362 = vld [vmem:[#allocation2 + $0x1c0] sm:$0xff]
    %v3363 = vld [vmem:[#allocation2 + $0x1c8] sm:$0xff]
    %v3364 = vld [vmem:[#allocation2 + $0x1d0] sm:$0xff]
    %v3365 = vld [vmem:[#allocation2 + $0x1d8] sm:$0xff]
    %v3366 = vld [vmem:[#allocation2 + $0x1e0] sm:$0xff]
    %v3367 = vld [vmem:[#allocation2 + $0x1e8] sm:$0xff]
    %v3368 = vld [vmem:[#allocation2 + $0x1f0] sm:$0xff]
    %v3369 = vld [vmem:[#allocation2 + $0x1f8] sm:$0xff]
    %v3370 = vld [vmem:[#allocation2 + $0x200] sm:$0xff]
    %v3371 = vld [vmem:[#allocation2 + $0x208] sm:$0xff]
    %v3372 = vld [vmem:[#allocation2 + $0x210] sm:$0xff]
    %v3373 = vld [vmem:[#allocation2 + $0x218] sm:$0xff]
    %v3374 = vld [vmem:[#allocation2 + $0x220] sm:$0xff]
    %v3375 = vld [vmem:[#allocation2 + $0x228] sm:$0xff]
    %v3376 = vld [vmem:[#allocation2 + $0x230] sm:$0xff]
    %v3377 = vld [vmem:[#allocation2 + $0x238] sm:$0xff]
    %v3378 = vld [vmem:[#allocation2 + $0x240] sm:$0xff]
    %v3379 = vld [vmem:[#allocation2 + $0x248] sm:$0xff]
    %v3380 = vld [vmem:[#allocation2 + $0x250] sm:$0xff]
    %v3381 = vld [vmem:[#allocation2 + $0x258] sm:$0xff]
    %v3382 = vld [vmem:[#allocation2 + $0x260] sm:$0xff]
    %v3383 = vld [vmem:[#allocation2 + $0x268] sm:$0xff]
    %v3384 = vld [vmem:[#allocation2 + $0x270] sm:$0xff]
    %v3385 = vld [vmem:[#allocation2 + $0x278] sm:$0xff]
    %v3386 = vld [vmem:[#allocation2 + $0x280] sm:$0xff]
    %v3387 = vld [vmem:[#allocation2 + $0x288] sm:$0xff]
    %v3388 = vld [vmem:[#allocation2 + $0x290] sm:$0xff]
    %v3389 = vld [vmem:[#allocation2 + $0x298] sm:$0xff]
    %v3390 = vld [vmem:[#allocation2 + $0x2a0] sm:$0xff]
    %v3391 = vld [vmem:[#allocation2 + $0x2a8] sm:$0xff]
    %v3392 = vld [vmem:[#allocation2 + $0x2b0] sm:$0xff]
    %v3393 = vld [vmem:[#allocation2 + $0x2b8] sm:$0xff]
    %v3394 = vld [vmem:[#allocation2 + $0x2c0] sm:$0xff]
    %v3395 = vld [vmem:[#allocation2 + $0x2c8] sm:$0xff]
    %v3396 = vld [vmem:[#allocation2 + $0x2d0] sm:$0xff]
    %v3397 = vld [vmem:[#allocation2 + $0x2d8] sm:$0xff]
    %v3398 = vld [vmem:[#allocation2 + $0x2e0] sm:$0xff]
    %v3399 = vld [vmem:[#allocation2 + $0x2e8] sm:$0xff]
    %v3400 = vld [vmem:[#allocation2 + $0x2f0] sm:$0xff]
    %v3401 = vld [vmem:[#allocation2 + $0x2f8] sm:$0xff]
    %v3402 = vld [vmem:[#allocation2 + $0x300] sm:$0xff]
    %v3403 = vld [vmem:[#allocation2 + $0x308] sm:$0xff]
    %v3404 = vld [vmem:[#allocation2 + $0x310] sm:$0xff]
    %v3405 = vld [vmem:[#allocation2 + $0x318] sm:$0xff]
    %v3406 = vld [vmem:[#allocation2 + $0x320] sm:$0xff]
    %v3407 = vld [vmem:[#allocation2 + $0x328] sm:$0xff]
    %v3408 = vld [vmem:[#allocation2 + $0x330] sm:$0xff]
    %v3409 = vld [vmem:[#allocation2 + $0x338] sm:$0xff]
    %v3410 = vld [vmem:[#allocation2 + $0x340] sm:$0xff]
    %v3411 = vld [vmem:[#allocation2 + $0x348] sm:$0xff]
    %v3412 = vld [vmem:[#allocation2 + $0x350] sm:$0xff]
    %v3413 = vld [vmem:[#allocation2 + $0x358] sm:$0xff]
    %v3415 = vperm.slane %v3305, 0
    %v3416 = vperm.slane %v3305, 1
    %v3417 = vperm.slane %v3305, 2
    %v3418 = vperm.slane %v3305, 3
    %v3422 = vsel %vm1333, %v3418, 0
    %3424 = vmatpush.msra.mxu0 %v3336
    %3425 = vmatpush.msra.mxu0 %v3334
    %3426 = vmatpush.msra.mxu0 %v3332
    %3427 = vmatpush.msra.mxu0 %v3330
    %3428 = vmatpush.msra.mxu0 %v3328
    %3429 = vmatpush.msra.mxu0 %v3326
    %3430 = vmatpush.msra.mxu0 %v3324
    %3431 = vmatpush.msra.mxu0 %v3322
    %3432 = vmatpush.msra.mxu0 %v3320
    %3433 = vmatpush.msra.mxu0 %v3318
    %3434 = vmatpush.msra.mxu0 %v3316
    %3435 = vmatpush.msra.mxu0 %v3314
    %3436 = vmatpush.msra.mxu0 %v3312
    %3437 = vmatpush.msra.mxu0 %v3310
    %3438 = vmatpush.msra.mxu0 %v3308
    %3439 = vmatpush.msra.mxu0 %v3306
    %3440 = vmatmul.f32.gmra.mxu0 %v3415
    %v3441 = vpop.f32.mrf.mxu0
    %v3442 = vadd.f32 0.0, %v3441
    %3443 = vdwg.mxu0
    %3444 = vmatpush.msra.mxu0 %v3368
    %3445 = vmatpush.msra.mxu0 %v3366
    %3446 = vmatpush.msra.mxu0 %v3364
    %3447 = vmatpush.msra.mxu0 %v3362
    %3448 = vmatpush.msra.mxu0 %v3360
    %3449 = vmatpush.msra.mxu0 %v3358
    %3450 = vmatpush.msra.mxu0 %v3356
    %3451 = vmatpush.msra.mxu0 %v3354
    %3452 = vmatpush.msra.mxu0 %v3352
    %3453 = vmatpush.msra.mxu0 %v3350
    %3454 = vmatpush.msra.mxu0 %v3348
    %3455 = vmatpush.msra.mxu0 %v3346
    %3456 = vmatpush.msra.mxu0 %v3344
    %3457 = vmatpush.msra.mxu0 %v3342
    %3458 = vmatpush.msra.mxu0 %v3340
    %3459 = vmatpush.msra.mxu0 %v3338
    %3460 = vmatmul.f32.gmra.mxu0 %v3416
    %v3461 = vpop.f32.mrf.mxu0
    %v3462 = vadd.f32 %v3442, %v3461
    %3463 = vdwg.mxu0
    %3464 = vmatpush.msra.mxu0 %v3400
    %3465 = vmatpush.msra.mxu0 %v3398
    %3466 = vmatpush.msra.mxu0 %v3396
    %3467 = vmatpush.msra.mxu0 %v3394
    %3468 = vmatpush.msra.mxu0 %v3392
    %3469 = vmatpush.msra.mxu0 %v3390
    %3470 = vmatpush.msra.mxu0 %v3388
    %3471 = vmatpush.msra.mxu0 %v3386
    %3472 = vmatpush.msra.mxu0 %v3384
    %3473 = vmatpush.msra.mxu0 %v3382
    %3474 = vmatpush.msra.mxu0 %v3380
    %3475 = vmatpush.msra.mxu0 %v3378
    %3476 = vmatpush.msra.mxu0 %v3376
    %3477 = vmatpush.msra.mxu0 %v3374
    %3478 = vmatpush.msra.mxu0 %v3372
    %3479 = vmatpush.msra.mxu0 %v3370
    %3480 = vmatmul.f32.gmra.mxu0 %v3417
    %v3481 = vpop.f32.mrf.mxu0
    %v3482 = vadd.f32 %v3462, %v3481
    %3483 = vdwg.mxu0
    %3484 = vmatpush.msra.mxu0 0.0
    %3485 = vmatpush.msra.mxu0 0.0
    %3486 = vmatpush.msra.mxu0 0.0
    %3487 = vmatpush.msra.mxu0 0.0
    %3488 = vmatpush.msra.mxu0 0.0
    %3489 = vmatpush.msra.mxu0 0.0
    %3490 = vmatpush.msra.mxu0 0.0
    %3491 = vmatpush.msra.mxu0 0.0
    %3492 = vmatpush.msra.mxu0 0.0
    %3493 = vmatpush.msra.mxu0 0.0
    %3494 = vmatpush.msra.mxu0 %v3412
    %3495 = vmatpush.msra.mxu0 %v3410
    %3496 = vmatpush.msra.mxu0 %v3408
    %3497 = vmatpush.msra.mxu0 %v3406
    %3498 = vmatpush.msra.mxu0 %v3404
    %3499 = vmatpush.msra.mxu0 %v3402
    %3500 = vmatmul.f32.gmra.mxu0 %v3422
    %v3501 = vpop.f32.mrf.mxu0
    %v3502 = vadd.f32 %v3482, %v3501
    %3503 = vdwg.mxu0
    %3504 = vmatpush.msra.mxu0 %v3337
    %3505 = vmatpush.msra.mxu0 %v3335
    %3506 = vmatpush.msra.mxu0 %v3333
    %3507 = vmatpush.msra.mxu0 %v3331
    %3508 = vmatpush.msra.mxu0 %v3329
    %3509 = vmatpush.msra.mxu0 %v3327
    %3510 = vmatpush.msra.mxu0 %v3325
    %3511 = vmatpush.msra.mxu0 %v3323
    %3512 = vmatpush.msra.mxu0 %v3321
    %3513 = vmatpush.msra.mxu0 %v3319
    %3514 = vmatpush.msra.mxu0 %v3317
    %3515 = vmatpush.msra.mxu0 %v3315
    %3516 = vmatpush.msra.mxu0 %v3313
    %3517 = vmatpush.msra.mxu0 %v3311
    %3518 = vmatpush.msra.mxu0 %v3309
    %3519 = vmatpush.msra.mxu0 %v3307
    %3520 = vmatmul.f32.gmra.mxu0 %v3415
    %v3521 = vpop.f32.mrf.mxu0
    %v3522 = vadd.f32 0.0, %v3521
    %3523 = vdwg.mxu0
    %3524 = vmatpush.msra.mxu0 %v3369
    %3525 = vmatpush.msra.mxu0 %v3367
    %3526 = vmatpush.msra.mxu0 %v3365
    %3527 = vmatpush.msra.mxu0 %v3363
    %3528 = vmatpush.msra.mxu0 %v3361
    %3529 = vmatpush.msra.mxu0 %v3359
    %3530 = vmatpush.msra.mxu0 %v3357
    %3531 = vmatpush.msra.mxu0 %v3355
    %3532 = vmatpush.msra.mxu0 %v3353
    %3533 = vmatpush.msra.mxu0 %v3351
    %3534 = vmatpush.msra.mxu0 %v3349
    %3535 = vmatpush.msra.mxu0 %v3347
    %3536 = vmatpush.msra.mxu0 %v3345
    %3537 = vmatpush.msra.mxu0 %v3343
    %3538 = vmatpush.msra.mxu0 %v3341
    %3539 = vmatpush.msra.mxu0 %v3339
    %3540 = vmatmul.f32.gmra.mxu0 %v3416
    %v3541 = vpop.f32.mrf.mxu0
    %v3542 = vadd.f32 %v3522, %v3541
    %3543 = vdwg.mxu0
    %3544 = vmatpush.msra.mxu0 %v3401
    %3545 = vmatpush.msra.mxu0 %v3399
    %3546 = vmatpush.msra.mxu0 %v3397
    %3547 = vmatpush.msra.mxu0 %v3395
    %3548 = vmatpush.msra.mxu0 %v3393
    %3549 = vmatpush.msra.mxu0 %v3391
    %3550 = vmatpush.msra.mxu0 %v3389
    %3551 = vmatpush.msra.mxu0 %v3387
    %3552 = vmatpush.msra.mxu0 %v3385
    %3553 = vmatpush.msra.mxu0 %v3383
    %3554 = vmatpush.msra.mxu0 %v3381
    %3555 = vmatpush.msra.mxu0 %v3379
    %3556 = vmatpush.msra.mxu0 %v3377
    %3557 = vmatpush.msra.mxu0 %v3375
    %3558 = vmatpush.msra.mxu0 %v3373
    %3559 = vmatpush.msra.mxu0 %v3371
    %3560 = vmatmul.f32.gmra.mxu0 %v3417
    %v3561 = vpop.f32.mrf.mxu0
    %v3562 = vadd.f32 %v3542, %v3561
    %3563 = vdwg.mxu0
    %3564 = vmatpush.msra.mxu0 0.0
    %3565 = vmatpush.msra.mxu0 0.0
    %3566 = vmatpush.msra.mxu0 0.0
    %3567 = vmatpush.msra.mxu0 0.0
    %3568 = vmatpush.msra.mxu0 0.0
    %3569 = vmatpush.msra.mxu0 0.0
    %3570 = vmatpush.msra.mxu0 0.0
    %3571 = vmatpush.msra.mxu0 0.0
    %3572 = vmatpush.msra.mxu0 0.0
    %3573 = vmatpush.msra.mxu0 0.0
    %3574 = vmatpush.msra.mxu0 %v3413
    %3575 = vmatpush.msra.mxu0 %v3411
    %3576 = vmatpush.msra.mxu0 %v3409
    %3577 = vmatpush.msra.mxu0 %v3407
    %3578 = vmatpush.msra.mxu0 %v3405
    %3579 = vmatpush.msra.mxu0 %v3403
    %3580 = vmatmul.f32.gmra.mxu0 %v3422
    %v3581 = vpop.f32.mrf.mxu0
    %v3582 = vadd.f32 %v3562, %v3581
    %3583 = vdwg.mxu0
    %s3584 = scalar_lea.vmem [#allocation3], 160
    %v3585 = vld [vmem:[%s3584] ss:$8 sm:$0x3]
    %v3587 = vperm.slane %v3585, 0
    %v3588 = vperm.slane %v3585, 1
    %v3591 = vmul.f32 %v3502, %v3587
    %v3592 = vmul.f32 %v3582, %v3588
    %3594 = vrot.lane.b32.xlu0 %v3591, 64
    %v3595 = vpop.permute.xlu0 %3594
    %v3597 = vadd.f32 %v3591, %v3595
    %v3598 = vadd.f32 %v3597, %v3592
    %3600 = vrot.lane.b32.xlu0 %v3592, 64
    %v3601 = vpop.permute.xlu0 %3600
    %v3603 = vadd.f32 %v3598, %v3601
    %v3604 = vld [vmem:[#allocation3 + $0xa2] ss:$0 sm:$0xff]
    %v3605 = vadd.f32 %v3603, %v3604
    %3607 = vrot.lane.b32.xlu0 %v3605, 64
    %v3608 = vpop.permute.xlu0 %3607
    %v3610 = vsel %vm231, 0.0, %v3608
    %v3611 = vld [vmem:[#allocation3 + $0x140] sm:$0x3]
    %v3612 = vperm.slane %v3610, 0
    %3614 = vrot.lane.b32.xlu0 %v3612, 73
    %v3615 = vpop.permute.xlu0 %3614
    %v3617 = vmul.f32 %v3611, %v3615
    %v3618 = vadd.f32 %v3617, 0.0
    %v3619 = vld [vmem:[#allocation3 + $0x140] sm:$0xc]
    %3620 = vrot.lane.b32.xlu0 %v3612, 72
    %v3621 = vpop.permute.xlu0 %3620
    %v3623 = vmul.f32 %v3619, %v3621
    %v3625 = vrot.slane %v3623, 2
    %v3627 = vadd.f32 %v3618, %v3625
    %v3628 = vld [vmem:[#allocation3 + $0x140] sm:$0x30]
    %3629 = vrot.lane.b32.xlu0 %v3612, 71
    %v3630 = vpop.permute.xlu0 %3629
    %v3632 = vmul.f32 %v3628, %v3630
    %v3634 = vrot.slane %v3632, 4
    %v3636 = vadd.f32 %v3627, %v3634
    %v3637 = vld [vmem:[#allocation3 + $0x140] sm:$0xc0]
    %3638 = vrot.lane.b32.xlu0 %v3612, 65
    %v3639 = vpop.permute.xlu0 %3638
    %v3641 = vmul.f32 %v3637, %v3639
    %v3643 = vrot.slane %v3641, 6
    %v3645 = vadd.f32 %v3636, %v3643
    %v3646 = vld [vmem:[#allocation3 + $0x160] sm:$0x3]
    %3647 = vrot.lane.b32.xlu0 %v3612, 64
    %v3648 = vpop.permute.xlu0 %3647
    %v3650 = vmul.f32 %v3646, %v3648
    %v3651 = vadd.f32 %v3645, %v3650
    %v3652 = vld [vmem:[#allocation3 + $0x160] sm:$0xc]
    %v3653 = vperm.slane 0.0, 0
    %3655 = vrot.lane.b32.xlu0 %v3612, 63
    %v3656 = vpop.permute.xlu0 %3655
    %3657 = vrot.lane.b32.xlu0 %v3653, 63
    %v3658 = vpop.permute.xlu0 %3657
    %v3659 = vsel %vm185, %v3656, %v3658
    %v3661 = vmul.f32 %v3652, %v3659
    %v3663 = vrot.slane %v3661, 2
    %v3665 = vadd.f32 %v3651, %v3663
    %v3666 = vld [vmem:[#allocation3 + $0x160] sm:$0x30]
    %3667 = vrot.lane.b32.xlu0 %v3612, 57
    %v3668 = vpop.permute.xlu0 %3667
    %3669 = vrot.lane.b32.xlu0 %v3653, 57
    %v3670 = vpop.permute.xlu0 %3669
    %v3671 = vsel %vm139, %v3668, %v3670
    %v3673 = vmul.f32 %v3666, %v3671
    %v3675 = vrot.slane %v3673, 4
    %v3677 = vadd.f32 %v3665, %v3675
    %v3678 = vld [vmem:[#allocation3 + $0x160] sm:$0xc0]
    %3679 = vrot.lane.b32.xlu0 %v3612, 56
    %v3680 = vpop.permute.xlu0 %3679
    %3681 = vrot.lane.b32.xlu0 %v3653, 56
    %v3682 = vpop.permute.xlu0 %3681
    %v3683 = vsel %vm93, %v3680, %v3682
    %v3685 = vmul.f32 %v3678, %v3683
    %v3687 = vrot.slane %v3685, 6
    %v3689 = vadd.f32 %v3677, %v3687
    %v3690 = vld [vmem:[#allocation3 + $0x180] sm:$0x3]
    %3691 = vrot.lane.b32.xlu0 %v3612, 55
    %v3692 = vpop.permute.xlu0 %3691
    %3693 = vrot.lane.b32.xlu0 %v3653, 55
    %v3694 = vpop.permute.xlu0 %3693
    %v3695 = vsel %vm47, %v3692, %v3694
    %v3697 = vmul.f32 %v3690, %v3695
    %v3698 = vadd.f32 %v3689, %v3697
    %v3699 = vld [vmem:[#allocation3 + $0xa0] sm:$0x30]
    %v3701 = vrot.slane %v3699, 4
    %v3703 = vadd.f32 %v3698, %v3701
    %v3704 = vxor.u32 %v3703, 2147483648
    %v3705 = vmul.f32 %v3704, 1.442695
    %v3706 = vpow.pop %v3705
    %v3707 = vadd.f32 %v3706, 1.0
    %v3708 = vrcp.pop %v3707
    %v3709 = vmul.f32 %v3707, %v3708
    %v3710 = vsub.f32 1.0, %v3709
    %v3711 = vmul.f32 %v3708, %v3710
    %v3712 = vadd.f32 %v3708, %v3711
    %vm3713 = vweird.f32 %v3707
    %vm3714 = vweird.f32 %v3708
    %vm3715 = vmor %vm3713, %vm3714
    %v3716 = vsel %vm3715, %v3708, %v3712
    %v3717 = vand.u32 2147483647, %v3707
    %vm3718 = vcmp.eq.f32.partialorder %v3717, 8.507059e+37
    %v3719 = vand.u32 %v3707, 2147483648
    %v3720 = vor.u32 1.1754944e-38, %v3719
    %v3721 = vsel %vm3718, %v3720, %v3716
    %v3722 = vmul.f32 1.0, %v3721
    %v3723 = vld [vmem:[#allocation3 + $0xa1] ss:$0 sm:$0xff]
    %v3724 = vmul.f32 %v3605, %v3723
    %vm3725 = vcmask 516096
    %v3726 = vsel %vm3725, %v3724, 0.0
    %3727 = vadd.xlane.f32.xlu0 %v3726
    %v3728 = vpop.xlane.xlu0 %3727
    %v3729 = vld [vmem:[#allocation3 + $0xa3] ss:$0 sm:$0xff]
    %v3730 = vadd.f32 %v3728, %v3729
    %v3732 = vrot.slane %v3722, 1
    %3733 = vrot.lane.b32.xlu0 %v3732, 64
    %v3734 = vpop.permute.xlu0 %3733
    %v3736 = vsel %vm231, %v3722, %v3734
    %v3738 = vrot.slane %v3730, 7
    %vm3740 = vcmask 1040384
    %v3741 = vsel %vm3740, %v3736, %v3738
    %vm3742 = vcmask 1041408
    %v3743 = vsel %vm3742, %v3741, 0.0
    %3744 = vst [vmem:[%s2] sm:$0xff] %v3743
    // Predicated region
    $region14: #{actor_critic_forward.1} parent=1 // pred_check
      _
    $region15: #{actor_critic_forward.1} parent=1 // pred_check_branch
      %3746 = sbr.rel (0) target = $region17
    $region16: #{actor_critic_forward.1} parent=1 // pred_region
      _
    $region17: #{actor_critic_forward.1} parent=1 // pred_fallthru
      _
    // Predicated region
    $region18: #{actor_critic_forward.1} parent=1 // pred_check
      _
    $region19: #{actor_critic_forward.1} parent=1 // pred_check_branch
      %3748 = sbr.rel (0) target = $region21
    $region20: #{actor_critic_forward.1} parent=1 // pred_region
      _
    $region21: #{actor_critic_forward.1} parent=1 // pred_fallthru
      _
    %3749 = vsyncpa [#allocation4], 1

</llo_original>
